<compile_context>
chip_gen: v6e
topology: v6e:2x2x1
jax: 0.10.0
libtpu: 0.0.40
codegen_flags: <defaults>
</compile_context>

<pallas_src>
import functools

import jax
import jax.numpy as jnp
from jax import lax
from jax.experimental import pallas as pl
from jax.experimental.pallas import tpu as pltpu

# Model hyper-parameters (match the PyTorch module defaults).
INPUT_SIZE = 1
HIDDEN_SIZE = 50
NUM_LAYERS = 2
OUTPUT_SIZE = 1

# Padded hidden size: fused gate dim 4*HP = 256 (MXU-tile friendly on v6e/v7x).
HP = ((HIDDEN_SIZE + 63) // 64) * 64            # 64


def _lstm_kernel(x_ref,       # (T, B, 1)
                 wih0_ref,    # (1, 4*HP)   layer-0 fused input weights (F == 1)
                 b0_ref,      # (1, 4*HP)   layer-0 fused bias (b_ih + b_hh)
                 whh0_ref,    # (HP, 4*HP)  layer-0 fused recurrent weights
                 wih1_ref,    # (HP, 4*HP)  layer-1 fused input weights
                 whh1_ref,    # (HP, 4*HP)  layer-1 fused recurrent weights
                 b1_ref,      # (1, 4*HP)   layer-1 fused bias
                 wfc_ref,     # (HP, O)
                 bfc_ref,     # (1, O)
                 out_ref,     # (B, O)
                 xproj_ref):  # scratch (T, B, 4*HP)
    T, B, _ = x_ref.shape
    Hp = whh0_ref.shape[0]
    G = 4 * Hp

    # ---- hoisted, non-recurrent work -------------------------------------
    # Layer-0 input projection for all T steps: a single VPU broadcast
    # multiply-add (F == 1), written to VMEM scratch; removes 4 matmuls +
    # bias broadcasts per step from the serial critical path.
    wih0 = wih0_ref[...].reshape(1, 1, G)
    b0 = b0_ref[...].reshape(1, 1, G)
    xproj_ref[...] = x_ref[...] * wih0 + b0

    # Hoist the layer-1 bias broadcast out of the loop (no CSE of
    # broadcast_in_dim inside the unrolled body otherwise).
    b1_full = jnp.broadcast_to(b1_ref[...], (B, G))

    def lstm_cell(gates, c):
        # PyTorch gate order: i, f, g, o
        i = jax.nn.sigmoid(gates[:, 0 * Hp:1 * Hp])
        f = jax.nn.sigmoid(gates[:, 1 * Hp:2 * Hp])
        g = jnp.tanh(gates[:, 2 * Hp:3 * Hp])
        o = jax.nn.sigmoid(gates[:, 3 * Hp:4 * Hp])
        c_new = f * c + i * g
        h_new = o * jnp.tanh(c_new)
        return h_new, c_new

    def step(t, carry):
        h0, c0, h1, c1 = carry
        # Layer 0: one fused (B, HP) @ (HP, 4*HP) matmul per step.
        gates0 = xproj_ref[t] + jnp.dot(
            h0, whh0_ref[...], preferred_element_type=jnp.float32)
        h0, c0 = lstm_cell(gates0, c0)
        # Layer 1: two fused matmuls. h1 @ Whh1 depends only on the previous
        # step, so (with the loop unrolled) it overlaps with layer-0 compute.
        gates1 = (b1_full
                  + jnp.dot(h1, whh1_ref[...],
                            preferred_element_type=jnp.float32)
                  + jnp.dot(h0, wih1_ref[...],
                            preferred_element_type=jnp.float32))
        h1, c1 = lstm_cell(gates1, c1)
        return (h0, c0, h1, c1)

    zeros = jnp.zeros((B, Hp), jnp.float32)
    _, _, h1, _ = lax.fori_loop(0, T, step, (zeros, zeros, zeros, zeros),
                                unroll=True)

    # fc on the last time-step output of the top layer (padded lanes of h1 are
    # exactly zero, and the padded rows of wfc are zero too).
    out_ref[...] = (jnp.dot(h1, wfc_ref[...],
                            preferred_element_type=jnp.float32)
                    + bfc_ref[...])


def init_params(key, input_size=INPUT_SIZE, hidden_size=HIDDEN_SIZE,
                output_size=OUTPUT_SIZE):
    """Deterministic parameter init mirroring nn.LSTM / nn.Linear shapes."""
    H, F, O = hidden_size, input_size, output_size
    k = 1.0 / jnp.sqrt(jnp.asarray(H, jnp.float32))
    keys = jax.random.split(key, 10)

    def u(kk, shape):
        return jax.random.uniform(kk, shape, jnp.float32, -k, k)

    return {
        # layer 0
        "w_ih_l0": u(keys[0], (4 * H, F)),
        "w_hh_l0": u(keys[1], (4 * H, H)),
        "b_ih_l0": u(keys[2], (4 * H,)),
        "b_hh_l0": u(keys[3], (4 * H,)),
        # layer 1
        "w_ih_l1": u(keys[4], (4 * H, H)),
        "w_hh_l1": u(keys[5], (4 * H, H)),
        "b_ih_l1": u(keys[6], (4 * H,)),
        "b_hh_l1": u(keys[7], (4 * H,)),
        # fc
        "w_fc": u(keys[8], (O, H)),
        "b_fc": u(keys[9], (O,)),
    }


def _pack(params, hidden_size=HIDDEN_SIZE, hp=HP):
    """Reshape PyTorch-layout weights into fused, zero-padded kernel tensors."""
    H, Hp = hidden_size, hp

    def pack_w(w, in_dim, in_pad):
        # PyTorch (4H, in_dim), gate order [i;f;g;o]  ->  fused (in_pad, 4*Hp)
        # such that  x @ packed  ==  concat_g(x @ W_g.T)  (zero-padded lanes).
        w4 = w.reshape(4, H, in_dim)                      # (4, H, in_dim)
        wt = jnp.transpose(w4, (0, 2, 1))                 # (4, in_dim, H)
        out = jnp.zeros((4, in_pad, Hp), jnp.float32)
        out = out.at[:, :in_dim, :H].set(wt)
        return jnp.transpose(out, (1, 0, 2)).reshape(in_pad, 4 * Hp)

    def pack_b(b_ih, b_hh):
        b = (b_ih + b_hh).reshape(4, H)
        bp = jnp.zeros((4, Hp), jnp.float32).at[:, :H].set(b)
        return bp.reshape(1, 4 * Hp)

    wih0 = pack_w(params["w_ih_l0"], INPUT_SIZE, INPUT_SIZE)   # (1, 4Hp)
    whh0 = pack_w(params["w_hh_l0"], H, Hp)                    # (Hp, 4Hp)
    b0 = pack_b(params["b_ih_l0"], params["b_hh_l0"])
    wih1 = pack_w(params["w_ih_l1"], H, Hp)
    whh1 = pack_w(params["w_hh_l1"], H, Hp)
    b1 = pack_b(params["b_ih_l1"], params["b_hh_l1"])

    O = params["w_fc"].shape[0]
    wfc = jnp.zeros((Hp, O), jnp.float32).at[:H, :].set(params["w_fc"].T)
    bfc = params["b_fc"].reshape(1, O)
    return wih0, b0, whh0, wih1, whh1, b1, wfc, bfc


@jax.jit
def lstm_forward(x, params):
    """x: (B, T, F) float32 -> (B, O) float32, matching the PyTorch forward."""
    B, T, _ = x.shape
    O = params["w_fc"].shape[0]
    x_tbf = jnp.transpose(x, (1, 0, 2)).astype(jnp.float32)    # (T, B, F)
    packed = _pack(params)

    vmem = pl.BlockSpec(memory_space=pltpu.MemorySpace.VMEM)
    # Everything (few hundred KiB) fits trivially in VMEM on v5e/v6e/v7x, so
    # no grid / pipelining is needed at these sizes.
    out = pl.pallas_call(
        _lstm_kernel,
        out_shape=jax.ShapeDtypeStruct((B, O), jnp.float32),
        in_specs=[vmem] * (1 + len(packed)),
        out_specs=vmem,
        scratch_shapes=[pltpu.VMEM((T, B, 4 * HP), jnp.float32)],
    )(x_tbf, *packed)
    return out


def lstm_forward_ref(x, params, hidden_size=HIDDEN_SIZE):
    """Pure-JAX reference (same math as nn.LSTM + nn.Linear) for checking."""
    H = hidden_size
    B, T, _ = x.shape
    h = [jnp.zeros((B, H), jnp.float32) for _ in range(NUM_LAYERS)]
    c = [jnp.zeros((B, H), jnp.float32) for _ in range(NUM_LAYERS)]
    w_ih = [params["w_ih_l0"], params["w_ih_l1"]]
    w_hh = [params["w_hh_l0"], params["w_hh_l1"]]
    b_ih = [params["b_ih_l0"], params["b_ih_l1"]]
    b_hh = [params["b_hh_l0"], params["b_hh_l1"]]
    for t in range(T):
        inp = x[:, t, :]
        for l in range(NUM_LAYERS):
            g = inp @ w_ih[l].T + b_ih[l] + h[l] @ w_hh[l].T + b_hh[l]
            i = jax.nn.sigmoid(g[:, 0:H])
            f = jax.nn.sigmoid(g[:, H:2 * H])
            gg = jnp.tanh(g[:, 2 * H:3 * H])
            o = jax.nn.sigmoid(g[:, 3 * H:4 * H])
            c[l] = f * c[l] + i * gg
            h[l] = o * jnp.tanh(c[l])
            inp = h[l]
    return h[-1] @ params["w_fc"].T + params["b_fc"]


if __name__ == "__main__":
    key = jax.random.PRNGKey(0)
    pkey, xkey = jax.random.split(key)

    B, T, F = 2, 8, INPUT_SIZE
    params = init_params(pkey)
    x = jax.random.normal(xkey, (B, T, F), jnp.float32)

    out = lstm_forward(x, params)
    out = jax.block_until_ready(out)

    ref = lstm_forward_ref(x, params)
    assert out.shape == (B, OUTPUT_SIZE)
    assert jnp.allclose(out, ref, atol=1e-4, rtol=1e-4), (out, ref)

    print("KERNEL_OK")
</pallas_src>

<mosaic_0001>
module attributes {stable_mosaic.version = 11 : i64} {
  func.func @_lstm_kernel(%arg0: memref<8x2x1xf32, #tpu.memory_space<vmem>>, %arg1: memref<1x256xf32, #tpu.memory_space<vmem>>, %arg2: memref<1x256xf32, #tpu.memory_space<vmem>>, %arg3: memref<64x256xf32, #tpu.memory_space<vmem>>, %arg4: memref<64x256xf32, #tpu.memory_space<vmem>>, %arg5: memref<64x256xf32, #tpu.memory_space<vmem>>, %arg6: memref<1x256xf32, #tpu.memory_space<vmem>>, %arg7: memref<64x1xf32, #tpu.memory_space<vmem>>, %arg8: memref<1x1xf32, #tpu.memory_space<vmem>>, %arg9: memref<2x1xf32, #tpu.memory_space<vmem>>, %arg10: memref<8x2x256xf32, #tpu.memory_space<vmem>>) attributes {dimension_semantics = [], scalar_prefetch = 0 : i64, scratch_operands = 1 : i64, tpu.core_type = #tpu.core_type<tc>} {
    %c0 = arith.constant 0 : index
    %c0_0 = arith.constant 0 : index
    %0 = vector.load %arg1[%c0, %c0_0] : memref<1x256xf32, #tpu.memory_space<vmem>>, vector<1x256xf32>
    %1 = vector.shape_cast %0 : vector<1x256xf32> to vector<1x1x256xf32>
    %c0_1 = arith.constant 0 : index
    %c0_2 = arith.constant 0 : index
    %2 = vector.load %arg2[%c0_1, %c0_2] : memref<1x256xf32, #tpu.memory_space<vmem>>, vector<1x256xf32>
    %3 = vector.shape_cast %2 : vector<1x256xf32> to vector<1x1x256xf32>
    %c0_3 = arith.constant 0 : index
    %c0_4 = arith.constant 0 : index
    %c0_5 = arith.constant 0 : index
    %4 = vector.load %arg0[%c0_3, %c0_4, %c0_5] : memref<8x2x1xf32, #tpu.memory_space<vmem>>, vector<8x2x1xf32>
    %5 = vector.broadcast %4 : vector<8x2x1xf32> to vector<8x2x256xf32>
    %6 = vector.broadcast %1 : vector<1x1x256xf32> to vector<8x2x256xf32>
    %7 = arith.mulf %5, %6 : vector<8x2x256xf32>
    %8 = vector.broadcast %3 : vector<1x1x256xf32> to vector<8x2x256xf32>
    %9 = arith.addf %7, %8 : vector<8x2x256xf32>
    %c0_6 = arith.constant 0 : index
    %c0_7 = arith.constant 0 : index
    %c0_8 = arith.constant 0 : index
    %10 = vector.load %arg10[%c0_6, %c0_7, %c0_8] : memref<8x2x256xf32, #tpu.memory_space<vmem>>, vector<8x2x256xf32>
    tpu.vector_store %arg10[%c0_6, %c0_7, %c0_8], %9 {strides = array<i32>} : memref<8x2x256xf32, #tpu.memory_space<vmem>>, vector<8x2x256xf32>,
    %c0_9 = arith.constant 0 : index
    %c0_10 = arith.constant 0 : index
    %11 = vector.load %arg6[%c0_9, %c0_10] : memref<1x256xf32, #tpu.memory_space<vmem>>, vector<1x256xf32>
    %12 = vector.shape_cast %11 : vector<1x256xf32> to vector<1x256xf32>
    %13 = vector.broadcast %12 : vector<1x256xf32> to vector<2x256xf32>
    %cst = arith.constant 0.000000e+00 : f32
    %14 = vector.broadcast %cst : f32 to vector<2x64xf32>
    %c0_i32 = arith.constant 0 : i32
    %15 = arith.index_cast %c0_i32 : i32 to index
    %c0_11 = arith.constant 0 : index
    %c0_12 = arith.constant 0 : index
    %16 = vector.load %arg10[%15, %c0_11, %c0_12] : memref<8x2x256xf32, #tpu.memory_space<vmem>>, vector<1x2x256xf32>
    %17 = vector.shape_cast %16 : vector<1x2x256xf32> to vector<2x256xf32>
    %c0_13 = arith.constant 0 : index
    %c0_14 = arith.constant 0 : index
    %18 = vector.load %arg3[%c0_13, %c0_14] : memref<64x256xf32, #tpu.memory_space<vmem>>, vector<64x256xf32>
    %cst_15 = arith.constant dense<0.000000e+00> : vector<2x256xf32>
    %19 = tpu.matmul %14, %18, %cst_15 {dimension_numbers = #tpu.dot_dimension_numbers<[1], [0], [0], [1], [0, 0, 1, 1], [], []>} : vector<2x64xf32>, vector<64x256xf32>, vector<2x256xf32> -> vector<2x256xf32>
    %20 = arith.addf %17, %19 : vector<2x256xf32>
    %21 = vector.extract_strided_slice %20 {offsets = [0, 0], sizes = [2, 64], strides = [1, 1]} : vector<2x256xf32> to vector<2x64xf32>
    %22 = arith.negf %21 : vector<2x64xf32>
    %23 = math.exp %22 : vector<2x64xf32>
    %cst_16 = arith.constant 1.000000e+00 : f32
    %24 = vector.broadcast %cst_16 : f32 to vector<2x64xf32>
    %25 = arith.addf %24, %23 : vector<2x64xf32>
    %26 = arith.divf %24, %25 : vector<2x64xf32>
    %27 = vector.extract_strided_slice %20 {offsets = [0, 64], sizes = [2, 64], strides = [1, 1]} : vector<2x256xf32> to vector<2x64xf32>
    %28 = arith.negf %27 : vector<2x64xf32>
    %29 = math.exp %28 : vector<2x64xf32>
    %cst_17 = arith.constant 1.000000e+00 : f32
    %30 = vector.broadcast %cst_17 : f32 to vector<2x64xf32>
    %31 = arith.addf %30, %29 : vector<2x64xf32>
    %32 = arith.divf %30, %31 : vector<2x64xf32>
    %33 = vector.extract_strided_slice %20 {offsets = [0, 128], sizes = [2, 64], strides = [1, 1]} : vector<2x256xf32> to vector<2x64xf32>
    %34 = math.tanh %33 : vector<2x64xf32>
    %35 = vector.extract_strided_slice %20 {offsets = [0, 192], sizes = [2, 64], strides = [1, 1]} : vector<2x256xf32> to vector<2x64xf32>
    %36 = arith.negf %35 : vector<2x64xf32>
    %37 = math.exp %36 : vector<2x64xf32>
    %cst_18 = arith.constant 1.000000e+00 : f32
    %38 = vector.broadcast %cst_18 : f32 to vector<2x64xf32>
    %39 = arith.addf %38, %37 : vector<2x64xf32>
    %40 = arith.divf %38, %39 : vector<2x64xf32>
    %41 = arith.mulf %32, %14 : vector<2x64xf32>
    %42 = arith.mulf %26, %34 : vector<2x64xf32>
    %43 = arith.addf %41, %42 : vector<2x64xf32>
    %44 = math.tanh %43 : vector<2x64xf32>
    %45 = arith.mulf %40, %44 : vector<2x64xf32>
    %c0_19 = arith.constant 0 : index
    %c0_20 = arith.constant 0 : index
    %46 = vector.load %arg5[%c0_19, %c0_20] : memref<64x256xf32, #tpu.memory_space<vmem>>, vector<64x256xf32>
    %cst_21 = arith.constant dense<0.000000e+00> : vector<2x256xf32>
    %47 = tpu.matmul %14, %46, %cst_21 {dimension_numbers = #tpu.dot_dimension_numbers<[1], [0], [0], [1], [0, 0, 1, 1], [], []>} : vector<2x64xf32>, vector<64x256xf32>, vector<2x256xf32> -> vector<2x256xf32>
    %48 = arith.addf %13, %47 : vector<2x256xf32>
    %c0_22 = arith.constant 0 : index
    %c0_23 = arith.constant 0 : index
    %49 = vector.load %arg4[%c0_22, %c0_23] : memref<64x256xf32, #tpu.memory_space<vmem>>, vector<64x256xf32>
    %cst_24 = arith.constant dense<0.000000e+00> : vector<2x256xf32>
    %50 = tpu.matmul %45, %49, %cst_24 {dimension_numbers = #tpu.dot_dimension_numbers<[1], [0], [0], [1], [0, 0, 1, 1], [], []>} : vector<2x64xf32>, vector<64x256xf32>, vector<2x256xf32> -> vector<2x256xf32>
    %51 = arith.addf %48, %50 : vector<2x256xf32>
    %52 = vector.extract_strided_slice %51 {offsets = [0, 0], sizes = [2, 64], strides = [1, 1]} : vector<2x256xf32> to vector<2x64xf32>
    %53 = arith.negf %52 : vector<2x64xf32>
    %54 = math.exp %53 : vector<2x64xf32>
    %cst_25 = arith.constant 1.000000e+00 : f32
    %55 = vector.broadcast %cst_25 : f32 to vector<2x64xf32>
    %56 = arith.addf %55, %54 : vector<2x64xf32>
    %57 = arith.divf %55, %56 : vector<2x64xf32>
    %58 = vector.extract_strided_slice %51 {offsets = [0, 64], sizes = [2, 64], strides = [1, 1]} : vector<2x256xf32> to vector<2x64xf32>
    %59 = arith.negf %58 : vector<2x64xf32>
    %60 = math.exp %59 : vector<2x64xf32>
    %cst_26 = arith.constant 1.000000e+00 : f32
    %61 = vector.broadcast %cst_26 : f32 to vector<2x64xf32>
    %62 = arith.addf %61, %60 : vector<2x64xf32>
    %63 = arith.divf %61, %62 : vector<2x64xf32>
    %64 = vector.extract_strided_slice %51 {offsets = [0, 128], sizes = [2, 64], strides = [1, 1]} : vector<2x256xf32> to vector<2x64xf32>
    %65 = math.tanh %64 : vector<2x64xf32>
    %66 = vector.extract_strided_slice %51 {offsets = [0, 192], sizes = [2, 64], strides = [1, 1]} : vector<2x256xf32> to vector<2x64xf32>
    %67 = arith.negf %66 : vector<2x64xf32>
    %68 = math.exp %67 : vector<2x64xf32>
    %cst_27 = arith.constant 1.000000e+00 : f32
    %69 = vector.broadcast %cst_27 : f32 to vector<2x64xf32>
    %70 = arith.addf %69, %68 : vector<2x64xf32>
    %71 = arith.divf %69, %70 : vector<2x64xf32>
    %72 = arith.mulf %63, %14 : vector<2x64xf32>
    %73 = arith.mulf %57, %65 : vector<2x64xf32>
    %74 = arith.addf %72, %73 : vector<2x64xf32>
    %75 = math.tanh %74 : vector<2x64xf32>
    %76 = arith.mulf %71, %75 : vector<2x64xf32>
    %c1_i32 = arith.constant 1 : i32
    %77 = arith.index_cast %c1_i32 : i32 to index
    %c0_28 = arith.constant 0 : index
    %c0_29 = arith.constant 0 : index
    %78 = vector.load %arg10[%77, %c0_28, %c0_29] : memref<8x2x256xf32, #tpu.memory_space<vmem>>, vector<1x2x256xf32>
    %79 = vector.shape_cast %78 : vector<1x2x256xf32> to vector<2x256xf32>
    %c0_30 = arith.constant 0 : index
    %c0_31 = arith.constant 0 : index
    %80 = vector.load %arg3[%c0_30, %c0_31] : memref<64x256xf32, #tpu.memory_space<vmem>>, vector<64x256xf32>
    %cst_32 = arith.constant dense<0.000000e+00> : vector<2x256xf32>
    %81 = tpu.matmul %45, %80, %cst_32 {dimension_numbers = #tpu.dot_dimension_numbers<[1], [0], [0], [1], [0, 0, 1, 1], [], []>} : vector<2x64xf32>, vector<64x256xf32>, vector<2x256xf32> -> vector<2x256xf32>
    %82 = arith.addf %79, %81 : vector<2x256xf32>
    %83 = vector.extract_strided_slice %82 {offsets = [0, 0], sizes = [2, 64], strides = [1, 1]} : vector<2x256xf32> to vector<2x64xf32>
    %84 = arith.negf %83 : vector<2x64xf32>
    %85 = math.exp %84 : vector<2x64xf32>
    %cst_33 = arith.constant 1.000000e+00 : f32
    %86 = vector.broadcast %cst_33 : f32 to vector<2x64xf32>
    %87 = arith.addf %86, %85 : vector<2x64xf32>
    %88 = arith.divf %86, %87 : vector<2x64xf32>
    %89 = vector.extract_strided_slice %82 {offsets = [0, 64], sizes = [2, 64], strides = [1, 1]} : vector<2x256xf32> to vector<2x64xf32>
    %90 = arith.negf %89 : vector<2x64xf32>
    %91 = math.exp %90 : vector<2x64xf32>
    %cst_34 = arith.constant 1.000000e+00 : f32
    %92 = vector.broadcast %cst_34 : f32 to vector<2x64xf32>
    %93 = arith.addf %92, %91 : vector<2x64xf32>
    %94 = arith.divf %92, %93 : vector<2x64xf32>
    %95 = vector.extract_strided_slice %82 {offsets = [0, 128], sizes = [2, 64], strides = [1, 1]} : vector<2x256xf32> to vector<2x64xf32>
    %96 = math.tanh %95 : vector<2x64xf32>
    %97 = vector.extract_strided_slice %82 {offsets = [0, 192], sizes = [2, 64], strides = [1, 1]} : vector<2x256xf32> to vector<2x64xf32>
    %98 = arith.negf %97 : vector<2x64xf32>
    %99 = math.exp %98 : vector<2x64xf32>
    %cst_35 = arith.constant 1.000000e+00 : f32
    %100 = vector.broadcast %cst_35 : f32 to vector<2x64xf32>
    %101 = arith.addf %100, %99 : vector<2x64xf32>
    %102 = arith.divf %100, %101 : vector<2x64xf32>
    %103 = arith.mulf %94, %43 : vector<2x64xf32>
    %104 = arith.mulf %88, %96 : vector<2x64xf32>
    %105 = arith.addf %103, %104 : vector<2x64xf32>
    %106 = math.tanh %105 : vector<2x64xf32>
    %107 = arith.mulf %102, %106 : vector<2x64xf32>
    %c0_36 = arith.constant 0 : index
    %c0_37 = arith.constant 0 : index
    %108 = vector.load %arg5[%c0_36, %c0_37] : memref<64x256xf32, #tpu.memory_space<vmem>>, vector<64x256xf32>
    %cst_38 = arith.constant dense<0.000000e+00> : vector<2x256xf32>
    %109 = tpu.matmul %76, %108, %cst_38 {dimension_numbers = #tpu.dot_dimension_numbers<[1], [0], [0], [1], [0, 0, 1, 1], [], []>} : vector<2x64xf32>, vector<64x256xf32>, vector<2x256xf32> -> vector<2x256xf32>
    %110 = arith.addf %13, %109 : vector<2x256xf32>
    %c0_39 = arith.constant 0 : index
    %c0_40 = arith.constant 0 : index
    %111 = vector.load %arg4[%c0_39, %c0_40] : memref<64x256xf32, #tpu.memory_space<vmem>>, vector<64x256xf32>
    %cst_41 = arith.constant dense<0.000000e+00> : vector<2x256xf32>
    %112 = tpu.matmul %107, %111, %cst_41 {dimension_numbers = #tpu.dot_dimension_numbers<[1], [0], [0], [1], [0, 0, 1, 1], [], []>} : vector<2x64xf32>, vector<64x256xf32>, vector<2x256xf32> -> vector<2x256xf32>
    %113 = arith.addf %110, %112 : vector<2x256xf32>
    %114 = vector.extract_strided_slice %113 {offsets = [0, 0], sizes = [2, 64], strides = [1, 1]} : vector<2x256xf32> to vector<2x64xf32>
    %115 = arith.negf %114 : vector<2x64xf32>
    %116 = math.exp %115 : vector<2x64xf32>
    %cst_42 = arith.constant 1.000000e+00 : f32
    %117 = vector.broadcast %cst_42 : f32 to vector<2x64xf32>
    %118 = arith.addf %117, %116 : vector<2x64xf32>
    %119 = arith.divf %117, %118 : vector<2x64xf32>
    %120 = vector.extract_strided_slice %113 {offsets = [0, 64], sizes = [2, 64], strides = [1, 1]} : vector<2x256xf32> to vector<2x64xf32>
    %121 = arith.negf %120 : vector<2x64xf32>
    %122 = math.exp %121 : vector<2x64xf32>
    %cst_43 = arith.constant 1.000000e+00 : f32
    %123 = vector.broadcast %cst_43 : f32 to vector<2x64xf32>
    %124 = arith.addf %123, %122 : vector<2x64xf32>
    %125 = arith.divf %123, %124 : vector<2x64xf32>
    %126 = vector.extract_strided_slice %113 {offsets = [0, 128], sizes = [2, 64], strides = [1, 1]} : vector<2x256xf32> to vector<2x64xf32>
    %127 = math.tanh %126 : vector<2x64xf32>
    %128 = vector.extract_strided_slice %113 {offsets = [0, 192], sizes = [2, 64], strides = [1, 1]} : vector<2x256xf32> to vector<2x64xf32>
    %129 = arith.negf %128 : vector<2x64xf32>
    %130 = math.exp %129 : vector<2x64xf32>
    %cst_44 = arith.constant 1.000000e+00 : f32
    %131 = vector.broadcast %cst_44 : f32 to vector<2x64xf32>
    %132 = arith.addf %131, %130 : vector<2x64xf32>
    %133 = arith.divf %131, %132 : vector<2x64xf32>
    %134 = arith.mulf %125, %74 : vector<2x64xf32>
    %135 = arith.mulf %119, %127 : vector<2x64xf32>
    %136 = arith.addf %134, %135 : vector<2x64xf32>
    %137 = math.tanh %136 : vector<2x64xf32>
    %138 = arith.mulf %133, %137 : vector<2x64xf32>
    %c2_i32 = arith.constant 2 : i32
    %139 = arith.index_cast %c2_i32 : i32 to index
    %c0_45 = arith.constant 0 : index
    %c0_46 = arith.constant 0 : index
    %140 = vector.load %arg10[%139, %c0_45, %c0_46] : memref<8x2x256xf32, #tpu.memory_space<vmem>>, vector<1x2x256xf32>
    %141 = vector.shape_cast %140 : vector<1x2x256xf32> to vector<2x256xf32>
    %c0_47 = arith.constant 0 : index
    %c0_48 = arith.constant 0 : index
    %142 = vector.load %arg3[%c0_47, %c0_48] : memref<64x256xf32, #tpu.memory_space<vmem>>, vector<64x256xf32>
    %cst_49 = arith.constant dense<0.000000e+00> : vector<2x256xf32>
    %143 = tpu.matmul %107, %142, %cst_49 {dimension_numbers = #tpu.dot_dimension_numbers<[1], [0], [0], [1], [0, 0, 1, 1], [], []>} : vector<2x64xf32>, vector<64x256xf32>, vector<2x256xf32> -> vector<2x256xf32>
    %144 = arith.addf %141, %143 : vector<2x256xf32>
    %145 = vector.extract_strided_slice %144 {offsets = [0, 0], sizes = [2, 64], strides = [1, 1]} : vector<2x256xf32> to vector<2x64xf32>
    %146 = arith.negf %145 : vector<2x64xf32>
    %147 = math.exp %146 : vector<2x64xf32>
    %cst_50 = arith.constant 1.000000e+00 : f32
    %148 = vector.broadcast %cst_50 : f32 to vector<2x64xf32>
    %149 = arith.addf %148, %147 : vector<2x64xf32>
    %150 = arith.divf %148, %149 : vector<2x64xf32>
    %151 = vector.extract_strided_slice %144 {offsets = [0, 64], sizes = [2, 64], strides = [1, 1]} : vector<2x256xf32> to vector<2x64xf32>
    %152 = arith.negf %151 : vector<2x64xf32>
    %153 = math.exp %152 : vector<2x64xf32>
    %cst_51 = arith.constant 1.000000e+00 : f32
    %154 = vector.broadcast %cst_51 : f32 to vector<2x64xf32>
    %155 = arith.addf %154, %153 : vector<2x64xf32>
    %156 = arith.divf %154, %155 : vector<2x64xf32>
    %157 = vector.extract_strided_slice %144 {offsets = [0, 128], sizes = [2, 64], strides = [1, 1]} : vector<2x256xf32> to vector<2x64xf32>
    %158 = math.tanh %157 : vector<2x64xf32>
    %159 = vector.extract_strided_slice %144 {offsets = [0, 192], sizes = [2, 64], strides = [1, 1]} : vector<2x256xf32> to vector<2x64xf32>
    %160 = arith.negf %159 : vector<2x64xf32>
    %161 = math.exp %160 : vector<2x64xf32>
    %cst_52 = arith.constant 1.000000e+00 : f32
    %162 = vector.broadcast %cst_52 : f32 to vector<2x64xf32>
    %163 = arith.addf %162, %161 : vector<2x64xf32>
    %164 = arith.divf %162, %163 : vector<2x64xf32>
    %165 = arith.mulf %156, %105 : vector<2x64xf32>
    %166 = arith.mulf %150, %158 : vector<2x64xf32>
    %167 = arith.addf %165, %166 : vector<2x64xf32>
    %168 = math.tanh %167 : vector<2x64xf32>
    %169 = arith.mulf %164, %168 : vector<2x64xf32>
    %c0_53 = arith.constant 0 : index
    %c0_54 = arith.constant 0 : index
    %170 = vector.load %arg5[%c0_53, %c0_54] : memref<64x256xf32, #tpu.memory_space<vmem>>, vector<64x256xf32>
    %cst_55 = arith.constant dense<0.000000e+00> : vector<2x256xf32>
    %171 = tpu.matmul %138, %170, %cst_55 {dimension_numbers = #tpu.dot_dimension_numbers<[1], [0], [0], [1], [0, 0, 1, 1], [], []>} : vector<2x64xf32>, vector<64x256xf32>, vector<2x256xf32> -> vector<2x256xf32>
    %172 = arith.addf %13, %171 : vector<2x256xf32>
    %c0_56 = arith.constant 0 : index
    %c0_57 = arith.constant 0 : index
    %173 = vector.load %arg4[%c0_56, %c0_57] : memref<64x256xf32, #tpu.memory_space<vmem>>, vector<64x256xf32>
    %cst_58 = arith.constant dense<0.000000e+00> : vector<2x256xf32>
    %174 = tpu.matmul %169, %173, %cst_58 {dimension_numbers = #tpu.dot_dimension_numbers<[1], [0], [0], [1], [0, 0, 1, 1], [], []>} : vector<2x64xf32>, vector<64x256xf32>, vector<2x256xf32> -> vector<2x256xf32>
    %175 = arith.addf %172, %174 : vector<2x256xf32>
    %176 = vector.extract_strided_slice %175 {offsets = [0, 0], sizes = [2, 64], strides = [1, 1]} : vector<2x256xf32> to vector<2x64xf32>
    %177 = arith.negf %176 : vector<2x64xf32>
    %178 = math.exp %177 : vector<2x64xf32>
    %cst_59 = arith.constant 1.000000e+00 : f32
    %179 = vector.broadcast %cst_59 : f32 to vector<2x64xf32>
    %180 = arith.addf %179, %178 : vector<2x64xf32>
    %181 = arith.divf %179, %180 : vector<2x64xf32>
    %182 = vector.extract_strided_slice %175 {offsets = [0, 64], sizes = [2, 64], strides = [1, 1]} : vector<2x256xf32> to vector<2x64xf32>
    %183 = arith.negf %182 : vector<2x64xf32>
    %184 = math.exp %183 : vector<2x64xf32>
    %cst_60 = arith.constant 1.000000e+00 : f32
    %185 = vector.broadcast %cst_60 : f32 to vector<2x64xf32>
    %186 = arith.addf %185, %184 : vector<2x64xf32>
    %187 = arith.divf %185, %186 : vector<2x64xf32>
    %188 = vector.extract_strided_slice %175 {offsets = [0, 128], sizes = [2, 64], strides = [1, 1]} : vector<2x256xf32> to vector<2x64xf32>
    %189 = math.tanh %188 : vector<2x64xf32>
    %190 = vector.extract_strided_slice %175 {offsets = [0, 192], sizes = [2, 64], strides = [1, 1]} : vector<2x256xf32> to vector<2x64xf32>
    %191 = arith.negf %190 : vector<2x64xf32>
    %192 = math.exp %191 : vector<2x64xf32>
    %cst_61 = arith.constant 1.000000e+00 : f32
    %193 = vector.broadcast %cst_61 : f32 to vector<2x64xf32>
    %194 = arith.addf %193, %192 : vector<2x64xf32>
    %195 = arith.divf %193, %194 : vector<2x64xf32>
    %196 = arith.mulf %187, %136 : vector<2x64xf32>
    %197 = arith.mulf %181, %189 : vector<2x64xf32>
    %198 = arith.addf %196, %197 : vector<2x64xf32>
    %199 = math.tanh %198 : vector<2x64xf32>
    %200 = arith.mulf %195, %199 : vector<2x64xf32>
    %c3_i32 = arith.constant 3 : i32
    %201 = arith.index_cast %c3_i32 : i32 to index
    %c0_62 = arith.constant 0 : index
    %c0_63 = arith.constant 0 : index
    %202 = vector.load %arg10[%201, %c0_62, %c0_63] : memref<8x2x256xf32, #tpu.memory_space<vmem>>, vector<1x2x256xf32>
    %203 = vector.shape_cast %202 : vector<1x2x256xf32> to vector<2x256xf32>
    %c0_64 = arith.constant 0 : index
    %c0_65 = arith.constant 0 : index
    %204 = vector.load %arg3[%c0_64, %c0_65] : memref<64x256xf32, #tpu.memory_space<vmem>>, vector<64x256xf32>
    %cst_66 = arith.constant dense<0.000000e+00> : vector<2x256xf32>
    %205 = tpu.matmul %169, %204, %cst_66 {dimension_numbers = #tpu.dot_dimension_numbers<[1], [0], [0], [1], [0, 0, 1, 1], [], []>} : vector<2x64xf32>, vector<64x256xf32>, vector<2x256xf32> -> vector<2x256xf32>
    %206 = arith.addf %203, %205 : vector<2x256xf32>
    %207 = vector.extract_strided_slice %206 {offsets = [0, 0], sizes = [2, 64], strides = [1, 1]} : vector<2x256xf32> to vector<2x64xf32>
    %208 = arith.negf %207 : vector<2x64xf32>
    %209 = math.exp %208 : vector<2x64xf32>
    %cst_67 = arith.constant 1.000000e+00 : f32
    %210 = vector.broadcast %cst_67 : f32 to vector<2x64xf32>
    %211 = arith.addf %210, %209 : vector<2x64xf32>
    %212 = arith.divf %210, %211 : vector<2x64xf32>
    %213 = vector.extract_strided_slice %206 {offsets = [0, 64], sizes = [2, 64], strides = [1, 1]} : vector<2x256xf32> to vector<2x64xf32>
    %214 = arith.negf %213 : vector<2x64xf32>
    %215 = math.exp %214 : vector<2x64xf32>
    %cst_68 = arith.constant 1.000000e+00 : f32
    %216 = vector.broadcast %cst_68 : f32 to vector<2x64xf32>
    %217 = arith.addf %216, %215 : vector<2x64xf32>
    %218 = arith.divf %216, %217 : vector<2x64xf32>
    %219 = vector.extract_strided_slice %206 {offsets = [0, 128], sizes = [2, 64], strides = [1, 1]} : vector<2x256xf32> to vector<2x64xf32>
    %220 = math.tanh %219 : vector<2x64xf32>
    %221 = vector.extract_strided_slice %206 {offsets = [0, 192], sizes = [2, 64], strides = [1, 1]} : vector<2x256xf32> to vector<2x64xf32>
    %222 = arith.negf %221 : vector<2x64xf32>
    %223 = math.exp %222 : vector<2x64xf32>
    %cst_69 = arith.constant 1.000000e+00 : f32
    %224 = vector.broadcast %cst_69 : f32 to vector<2x64xf32>
    %225 = arith.addf %224, %223 : vector<2x64xf32>
    %226 = arith.divf %224, %225 : vector<2x64xf32>
    %227 = arith.mulf %218, %167 : vector<2x64xf32>
    %228 = arith.mulf %212, %220 : vector<2x64xf32>
    %229 = arith.addf %227, %228 : vector<2x64xf32>
    %230 = math.tanh %229 : vector<2x64xf32>
    %231 = arith.mulf %226, %230 : vector<2x64xf32>
    %c0_70 = arith.constant 0 : index
    %c0_71 = arith.constant 0 : index
    %232 = vector.load %arg5[%c0_70, %c0_71] : memref<64x256xf32, #tpu.memory_space<vmem>>, vector<64x256xf32>
    %cst_72 = arith.constant dense<0.000000e+00> : vector<2x256xf32>
    %233 = tpu.matmul %200, %232, %cst_72 {dimension_numbers = #tpu.dot_dimension_numbers<[1], [0], [0], [1], [0, 0, 1, 1], [], []>} : vector<2x64xf32>, vector<64x256xf32>, vector<2x256xf32> -> vector<2x256xf32>
    %234 = arith.addf %13, %233 : vector<2x256xf32>
    %c0_73 = arith.constant 0 : index
    %c0_74 = arith.constant 0 : index
    %235 = vector.load %arg4[%c0_73, %c0_74] : memref<64x256xf32, #tpu.memory_space<vmem>>, vector<64x256xf32>
    %cst_75 = arith.constant dense<0.000000e+00> : vector<2x256xf32>
    %236 = tpu.matmul %231, %235, %cst_75 {dimension_numbers = #tpu.dot_dimension_numbers<[1], [0], [0], [1], [0, 0, 1, 1], [], []>} : vector<2x64xf32>, vector<64x256xf32>, vector<2x256xf32> -> vector<2x256xf32>
    %237 = arith.addf %234, %236 : vector<2x256xf32>
    %238 = vector.extract_strided_slice %237 {offsets = [0, 0], sizes = [2, 64], strides = [1, 1]} : vector<2x256xf32> to vector<2x64xf32>
    %239 = arith.negf %238 : vector<2x64xf32>
    %240 = math.exp %239 : vector<2x64xf32>
    %cst_76 = arith.constant 1.000000e+00 : f32
    %241 = vector.broadcast %cst_76 : f32 to vector<2x64xf32>
    %242 = arith.addf %241, %240 : vector<2x64xf32>
    %243 = arith.divf %241, %242 : vector<2x64xf32>
    %244 = vector.extract_strided_slice %237 {offsets = [0, 64], sizes = [2, 64], strides = [1, 1]} : vector<2x256xf32> to vector<2x64xf32>
    %245 = arith.negf %244 : vector<2x64xf32>
    %246 = math.exp %245 : vector<2x64xf32>
    %cst_77 = arith.constant 1.000000e+00 : f32
    %247 = vector.broadcast %cst_77 : f32 to vector<2x64xf32>
    %248 = arith.addf %247, %246 : vector<2x64xf32>
    %249 = arith.divf %247, %248 : vector<2x64xf32>
    %250 = vector.extract_strided_slice %237 {offsets = [0, 128], sizes = [2, 64], strides = [1, 1]} : vector<2x256xf32> to vector<2x64xf32>
    %251 = math.tanh %250 : vector<2x64xf32>
    %252 = vector.extract_strided_slice %237 {offsets = [0, 192], sizes = [2, 64], strides = [1, 1]} : vector<2x256xf32> to vector<2x64xf32>
    %253 = arith.negf %252 : vector<2x64xf32>
    %254 = math.exp %253 : vector<2x64xf32>
    %cst_78 = arith.constant 1.000000e+00 : f32
    %255 = vector.broadcast %cst_78 : f32 to vector<2x64xf32>
    %256 = arith.addf %255, %254 : vector<2x64xf32>
    %257 = arith.divf %255, %256 : vector<2x64xf32>
    %258 = arith.mulf %249, %198 : vector<2x64xf32>
    %259 = arith.mulf %243, %251 : vector<2x64xf32>
    %260 = arith.addf %258, %259 : vector<2x64xf32>
    %261 = math.tanh %260 : vector<2x64xf32>
    %262 = arith.mulf %257, %261 : vector<2x64xf32>
    %c4_i32 = arith.constant 4 : i32
    %263 = arith.index_cast %c4_i32 : i32 to index
    %c0_79 = arith.constant 0 : index
    %c0_80 = arith.constant 0 : index
    %264 = vector.load %arg10[%263, %c0_79, %c0_80] : memref<8x2x256xf32, #tpu.memory_space<vmem>>, vector<1x2x256xf32>
    %265 = vector.shape_cast %264 : vector<1x2x256xf32> to vector<2x256xf32>
    %c0_81 = arith.constant 0 : index
    %c0_82 = arith.constant 0 : index
    %266 = vector.load %arg3[%c0_81, %c0_82] : memref<64x256xf32, #tpu.memory_space<vmem>>, vector<64x256xf32>
    %cst_83 = arith.constant dense<0.000000e+00> : vector<2x256xf32>
    %267 = tpu.matmul %231, %266, %cst_83 {dimension_numbers = #tpu.dot_dimension_numbers<[1], [0], [0], [1], [0, 0, 1, 1], [], []>} : vector<2x64xf32>, vector<64x256xf32>, vector<2x256xf32> -> vector<2x256xf32>
    %268 = arith.addf %265, %267 : vector<2x256xf32>
    %269 = vector.extract_strided_slice %268 {offsets = [0, 0], sizes = [2, 64], strides = [1, 1]} : vector<2x256xf32> to vector<2x64xf32>
    %270 = arith.negf %269 : vector<2x64xf32>
    %271 = math.exp %270 : vector<2x64xf32>
    %cst_84 = arith.constant 1.000000e+00 : f32
    %272 = vector.broadcast %cst_84 : f32 to vector<2x64xf32>
    %273 = arith.addf %272, %271 : vector<2x64xf32>
    %274 = arith.divf %272, %273 : vector<2x64xf32>
    %275 = vector.extract_strided_slice %268 {offsets = [0, 64], sizes = [2, 64], strides = [1, 1]} : vector<2x256xf32> to vector<2x64xf32>
    %276 = arith.negf %275 : vector<2x64xf32>
    %277 = math.exp %276 : vector<2x64xf32>
    %cst_85 = arith.constant 1.000000e+00 : f32
    %278 = vector.broadcast %cst_85 : f32 to vector<2x64xf32>
    %279 = arith.addf %278, %277 : vector<2x64xf32>
    %280 = arith.divf %278, %279 : vector<2x64xf32>
    %281 = vector.extract_strided_slice %268 {offsets = [0, 128], sizes = [2, 64], strides = [1, 1]} : vector<2x256xf32> to vector<2x64xf32>
    %282 = math.tanh %281 : vector<2x64xf32>
    %283 = vector.extract_strided_slice %268 {offsets = [0, 192], sizes = [2, 64], strides = [1, 1]} : vector<2x256xf32> to vector<2x64xf32>
    %284 = arith.negf %283 : vector<2x64xf32>
    %285 = math.exp %284 : vector<2x64xf32>
    %cst_86 = arith.constant 1.000000e+00 : f32
    %286 = vector.broadcast %cst_86 : f32 to vector<2x64xf32>
    %287 = arith.addf %286, %285 : vector<2x64xf32>
    %288 = arith.divf %286, %287 : vector<2x64xf32>
    %289 = arith.mulf %280, %229 : vector<2x64xf32>
    %290 = arith.mulf %274, %282 : vector<2x64xf32>
    %291 = arith.addf %289, %290 : vector<2x64xf32>
    %292 = math.tanh %291 : vector<2x64xf32>
    %293 = arith.mulf %288, %292 : vector<2x64xf32>
    %c0_87 = arith.constant 0 : index
    %c0_88 = arith.constant 0 : index
    %294 = vector.load %arg5[%c0_87, %c0_88] : memref<64x256xf32, #tpu.memory_space<vmem>>, vector<64x256xf32>
    %cst_89 = arith.constant dense<0.000000e+00> : vector<2x256xf32>
    %295 = tpu.matmul %262, %294, %cst_89 {dimension_numbers = #tpu.dot_dimension_numbers<[1], [0], [0], [1], [0, 0, 1, 1], [], []>} : vector<2x64xf32>, vector<64x256xf32>, vector<2x256xf32> -> vector<2x256xf32>
    %296 = arith.addf %13, %295 : vector<2x256xf32>
    %c0_90 = arith.constant 0 : index
    %c0_91 = arith.constant 0 : index
    %297 = vector.load %arg4[%c0_90, %c0_91] : memref<64x256xf32, #tpu.memory_space<vmem>>, vector<64x256xf32>
    %cst_92 = arith.constant dense<0.000000e+00> : vector<2x256xf32>
    %298 = tpu.matmul %293, %297, %cst_92 {dimension_numbers = #tpu.dot_dimension_numbers<[1], [0], [0], [1], [0, 0, 1, 1], [], []>} : vector<2x64xf32>, vector<64x256xf32>, vector<2x256xf32> -> vector<2x256xf32>
    %299 = arith.addf %296, %298 : vector<2x256xf32>
    %300 = vector.extract_strided_slice %299 {offsets = [0, 0], sizes = [2, 64], strides = [1, 1]} : vector<2x256xf32> to vector<2x64xf32>
    %301 = arith.negf %300 : vector<2x64xf32>
    %302 = math.exp %301 : vector<2x64xf32>
    %cst_93 = arith.constant 1.000000e+00 : f32
    %303 = vector.broadcast %cst_93 : f32 to vector<2x64xf32>
    %304 = arith.addf %303, %302 : vector<2x64xf32>
    %305 = arith.divf %303, %304 : vector<2x64xf32>
    %306 = vector.extract_strided_slice %299 {offsets = [0, 64], sizes = [2, 64], strides = [1, 1]} : vector<2x256xf32> to vector<2x64xf32>
    %307 = arith.negf %306 : vector<2x64xf32>
    %308 = math.exp %307 : vector<2x64xf32>
    %cst_94 = arith.constant 1.000000e+00 : f32
    %309 = vector.broadcast %cst_94 : f32 to vector<2x64xf32>
    %310 = arith.addf %309, %308 : vector<2x64xf32>
    %311 = arith.divf %309, %310 : vector<2x64xf32>
    %312 = vector.extract_strided_slice %299 {offsets = [0, 128], sizes = [2, 64], strides = [1, 1]} : vector<2x256xf32> to vector<2x64xf32>
    %313 = math.tanh %312 : vector<2x64xf32>
    %314 = vector.extract_strided_slice %299 {offsets = [0, 192], sizes = [2, 64], strides = [1, 1]} : vector<2x256xf32> to vector<2x64xf32>
    %315 = arith.negf %314 : vector<2x64xf32>
    %316 = math.exp %315 : vector<2x64xf32>
    %cst_95 = arith.constant 1.000000e+00 : f32
    %317 = vector.broadcast %cst_95 : f32 to vector<2x64xf32>
    %318 = arith.addf %317, %316 : vector<2x64xf32>
    %319 = arith.divf %317, %318 : vector<2x64xf32>
    %320 = arith.mulf %311, %260 : vector<2x64xf32>
    %321 = arith.mulf %305, %313 : vector<2x64xf32>
    %322 = arith.addf %320, %321 : vector<2x64xf32>
    %323 = math.tanh %322 : vector<2x64xf32>
    %324 = arith.mulf %319, %323 : vector<2x64xf32>
    %c5_i32 = arith.constant 5 : i32
    %325 = arith.index_cast %c5_i32 : i32 to index
    %c0_96 = arith.constant 0 : index
    %c0_97 = arith.constant 0 : index
    %326 = vector.load %arg10[%325, %c0_96, %c0_97] : memref<8x2x256xf32, #tpu.memory_space<vmem>>, vector<1x2x256xf32>
    %327 = vector.shape_cast %326 : vector<1x2x256xf32> to vector<2x256xf32>
    %c0_98 = arith.constant 0 : index
    %c0_99 = arith.constant 0 : index
    %328 = vector.load %arg3[%c0_98, %c0_99] : memref<64x256xf32, #tpu.memory_space<vmem>>, vector<64x256xf32>
    %cst_100 = arith.constant dense<0.000000e+00> : vector<2x256xf32>
    %329 = tpu.matmul %293, %328, %cst_100 {dimension_numbers = #tpu.dot_dimension_numbers<[1], [0], [0], [1], [0, 0, 1, 1], [], []>} : vector<2x64xf32>, vector<64x256xf32>, vector<2x256xf32> -> vector<2x256xf32>
    %330 = arith.addf %327, %329 : vector<2x256xf32>
    %331 = vector.extract_strided_slice %330 {offsets = [0, 0], sizes = [2, 64], strides = [1, 1]} : vector<2x256xf32> to vector<2x64xf32>
    %332 = arith.negf %331 : vector<2x64xf32>
    %333 = math.exp %332 : vector<2x64xf32>
    %cst_101 = arith.constant 1.000000e+00 : f32
    %334 = vector.broadcast %cst_101 : f32 to vector<2x64xf32>
    %335 = arith.addf %334, %333 : vector<2x64xf32>
    %336 = arith.divf %334, %335 : vector<2x64xf32>
    %337 = vector.extract_strided_slice %330 {offsets = [0, 64], sizes = [2, 64], strides = [1, 1]} : vector<2x256xf32> to vector<2x64xf32>
    %338 = arith.negf %337 : vector<2x64xf32>
    %339 = math.exp %338 : vector<2x64xf32>
    %cst_102 = arith.constant 1.000000e+00 : f32
    %340 = vector.broadcast %cst_102 : f32 to vector<2x64xf32>
    %341 = arith.addf %340, %339 : vector<2x64xf32>
    %342 = arith.divf %340, %341 : vector<2x64xf32>
    %343 = vector.extract_strided_slice %330 {offsets = [0, 128], sizes = [2, 64], strides = [1, 1]} : vector<2x256xf32> to vector<2x64xf32>
    %344 = math.tanh %343 : vector<2x64xf32>
    %345 = vector.extract_strided_slice %330 {offsets = [0, 192], sizes = [2, 64], strides = [1, 1]} : vector<2x256xf32> to vector<2x64xf32>
    %346 = arith.negf %345 : vector<2x64xf32>
    %347 = math.exp %346 : vector<2x64xf32>
    %cst_103 = arith.constant 1.000000e+00 : f32
    %348 = vector.broadcast %cst_103 : f32 to vector<2x64xf32>
    %349 = arith.addf %348, %347 : vector<2x64xf32>
    %350 = arith.divf %348, %349 : vector<2x64xf32>
    %351 = arith.mulf %342, %291 : vector<2x64xf32>
    %352 = arith.mulf %336, %344 : vector<2x64xf32>
    %353 = arith.addf %351, %352 : vector<2x64xf32>
    %354 = math.tanh %353 : vector<2x64xf32>
    %355 = arith.mulf %350, %354 : vector<2x64xf32>
    %c0_104 = arith.constant 0 : index
    %c0_105 = arith.constant 0 : index
    %356 = vector.load %arg5[%c0_104, %c0_105] : memref<64x256xf32, #tpu.memory_space<vmem>>, vector<64x256xf32>
    %cst_106 = arith.constant dense<0.000000e+00> : vector<2x256xf32>
    %357 = tpu.matmul %324, %356, %cst_106 {dimension_numbers = #tpu.dot_dimension_numbers<[1], [0], [0], [1], [0, 0, 1, 1], [], []>} : vector<2x64xf32>, vector<64x256xf32>, vector<2x256xf32> -> vector<2x256xf32>
    %358 = arith.addf %13, %357 : vector<2x256xf32>
    %c0_107 = arith.constant 0 : index
    %c0_108 = arith.constant 0 : index
    %359 = vector.load %arg4[%c0_107, %c0_108] : memref<64x256xf32, #tpu.memory_space<vmem>>, vector<64x256xf32>
    %cst_109 = arith.constant dense<0.000000e+00> : vector<2x256xf32>
    %360 = tpu.matmul %355, %359, %cst_109 {dimension_numbers = #tpu.dot_dimension_numbers<[1], [0], [0], [1], [0, 0, 1, 1], [], []>} : vector<2x64xf32>, vector<64x256xf32>, vector<2x256xf32> -> vector<2x256xf32>
    %361 = arith.addf %358, %360 : vector<2x256xf32>
    %362 = vector.extract_strided_slice %361 {offsets = [0, 0], sizes = [2, 64], strides = [1, 1]} : vector<2x256xf32> to vector<2x64xf32>
    %363 = arith.negf %362 : vector<2x64xf32>
    %364 = math.exp %363 : vector<2x64xf32>
    %cst_110 = arith.constant 1.000000e+00 : f32
    %365 = vector.broadcast %cst_110 : f32 to vector<2x64xf32>
    %366 = arith.addf %365, %364 : vector<2x64xf32>
    %367 = arith.divf %365, %366 : vector<2x64xf32>
    %368 = vector.extract_strided_slice %361 {offsets = [0, 64], sizes = [2, 64], strides = [1, 1]} : vector<2x256xf32> to vector<2x64xf32>
    %369 = arith.negf %368 : vector<2x64xf32>
    %370 = math.exp %369 : vector<2x64xf32>
    %cst_111 = arith.constant 1.000000e+00 : f32
    %371 = vector.broadcast %cst_111 : f32 to vector<2x64xf32>
    %372 = arith.addf %371, %370 : vector<2x64xf32>
    %373 = arith.divf %371, %372 : vector<2x64xf32>
    %374 = vector.extract_strided_slice %361 {offsets = [0, 128], sizes = [2, 64], strides = [1, 1]} : vector<2x256xf32> to vector<2x64xf32>
    %375 = math.tanh %374 : vector<2x64xf32>
    %376 = vector.extract_strided_slice %361 {offsets = [0, 192], sizes = [2, 64], strides = [1, 1]} : vector<2x256xf32> to vector<2x64xf32>
    %377 = arith.negf %376 : vector<2x64xf32>
    %378 = math.exp %377 : vector<2x64xf32>
    %cst_112 = arith.constant 1.000000e+00 : f32
    %379 = vector.broadcast %cst_112 : f32 to vector<2x64xf32>
    %380 = arith.addf %379, %378 : vector<2x64xf32>
    %381 = arith.divf %379, %380 : vector<2x64xf32>
    %382 = arith.mulf %373, %322 : vector<2x64xf32>
    %383 = arith.mulf %367, %375 : vector<2x64xf32>
    %384 = arith.addf %382, %383 : vector<2x64xf32>
    %385 = math.tanh %384 : vector<2x64xf32>
    %386 = arith.mulf %381, %385 : vector<2x64xf32>
    %c6_i32 = arith.constant 6 : i32
    %387 = arith.index_cast %c6_i32 : i32 to index
    %c0_113 = arith.constant 0 : index
    %c0_114 = arith.constant 0 : index
    %388 = vector.load %arg10[%387, %c0_113, %c0_114] : memref<8x2x256xf32, #tpu.memory_space<vmem>>, vector<1x2x256xf32>
    %389 = vector.shape_cast %388 : vector<1x2x256xf32> to vector<2x256xf32>
    %c0_115 = arith.constant 0 : index
    %c0_116 = arith.constant 0 : index
    %390 = vector.load %arg3[%c0_115, %c0_116] : memref<64x256xf32, #tpu.memory_space<vmem>>, vector<64x256xf32>
    %cst_117 = arith.constant dense<0.000000e+00> : vector<2x256xf32>
    %391 = tpu.matmul %355, %390, %cst_117 {dimension_numbers = #tpu.dot_dimension_numbers<[1], [0], [0], [1], [0, 0, 1, 1], [], []>} : vector<2x64xf32>, vector<64x256xf32>, vector<2x256xf32> -> vector<2x256xf32>
    %392 = arith.addf %389, %391 : vector<2x256xf32>
    %393 = vector.extract_strided_slice %392 {offsets = [0, 0], sizes = [2, 64], strides = [1, 1]} : vector<2x256xf32> to vector<2x64xf32>
    %394 = arith.negf %393 : vector<2x64xf32>
    %395 = math.exp %394 : vector<2x64xf32>
    %cst_118 = arith.constant 1.000000e+00 : f32
    %396 = vector.broadcast %cst_118 : f32 to vector<2x64xf32>
    %397 = arith.addf %396, %395 : vector<2x64xf32>
    %398 = arith.divf %396, %397 : vector<2x64xf32>
    %399 = vector.extract_strided_slice %392 {offsets = [0, 64], sizes = [2, 64], strides = [1, 1]} : vector<2x256xf32> to vector<2x64xf32>
    %400 = arith.negf %399 : vector<2x64xf32>
    %401 = math.exp %400 : vector<2x64xf32>
    %cst_119 = arith.constant 1.000000e+00 : f32
    %402 = vector.broadcast %cst_119 : f32 to vector<2x64xf32>
    %403 = arith.addf %402, %401 : vector<2x64xf32>
    %404 = arith.divf %402, %403 : vector<2x64xf32>
    %405 = vector.extract_strided_slice %392 {offsets = [0, 128], sizes = [2, 64], strides = [1, 1]} : vector<2x256xf32> to vector<2x64xf32>
    %406 = math.tanh %405 : vector<2x64xf32>
    %407 = vector.extract_strided_slice %392 {offsets = [0, 192], sizes = [2, 64], strides = [1, 1]} : vector<2x256xf32> to vector<2x64xf32>
    %408 = arith.negf %407 : vector<2x64xf32>
    %409 = math.exp %408 : vector<2x64xf32>
    %cst_120 = arith.constant 1.000000e+00 : f32
    %410 = vector.broadcast %cst_120 : f32 to vector<2x64xf32>
    %411 = arith.addf %410, %409 : vector<2x64xf32>
    %412 = arith.divf %410, %411 : vector<2x64xf32>
    %413 = arith.mulf %404, %353 : vector<2x64xf32>
    %414 = arith.mulf %398, %406 : vector<2x64xf32>
    %415 = arith.addf %413, %414 : vector<2x64xf32>
    %416 = math.tanh %415 : vector<2x64xf32>
    %417 = arith.mulf %412, %416 : vector<2x64xf32>
    %c0_121 = arith.constant 0 : index
    %c0_122 = arith.constant 0 : index
    %418 = vector.load %arg5[%c0_121, %c0_122] : memref<64x256xf32, #tpu.memory_space<vmem>>, vector<64x256xf32>
    %cst_123 = arith.constant dense<0.000000e+00> : vector<2x256xf32>
    %419 = tpu.matmul %386, %418, %cst_123 {dimension_numbers = #tpu.dot_dimension_numbers<[1], [0], [0], [1], [0, 0, 1, 1], [], []>} : vector<2x64xf32>, vector<64x256xf32>, vector<2x256xf32> -> vector<2x256xf32>
    %420 = arith.addf %13, %419 : vector<2x256xf32>
    %c0_124 = arith.constant 0 : index
    %c0_125 = arith.constant 0 : index
    %421 = vector.load %arg4[%c0_124, %c0_125] : memref<64x256xf32, #tpu.memory_space<vmem>>, vector<64x256xf32>
    %cst_126 = arith.constant dense<0.000000e+00> : vector<2x256xf32>
    %422 = tpu.matmul %417, %421, %cst_126 {dimension_numbers = #tpu.dot_dimension_numbers<[1], [0], [0], [1], [0, 0, 1, 1], [], []>} : vector<2x64xf32>, vector<64x256xf32>, vector<2x256xf32> -> vector<2x256xf32>
    %423 = arith.addf %420, %422 : vector<2x256xf32>
    %424 = vector.extract_strided_slice %423 {offsets = [0, 0], sizes = [2, 64], strides = [1, 1]} : vector<2x256xf32> to vector<2x64xf32>
    %425 = arith.negf %424 : vector<2x64xf32>
    %426 = math.exp %425 : vector<2x64xf32>
    %cst_127 = arith.constant 1.000000e+00 : f32
    %427 = vector.broadcast %cst_127 : f32 to vector<2x64xf32>
    %428 = arith.addf %427, %426 : vector<2x64xf32>
    %429 = arith.divf %427, %428 : vector<2x64xf32>
    %430 = vector.extract_strided_slice %423 {offsets = [0, 64], sizes = [2, 64], strides = [1, 1]} : vector<2x256xf32> to vector<2x64xf32>
    %431 = arith.negf %430 : vector<2x64xf32>
    %432 = math.exp %431 : vector<2x64xf32>
    %cst_128 = arith.constant 1.000000e+00 : f32
    %433 = vector.broadcast %cst_128 : f32 to vector<2x64xf32>
    %434 = arith.addf %433, %432 : vector<2x64xf32>
    %435 = arith.divf %433, %434 : vector<2x64xf32>
    %436 = vector.extract_strided_slice %423 {offsets = [0, 128], sizes = [2, 64], strides = [1, 1]} : vector<2x256xf32> to vector<2x64xf32>
    %437 = math.tanh %436 : vector<2x64xf32>
    %438 = vector.extract_strided_slice %423 {offsets = [0, 192], sizes = [2, 64], strides = [1, 1]} : vector<2x256xf32> to vector<2x64xf32>
    %439 = arith.negf %438 : vector<2x64xf32>
    %440 = math.exp %439 : vector<2x64xf32>
    %cst_129 = arith.constant 1.000000e+00 : f32
    %441 = vector.broadcast %cst_129 : f32 to vector<2x64xf32>
    %442 = arith.addf %441, %440 : vector<2x64xf32>
    %443 = arith.divf %441, %442 : vector<2x64xf32>
    %444 = arith.mulf %435, %384 : vector<2x64xf32>
    %445 = arith.mulf %429, %437 : vector<2x64xf32>
    %446 = arith.addf %444, %445 : vector<2x64xf32>
    %447 = math.tanh %446 : vector<2x64xf32>
    %448 = arith.mulf %443, %447 : vector<2x64xf32>
    %c7_i32 = arith.constant 7 : i32
    %449 = arith.index_cast %c7_i32 : i32 to index
    %c0_130 = arith.constant 0 : index
    %c0_131 = arith.constant 0 : index
    %450 = vector.load %arg10[%449, %c0_130, %c0_131] : memref<8x2x256xf32, #tpu.memory_space<vmem>>, vector<1x2x256xf32>
    %451 = vector.shape_cast %450 : vector<1x2x256xf32> to vector<2x256xf32>
    %c0_132 = arith.constant 0 : index
    %c0_133 = arith.constant 0 : index
    %452 = vector.load %arg3[%c0_132, %c0_133] : memref<64x256xf32, #tpu.memory_space<vmem>>, vector<64x256xf32>
    %cst_134 = arith.constant dense<0.000000e+00> : vector<2x256xf32>
    %453 = tpu.matmul %417, %452, %cst_134 {dimension_numbers = #tpu.dot_dimension_numbers<[1], [0], [0], [1], [0, 0, 1, 1], [], []>} : vector<2x64xf32>, vector<64x256xf32>, vector<2x256xf32> -> vector<2x256xf32>
    %454 = arith.addf %451, %453 : vector<2x256xf32>
    %455 = vector.extract_strided_slice %454 {offsets = [0, 0], sizes = [2, 64], strides = [1, 1]} : vector<2x256xf32> to vector<2x64xf32>
    %456 = arith.negf %455 : vector<2x64xf32>
    %457 = math.exp %456 : vector<2x64xf32>
    %cst_135 = arith.constant 1.000000e+00 : f32
    %458 = vector.broadcast %cst_135 : f32 to vector<2x64xf32>
    %459 = arith.addf %458, %457 : vector<2x64xf32>
    %460 = arith.divf %458, %459 : vector<2x64xf32>
    %461 = vector.extract_strided_slice %454 {offsets = [0, 64], sizes = [2, 64], strides = [1, 1]} : vector<2x256xf32> to vector<2x64xf32>
    %462 = arith.negf %461 : vector<2x64xf32>
    %463 = math.exp %462 : vector<2x64xf32>
    %cst_136 = arith.constant 1.000000e+00 : f32
    %464 = vector.broadcast %cst_136 : f32 to vector<2x64xf32>
    %465 = arith.addf %464, %463 : vector<2x64xf32>
    %466 = arith.divf %464, %465 : vector<2x64xf32>
    %467 = vector.extract_strided_slice %454 {offsets = [0, 128], sizes = [2, 64], strides = [1, 1]} : vector<2x256xf32> to vector<2x64xf32>
    %468 = math.tanh %467 : vector<2x64xf32>
    %469 = vector.extract_strided_slice %454 {offsets = [0, 192], sizes = [2, 64], strides = [1, 1]} : vector<2x256xf32> to vector<2x64xf32>
    %470 = arith.negf %469 : vector<2x64xf32>
    %471 = math.exp %470 : vector<2x64xf32>
    %cst_137 = arith.constant 1.000000e+00 : f32
    %472 = vector.broadcast %cst_137 : f32 to vector<2x64xf32>
    %473 = arith.addf %472, %471 : vector<2x64xf32>
    %474 = arith.divf %472, %473 : vector<2x64xf32>
    %475 = arith.mulf %466, %415 : vector<2x64xf32>
    %476 = arith.mulf %460, %468 : vector<2x64xf32>
    %477 = arith.addf %475, %476 : vector<2x64xf32>
    %478 = math.tanh %477 : vector<2x64xf32>
    %479 = arith.mulf %474, %478 : vector<2x64xf32>
    %c0_138 = arith.constant 0 : index
    %c0_139 = arith.constant 0 : index
    %480 = vector.load %arg5[%c0_138, %c0_139] : memref<64x256xf32, #tpu.memory_space<vmem>>, vector<64x256xf32>
    %cst_140 = arith.constant dense<0.000000e+00> : vector<2x256xf32>
    %481 = tpu.matmul %448, %480, %cst_140 {dimension_numbers = #tpu.dot_dimension_numbers<[1], [0], [0], [1], [0, 0, 1, 1], [], []>} : vector<2x64xf32>, vector<64x256xf32>, vector<2x256xf32> -> vector<2x256xf32>
    %482 = arith.addf %13, %481 : vector<2x256xf32>
    %c0_141 = arith.constant 0 : index
    %c0_142 = arith.constant 0 : index
    %483 = vector.load %arg4[%c0_141, %c0_142] : memref<64x256xf32, #tpu.memory_space<vmem>>, vector<64x256xf32>
    %cst_143 = arith.constant dense<0.000000e+00> : vector<2x256xf32>
    %484 = tpu.matmul %479, %483, %cst_143 {dimension_numbers = #tpu.dot_dimension_numbers<[1], [0], [0], [1], [0, 0, 1, 1], [], []>} : vector<2x64xf32>, vector<64x256xf32>, vector<2x256xf32> -> vector<2x256xf32>
    %485 = arith.addf %482, %484 : vector<2x256xf32>
    %486 = vector.extract_strided_slice %485 {offsets = [0, 0], sizes = [2, 64], strides = [1, 1]} : vector<2x256xf32> to vector<2x64xf32>
    %487 = arith.negf %486 : vector<2x64xf32>
    %488 = math.exp %487 : vector<2x64xf32>
    %cst_144 = arith.constant 1.000000e+00 : f32
    %489 = vector.broadcast %cst_144 : f32 to vector<2x64xf32>
    %490 = arith.addf %489, %488 : vector<2x64xf32>
    %491 = arith.divf %489, %490 : vector<2x64xf32>
    %492 = vector.extract_strided_slice %485 {offsets = [0, 64], sizes = [2, 64], strides = [1, 1]} : vector<2x256xf32> to vector<2x64xf32>
    %493 = arith.negf %492 : vector<2x64xf32>
    %494 = math.exp %493 : vector<2x64xf32>
    %cst_145 = arith.constant 1.000000e+00 : f32
    %495 = vector.broadcast %cst_145 : f32 to vector<2x64xf32>
    %496 = arith.addf %495, %494 : vector<2x64xf32>
    %497 = arith.divf %495, %496 : vector<2x64xf32>
    %498 = vector.extract_strided_slice %485 {offsets = [0, 128], sizes = [2, 64], strides = [1, 1]} : vector<2x256xf32> to vector<2x64xf32>
    %499 = math.tanh %498 : vector<2x64xf32>
    %500 = vector.extract_strided_slice %485 {offsets = [0, 192], sizes = [2, 64], strides = [1, 1]} : vector<2x256xf32> to vector<2x64xf32>
    %501 = arith.negf %500 : vector<2x64xf32>
    %502 = math.exp %501 : vector<2x64xf32>
    %cst_146 = arith.constant 1.000000e+00 : f32
    %503 = vector.broadcast %cst_146 : f32 to vector<2x64xf32>
    %504 = arith.addf %503, %502 : vector<2x64xf32>
    %505 = arith.divf %503, %504 : vector<2x64xf32>
    %506 = arith.mulf %497, %446 : vector<2x64xf32>
    %507 = arith.mulf %491, %499 : vector<2x64xf32>
    %508 = arith.addf %506, %507 : vector<2x64xf32>
    %509 = math.tanh %508 : vector<2x64xf32>
    %510 = arith.mulf %505, %509 : vector<2x64xf32>
    %c8_i32 = arith.constant 8 : i32
    %c0_147 = arith.constant 0 : index
    %c0_148 = arith.constant 0 : index
    %511 = vector.load %arg7[%c0_147, %c0_148] : memref<64x1xf32, #tpu.memory_space<vmem>>, vector<64x1xf32>
    %cst_149 = arith.constant dense<0.000000e+00> : vector<2x1xf32>
    %512 = tpu.matmul %510, %511, %cst_149 {dimension_numbers = #tpu.dot_dimension_numbers<[1], [0], [0], [1], [0, 0, 1, 1], [], []>} : vector<2x64xf32>, vector<64x1xf32>, vector<2x1xf32> -> vector<2x1xf32>
    %c0_150 = arith.constant 0 : index
    %c0_151 = arith.constant 0 : index
    %513 = vector.load %arg8[%c0_150, %c0_151] : memref<1x1xf32, #tpu.memory_space<vmem>>, vector<1x1xf32>
    %514 = vector.broadcast %513 : vector<1x1xf32> to vector<2x1xf32>
    %515 = arith.addf %512, %514 : vector<2x1xf32>
    %c0_152 = arith.constant 0 : index
    %c0_153 = arith.constant 0 : index
    %516 = vector.load %arg9[%c0_152, %c0_153] : memref<2x1xf32, #tpu.memory_space<vmem>>, vector<2x1xf32>
    tpu.vector_store %arg9[%c0_152, %c0_153], %515 {strides = array<i32>} : memref<2x1xf32, #tpu.memory_space<vmem>>, vector<2x1xf32>,
    return
  }
}

</mosaic_0001>

<llo_original>
// kernel: lstm_forward.1
$region0: #{lstm_forward.1}
  #allocation0 [shape = 'u32[]', space=smem, size = 0x4, offset = 0x4, fixed_abs, tag = 'smem constant byte address 0x4 - core index']
  #allocation1 [shape = 'u32[144,128]{1,0:T(1,128)}', space=vmem, size = 0x12000, scoped, tag = 'internal scratch']
  #allocation2 [shape = 'f32[8,2,256]{2,1,0:T(2,128)}', space=vmem, size = 0x4000, scoped, tag = 'scratch operand']
  #allocation3 [shape = 'f32[1,1]{1,0:T(1,128)S(1)}', space=vmem, size = 0x200, scoped, tag = 'scoped memory for lstm_forward.1']
  %s0 = inlined_call_operand.vmem [shape: f32[8,2,1], index: 0, kind: input, shape index: {}]
  %s1 = inlined_call_operand.vmem [shape: f32[1,256], index: 1, kind: input, shape index: {}]
  %s2 = inlined_call_operand.vmem [shape: f32[1,256], index: 2, kind: input, shape index: {}]
  %s3 = inlined_call_operand.vmem [shape: f32[64,256], index: 3, kind: input, shape index: {}]
  %s4 = inlined_call_operand.vmem [shape: f32[64,256], index: 4, kind: input, shape index: {}]
  %s5 = inlined_call_operand.vmem [shape: f32[64,256], index: 5, kind: input, shape index: {}]
  %s6 = inlined_call_operand.vmem [shape: f32[1,256], index: 6, kind: input, shape index: {}]
  %s7 = inlined_call_operand.vmem [shape: f32[64,1], index: 7, kind: input, shape index: {}]
  %s8 = inlined_call_operand.<no memory space> [shape: f32[1,1], index: 8, kind: input, shape index: {}]
  %s9 = inlined_call_operand.vmem [shape: f32[2,1], index: 9, kind: output, shape index: {}]
  %s10 = sld [smem:[#allocation0]]
  $region46: #{lstm_forward.1} parent=0
    _
  %s12 = ssub.s32 1, %s10
  %s13 = scalar_select 0, %s12, %s10
  %v14 = vstv %s8
  %15 = vst [vmem:[#allocation3] sm:$0x1] %v14
  // Predicated region
  $region2: #{lstm_forward.1} parent=0 // pred_check
    _
  $region3: #{lstm_forward.1} parent=0 // pred_check_branch
    %17 = sbr.rel (0) target = $region5
  $region4: #{lstm_forward.1} parent=0 // pred_region
    _
  $region5: #{lstm_forward.1} parent=0 // pred_fallthru
    _
  // Predicated region
  $region6: #{lstm_forward.1} parent=0 // pred_check
    _
  $region7: #{lstm_forward.1} parent=0 // pred_check_branch
    %19 = sbr.rel (0) target = $region9
  $region8: #{lstm_forward.1} parent=0 // pred_region
    _
  $region9: #{lstm_forward.1} parent=0 // pred_fallthru
    _
  // Predicated region
  $region10: #{lstm_forward.1} parent=0 // pred_check
    _
  $region11: #{lstm_forward.1} parent=0 // pred_check_branch
    %21 = sbr.rel (0) target = $region13
  $region12: #{lstm_forward.1} parent=0 // pred_region
    _
  $region13: #{lstm_forward.1} parent=0 // pred_fallthru
    _
  // Predicated region
  $region14: #{lstm_forward.1} parent=0 // pred_check
    _
  $region15: #{lstm_forward.1} parent=0 // pred_check_branch
    %23 = sbr.rel (0) target = $region17
  $region16: #{lstm_forward.1} parent=0 // pred_region
    _
  $region17: #{lstm_forward.1} parent=0 // pred_fallthru
    _
  // Predicated region
  $region18: #{lstm_forward.1} parent=0 // pred_check
    _
  $region19: #{lstm_forward.1} parent=0 // pred_check_branch
    %25 = sbr.rel (0) target = $region21
  $region20: #{lstm_forward.1} parent=0 // pred_region
    _
  $region21: #{lstm_forward.1} parent=0 // pred_fallthru
    _
  // Predicated region
  $region22: #{lstm_forward.1} parent=0 // pred_check
    _
  $region23: #{lstm_forward.1} parent=0 // pred_check_branch
    %27 = sbr.rel (0) target = $region25
  $region24: #{lstm_forward.1} parent=0 // pred_region
    _
  $region25: #{lstm_forward.1} parent=0 // pred_fallthru
    _
  // Predicated region
  $region26: #{lstm_forward.1} parent=0 // pred_check
    _
  $region27: #{lstm_forward.1} parent=0 // pred_check_branch
    %29 = sbr.rel (0) target = $region29
  $region28: #{lstm_forward.1} parent=0 // pred_region
    _
  $region29: #{lstm_forward.1} parent=0 // pred_fallthru
    _
  // Predicated region
  $region30: #{lstm_forward.1} parent=0 // pred_check
    _
  $region31: #{lstm_forward.1} parent=0 // pred_check_branch
    %31 = sbr.rel (0) target = $region33
  $region32: #{lstm_forward.1} parent=0 // pred_region
    _
  $region33: #{lstm_forward.1} parent=0 // pred_fallthru
    _
  // Predicated region
  $region34: #{lstm_forward.1} parent=0 // pred_check
    _
  $region35: #{lstm_forward.1} parent=0 // pred_check_branch
    %33 = sbr.rel (0) target = $region37
  $region36: #{lstm_forward.1} parent=0 // pred_region
    _
  $region37: #{lstm_forward.1} parent=0 // pred_fallthru
    _
  %v34 = vld [vmem:[%s1] sm:$0x3]
  %v35 = vld [vmem:[%s2] sm:$0x3]
  %v36 = vld [vmem:[%s0] sm:$0x3]
  %v37 = vld [vmem:[%s0 + $0x2] sm:$0x3]
  %v38 = vld [vmem:[%s0 + $0x4] sm:$0x3]
  %v39 = vld [vmem:[%s0 + $0x6] sm:$0x3]
  %v40 = vld [vmem:[%s0 + $0x8] sm:$0x3]
  %v41 = vld [vmem:[%s0 + $0xa] sm:$0x3]
  %v42 = vld [vmem:[%s0 + $0xc] sm:$0x3]
  %v43 = vld [vmem:[%s0 + $0xe] sm:$0x3]
  %45 = vset.pattern.permute.xlu0 0
  %46 = vperm.xlu0 %45, %v36
  %v47 = vpop.permute.xlu0 %46
  %50 = vset.pattern.permute.xlu0 0
  %51 = vperm.xlu0 %50, %v37
  %v52 = vpop.permute.xlu0 %51
  %55 = vset.pattern.permute.xlu0 0
  %56 = vperm.xlu0 %55, %v38
  %v57 = vpop.permute.xlu0 %56
  %60 = vset.pattern.permute.xlu0 0
  %61 = vperm.xlu0 %60, %v39
  %v62 = vpop.permute.xlu0 %61
  %65 = vset.pattern.permute.xlu0 0
  %66 = vperm.xlu0 %65, %v40
  %v67 = vpop.permute.xlu0 %66
  %70 = vset.pattern.permute.xlu0 0
  %71 = vperm.xlu0 %70, %v41
  %v72 = vpop.permute.xlu0 %71
  %75 = vset.pattern.permute.xlu0 0
  %76 = vperm.xlu0 %75, %v42
  %v77 = vpop.permute.xlu0 %76
  %80 = vset.pattern.permute.xlu0 0
  %81 = vperm.xlu0 %80, %v43
  %v82 = vpop.permute.xlu0 %81
  %v85 = vlaneseq
  %v86 = vshrl.u32 %v85, 7
  %v87 = vsub.s32 0, %v86
  %v88 = vrot.slane %v34, %v87
  %v89 = vlaneseq
  %v90 = vshrl.u32 %v89, 7
  %v91 = vsub.s32 1, %v90
  %v92 = vrot.slane %v34, %v91
  %v95 = vmul.f32 %v47, %v88
  %v96 = vmul.f32 %v47, %v92
  %v97 = vmul.f32 %v52, %v88
  %v98 = vmul.f32 %v52, %v92
  %v99 = vmul.f32 %v57, %v88
  %v100 = vmul.f32 %v57, %v92
  %v101 = vmul.f32 %v62, %v88
  %v102 = vmul.f32 %v62, %v92
  %v103 = vmul.f32 %v67, %v88
  %v104 = vmul.f32 %v67, %v92
  %v105 = vmul.f32 %v72, %v88
  %v106 = vmul.f32 %v72, %v92
  %v107 = vmul.f32 %v77, %v88
  %v108 = vmul.f32 %v77, %v92
  %v109 = vmul.f32 %v82, %v88
  %v110 = vmul.f32 %v82, %v92
  %v112 = vlaneseq
  %v113 = vshrl.u32 %v112, 7
  %v114 = vsub.s32 0, %v113
  %v115 = vrot.slane %v35, %v114
  %v116 = vlaneseq
  %v117 = vshrl.u32 %v116, 7
  %v118 = vsub.s32 1, %v117
  %v119 = vrot.slane %v35, %v118
  %v122 = vadd.f32 %v95, %v115
  %v123 = vadd.f32 %v96, %v119
  %v124 = vadd.f32 %v97, %v115
  %v125 = vadd.f32 %v98, %v119
  %v126 = vadd.f32 %v99, %v115
  %v127 = vadd.f32 %v100, %v119
  %v128 = vadd.f32 %v101, %v115
  %v129 = vadd.f32 %v102, %v119
  %v130 = vadd.f32 %v103, %v115
  %v131 = vadd.f32 %v104, %v119
  %v132 = vadd.f32 %v105, %v115
  %v133 = vadd.f32 %v106, %v119
  %v134 = vadd.f32 %v107, %v115
  %v135 = vadd.f32 %v108, %v119
  %v136 = vadd.f32 %v109, %v115
  %v137 = vadd.f32 %v110, %v119
  %v154 = vcombine.low %v122, %v123
  %v156 = vunpack.c.l.s4 1983009808
  %v157 = vunpack.c.0.s8 %v156
  %v158 = vlaneseq
  %v159 = vshrl.u32 %v158, 7
  %v160 = vsub.s32 %v157, %v159
  %v161 = vrot.slane %v154, %v160
  %v162 = vcombine.low %v124, %v125
  %v164 = vunpack.c.l.s4 1983009808
  %v165 = vunpack.c.0.s8 %v164
  %v166 = vlaneseq
  %v167 = vshrl.u32 %v166, 7
  %v168 = vsub.s32 %v165, %v167
  %v169 = vrot.slane %v162, %v168
  %v170 = vcombine.low %v126, %v127
  %v172 = vunpack.c.l.s4 1983009808
  %v173 = vunpack.c.0.s8 %v172
  %v174 = vlaneseq
  %v175 = vshrl.u32 %v174, 7
  %v176 = vsub.s32 %v173, %v175
  %v177 = vrot.slane %v170, %v176
  %v178 = vcombine.low %v128, %v129
  %v180 = vunpack.c.l.s4 1983009808
  %v181 = vunpack.c.0.s8 %v180
  %v182 = vlaneseq
  %v183 = vshrl.u32 %v182, 7
  %v184 = vsub.s32 %v181, %v183
  %v185 = vrot.slane %v178, %v184
  %v186 = vcombine.low %v130, %v131
  %v188 = vunpack.c.l.s4 1983009808
  %v189 = vunpack.c.0.s8 %v188
  %v190 = vlaneseq
  %v191 = vshrl.u32 %v190, 7
  %v192 = vsub.s32 %v189, %v191
  %v193 = vrot.slane %v186, %v192
  %v194 = vcombine.low %v132, %v133
  %v196 = vunpack.c.l.s4 1983009808
  %v197 = vunpack.c.0.s8 %v196
  %v198 = vlaneseq
  %v199 = vshrl.u32 %v198, 7
  %v200 = vsub.s32 %v197, %v199
  %v201 = vrot.slane %v194, %v200
  %v202 = vcombine.low %v134, %v135
  %v204 = vunpack.c.l.s4 1983009808
  %v205 = vunpack.c.0.s8 %v204
  %v206 = vlaneseq
  %v207 = vshrl.u32 %v206, 7
  %v208 = vsub.s32 %v205, %v207
  %v209 = vrot.slane %v202, %v208
  %v210 = vcombine.low %v136, %v137
  %v212 = vunpack.c.l.s4 1983009808
  %v213 = vunpack.c.0.s8 %v212
  %v214 = vlaneseq
  %v215 = vshrl.u32 %v214, 7
  %v216 = vsub.s32 %v213, %v215
  %v217 = vrot.slane %v210, %v216
  %226 = vst [vmem:[#allocation2] sm:$0xf] %v161
  %227 = vst [vmem:[#allocation2 + $0x4] sm:$0xf] %v169
  %228 = vst [vmem:[#allocation2 + $0x8] sm:$0xf] %v177
  %229 = vst [vmem:[#allocation2 + $0xc] sm:$0xf] %v185
  %230 = vst [vmem:[#allocation2 + $0x10] sm:$0xf] %v193
  %231 = vst [vmem:[#allocation2 + $0x14] sm:$0xf] %v201
  %232 = vst [vmem:[#allocation2 + $0x18] sm:$0xf] %v209
  %233 = vst [vmem:[#allocation2 + $0x1c] sm:$0xf] %v217
  %v234 = vld [vmem:[%s6] sm:$0x3]
  %v236 = vlaneseq
  %v237 = vshrl.u32 %v236, 7
  %v238 = vsub.s32 0, %v237
  %v239 = vrot.slane %v234, %v238
  %v240 = vlaneseq
  %v241 = vshrl.u32 %v240, 7
  %v242 = vsub.s32 1, %v241
  %v243 = vrot.slane %v234, %v242
  %v246 = vld [vmem:[#allocation2] sm:$0xf]
  %v247 = vld [vmem:[%s3] sm:$0xff]
  %v248 = vld [vmem:[%s3 + $0x8] sm:$0xff]
  %v249 = vld [vmem:[%s3 + $0x10] sm:$0xff]
  %v250 = vld [vmem:[%s3 + $0x18] sm:$0xff]
  %v251 = vld [vmem:[%s3 + $0x20] sm:$0xff]
  %v252 = vld [vmem:[%s3 + $0x28] sm:$0xff]
  %v253 = vld [vmem:[%s3 + $0x30] sm:$0xff]
  %v254 = vld [vmem:[%s3 + $0x38] sm:$0xff]
  %v255 = vld [vmem:[%s3 + $0x40] sm:$0xff]
  %v256 = vld [vmem:[%s3 + $0x48] sm:$0xff]
  %v257 = vld [vmem:[%s3 + $0x50] sm:$0xff]
  %v258 = vld [vmem:[%s3 + $0x58] sm:$0xff]
  %v259 = vld [vmem:[%s3 + $0x60] sm:$0xff]
  %v260 = vld [vmem:[%s3 + $0x68] sm:$0xff]
  %v261 = vld [vmem:[%s3 + $0x70] sm:$0xff]
  %v262 = vld [vmem:[%s3 + $0x78] sm:$0xff]
  %vm263 = vcmask 523264
  %v265 = vsel %vm263, 0.0, 0
  %267 = vmatprep.subr.mxu0 0.0
  %268 = vmatpush1.msra.mxu0 0.0
  %269 = vmatprep.subr.mxu0 0.0
  %270 = vmatpush1.msra.mxu0 0.0
  %271 = vmatprep.subr.mxu0 0.0
  %272 = vmatpush1.msra.mxu0 0.0
  %273 = vmatprep.subr.mxu0 0.0
  %274 = vmatpush1.msra.mxu0 0.0
  %275 = vmatprep.subr.mxu0 0.0
  %276 = vmatpush1.msra.mxu0 0.0
  %277 = vmatprep.subr.mxu0 0.0
  %278 = vmatpush1.msra.mxu0 0.0
  %279 = vmatprep.subr.mxu0 0.0
  %280 = vmatpush1.msra.mxu0 0.0
  %281 = vmatprep.subr.mxu0 0.0
  %282 = vmatpush1.msra.mxu0 0.0
  %283 = vmatprep.subr.mxu0 %v262
  %284 = vmatpush1.msra.mxu0 %v261
  %285 = vmatprep.subr.mxu0 %v260
  %286 = vmatpush1.msra.mxu0 %v259
  %287 = vmatprep.subr.mxu0 %v258
  %288 = vmatpush1.msra.mxu0 %v257
  %289 = vmatprep.subr.mxu0 %v256
  %290 = vmatpush1.msra.mxu0 %v255
  %291 = vmatprep.subr.mxu0 %v254
  %292 = vmatpush1.msra.mxu0 %v253
  %293 = vmatprep.subr.mxu0 %v252
  %294 = vmatpush1.msra.mxu0 %v251
  %295 = vmatprep.subr.mxu0 %v250
  %296 = vmatpush1.msra.mxu0 %v249
  %297 = vmatprep.subr.mxu0 %v248
  %298 = vmatpush1.msra.mxu0 %v247
  %299 = vmatprep.subr.mxu0 0.0
  %300 = vmatpush2.msra.mxu0 0.0
  %301 = vmatprep.subr.mxu0 0.0
  %302 = vmatpush2.msra.mxu0 0.0
  %303 = vmatprep.subr.mxu0 0.0
  %304 = vmatpush2.msra.mxu0 0.0
  %305 = vmatprep.subr.mxu0 0.0
  %306 = vmatpush2.msra.mxu0 0.0
  %307 = vmatprep.subr.mxu0 0.0
  %308 = vmatpush2.msra.mxu0 0.0
  %309 = vmatprep.subr.mxu0 0.0
  %310 = vmatpush2.msra.mxu0 0.0
  %311 = vmatprep.subr.mxu0 0.0
  %312 = vmatpush2.msra.mxu0 0.0
  %313 = vmatprep.subr.mxu0 0.0
  %314 = vmatpush2.msra.mxu0 0.0
  %315 = vmatprep.subr.mxu0 0.0
  %316 = vmatpush2.msra.mxu0 0.0
  %317 = vmatprep.subr.mxu0 0.0
  %318 = vmatpush2.msra.mxu0 0.0
  %319 = vmatprep.subr.mxu0 0.0
  %320 = vmatpush2.msra.mxu0 0.0
  %321 = vmatprep.subr.mxu0 0.0
  %322 = vmatpush2.msra.mxu0 0.0
  %323 = vmatprep.subr.mxu0 0.0
  %324 = vmatpush2.msra.mxu0 0.0
  %325 = vmatprep.subr.mxu0 0.0
  %326 = vmatpush2.msra.mxu0 0.0
  %327 = vmatprep.subr.mxu0 0.0
  %328 = vmatpush2.msra.mxu0 0.0
  %329 = vmatprep.subr.mxu0 0.0
  %330 = vmatpush2.msra.mxu0 0.0
  %331 = vmatprep.mubr.f32.mxu0 0.0
  %332 = vmatmul.mubr.f32.gmra.mxu0 %v265
  %v333 = vpop.f32.mrf.mxu0
  %v334 = vadd.f32 0.0, %v333
  %v335 = vpop.f32.mrf.mxu0
  %v336 = vadd.f32 0.0, %v335
  %337 = vdwg.mxu0
  %v340 = vcombine.low %v334, %v336
  %v342 = vunpack.c.l.s4 1983009808
  %v343 = vunpack.c.0.s8 %v342
  %v344 = vlaneseq
  %v345 = vshrl.u32 %v344, 7
  %v346 = vsub.s32 %v343, %v345
  %v347 = vrot.slane %v340, %v346
  %v349 = vadd.f32 %v246, %v347
  %v350 = vxor.u32 %v349, 2147483648
  %v351 = vmul.f32 %v350, 1.442695
  %v352 = vpow.pop %v351
  %v353 = vadd.f32 %v352, 1.0
  %v354 = vrcp.pop %v353
  %v355 = vmul.f32 1.0, %v354
  %v357 = vrot.slane %v349, 2
  %v359 = vtanh.pop %v357
  %360 = vrot.lane.b32.xlu0 %v349, 64
  %v361 = vpop.permute.xlu0 %360
  %v362 = vrot.slane %v361, 2
  %v364 = vxor.u32 %v362, 2147483648
  %v365 = vmul.f32 %v364, 1.442695
  %v366 = vpow.pop %v365
  %v367 = vadd.f32 %v366, 1.0
  %v368 = vrcp.pop %v367
  %v369 = vmul.f32 1.0, %v368
  %v370 = vmul.f32 %v355, 0.0
  %v371 = vmul.f32 %v355, %v359
  %373 = vrot.lane.b32.xlu0 %v371, 64
  %v374 = vpop.permute.xlu0 %373
  %v376 = vadd.f32 %v370, %v374
  %v377 = vtanh.pop %v376
  %379 = vrot.lane.b32.xlu0 %v377, 64
  %v380 = vpop.permute.xlu0 %379
  %v382 = vmul.f32 %v369, %v380
  %v383 = vld [vmem:[%s5] sm:$0xff]
  %v384 = vld [vmem:[%s5 + $0x8] sm:$0xff]
  %v385 = vld [vmem:[%s5 + $0x10] sm:$0xff]
  %v386 = vld [vmem:[%s5 + $0x18] sm:$0xff]
  %v387 = vld [vmem:[%s5 + $0x20] sm:$0xff]
  %v388 = vld [vmem:[%s5 + $0x28] sm:$0xff]
  %v389 = vld [vmem:[%s5 + $0x30] sm:$0xff]
  %v390 = vld [vmem:[%s5 + $0x38] sm:$0xff]
  %v391 = vld [vmem:[%s5 + $0x40] sm:$0xff]
  %v392 = vld [vmem:[%s5 + $0x48] sm:$0xff]
  %v393 = vld [vmem:[%s5 + $0x50] sm:$0xff]
  %v394 = vld [vmem:[%s5 + $0x58] sm:$0xff]
  %v395 = vld [vmem:[%s5 + $0x60] sm:$0xff]
  %v396 = vld [vmem:[%s5 + $0x68] sm:$0xff]
  %v397 = vld [vmem:[%s5 + $0x70] sm:$0xff]
  %v398 = vld [vmem:[%s5 + $0x78] sm:$0xff]
  %399 = vmatprep.subr.mxu0 0.0
  %400 = vmatpush1.msra.mxu0 0.0
  %401 = vmatprep.subr.mxu0 0.0
  %402 = vmatpush1.msra.mxu0 0.0
  %403 = vmatprep.subr.mxu0 0.0
  %404 = vmatpush1.msra.mxu0 0.0
  %405 = vmatprep.subr.mxu0 0.0
  %406 = vmatpush1.msra.mxu0 0.0
  %407 = vmatprep.subr.mxu0 0.0
  %408 = vmatpush1.msra.mxu0 0.0
  %409 = vmatprep.subr.mxu0 0.0
  %410 = vmatpush1.msra.mxu0 0.0
  %411 = vmatprep.subr.mxu0 0.0
  %412 = vmatpush1.msra.mxu0 0.0
  %413 = vmatprep.subr.mxu0 0.0
  %414 = vmatpush1.msra.mxu0 0.0
  %415 = vmatprep.subr.mxu0 %v398
  %416 = vmatpush1.msra.mxu0 %v397
  %417 = vmatprep.subr.mxu0 %v396
  %418 = vmatpush1.msra.mxu0 %v395
  %419 = vmatprep.subr.mxu0 %v394
  %420 = vmatpush1.msra.mxu0 %v393
  %421 = vmatprep.subr.mxu0 %v392
  %422 = vmatpush1.msra.mxu0 %v391
  %423 = vmatprep.subr.mxu0 %v390
  %424 = vmatpush1.msra.mxu0 %v389
  %425 = vmatprep.subr.mxu0 %v388
  %426 = vmatpush1.msra.mxu0 %v387
  %427 = vmatprep.subr.mxu0 %v386
  %428 = vmatpush1.msra.mxu0 %v385
  %429 = vmatprep.subr.mxu0 %v384
  %430 = vmatpush1.msra.mxu0 %v383
  %431 = vmatprep.subr.mxu0 0.0
  %432 = vmatpush2.msra.mxu0 0.0
  %433 = vmatprep.subr.mxu0 0.0
  %434 = vmatpush2.msra.mxu0 0.0
  %435 = vmatprep.subr.mxu0 0.0
  %436 = vmatpush2.msra.mxu0 0.0
  %437 = vmatprep.subr.mxu0 0.0
  %438 = vmatpush2.msra.mxu0 0.0
  %439 = vmatprep.subr.mxu0 0.0
  %440 = vmatpush2.msra.mxu0 0.0
  %441 = vmatprep.subr.mxu0 0.0
  %442 = vmatpush2.msra.mxu0 0.0
  %443 = vmatprep.subr.mxu0 0.0
  %444 = vmatpush2.msra.mxu0 0.0
  %445 = vmatprep.subr.mxu0 0.0
  %446 = vmatpush2.msra.mxu0 0.0
  %447 = vmatprep.subr.mxu0 0.0
  %448 = vmatpush2.msra.mxu0 0.0
  %449 = vmatprep.subr.mxu0 0.0
  %450 = vmatpush2.msra.mxu0 0.0
  %451 = vmatprep.subr.mxu0 0.0
  %452 = vmatpush2.msra.mxu0 0.0
  %453 = vmatprep.subr.mxu0 0.0
  %454 = vmatpush2.msra.mxu0 0.0
  %455 = vmatprep.subr.mxu0 0.0
  %456 = vmatpush2.msra.mxu0 0.0
  %457 = vmatprep.subr.mxu0 0.0
  %458 = vmatpush2.msra.mxu0 0.0
  %459 = vmatprep.subr.mxu0 0.0
  %460 = vmatpush2.msra.mxu0 0.0
  %461 = vmatprep.subr.mxu0 0.0
  %462 = vmatpush2.msra.mxu0 0.0
  %463 = vmatprep.mubr.f32.mxu0 0.0
  %464 = vmatmul.mubr.f32.gmra.mxu0 %v265
  %v465 = vpop.f32.mrf.mxu0
  %v466 = vadd.f32 0.0, %v465
  %v467 = vpop.f32.mrf.mxu0
  %v468 = vadd.f32 0.0, %v467
  %469 = vdwg.mxu0
  %v470 = vadd.f32 %v239, %v466
  %v471 = vadd.f32 %v243, %v468
  %v472 = vld [vmem:[%s4] sm:$0xff]
  %v473 = vld [vmem:[%s4 + $0x8] sm:$0xff]
  %v474 = vld [vmem:[%s4 + $0x10] sm:$0xff]
  %v475 = vld [vmem:[%s4 + $0x18] sm:$0xff]
  %v476 = vld [vmem:[%s4 + $0x20] sm:$0xff]
  %v477 = vld [vmem:[%s4 + $0x28] sm:$0xff]
  %v478 = vld [vmem:[%s4 + $0x30] sm:$0xff]
  %v479 = vld [vmem:[%s4 + $0x38] sm:$0xff]
  %v480 = vld [vmem:[%s4 + $0x40] sm:$0xff]
  %v481 = vld [vmem:[%s4 + $0x48] sm:$0xff]
  %v482 = vld [vmem:[%s4 + $0x50] sm:$0xff]
  %v483 = vld [vmem:[%s4 + $0x58] sm:$0xff]
  %v484 = vld [vmem:[%s4 + $0x60] sm:$0xff]
  %v485 = vld [vmem:[%s4 + $0x68] sm:$0xff]
  %v486 = vld [vmem:[%s4 + $0x70] sm:$0xff]
  %v487 = vld [vmem:[%s4 + $0x78] sm:$0xff]
  %v489 = vsel %vm263, %v382, 0
  %491 = vmatprep.subr.mxu0 0.0
  %492 = vmatpush1.msra.mxu0 0.0
  %493 = vmatprep.subr.mxu0 0.0
  %494 = vmatpush1.msra.mxu0 0.0
  %495 = vmatprep.subr.mxu0 0.0
  %496 = vmatpush1.msra.mxu0 0.0
  %497 = vmatprep.subr.mxu0 0.0
  %498 = vmatpush1.msra.mxu0 0.0
  %499 = vmatprep.subr.mxu0 0.0
  %500 = vmatpush1.msra.mxu0 0.0
  %501 = vmatprep.subr.mxu0 0.0
  %502 = vmatpush1.msra.mxu0 0.0
  %503 = vmatprep.subr.mxu0 0.0
  %504 = vmatpush1.msra.mxu0 0.0
  %505 = vmatprep.subr.mxu0 0.0
  %506 = vmatpush1.msra.mxu0 0.0
  %507 = vmatprep.subr.mxu0 %v487
  %508 = vmatpush1.msra.mxu0 %v486
  %509 = vmatprep.subr.mxu0 %v485
  %510 = vmatpush1.msra.mxu0 %v484
  %511 = vmatprep.subr.mxu0 %v483
  %512 = vmatpush1.msra.mxu0 %v482
  %513 = vmatprep.subr.mxu0 %v481
  %514 = vmatpush1.msra.mxu0 %v480
  %515 = vmatprep.subr.mxu0 %v479
  %516 = vmatpush1.msra.mxu0 %v478
  %517 = vmatprep.subr.mxu0 %v477
  %518 = vmatpush1.msra.mxu0 %v476
  %519 = vmatprep.subr.mxu0 %v475
  %520 = vmatpush1.msra.mxu0 %v474
  %521 = vmatprep.subr.mxu0 %v473
  %522 = vmatpush1.msra.mxu0 %v472
  %523 = vmatprep.subr.mxu0 0.0
  %524 = vmatpush2.msra.mxu0 0.0
  %525 = vmatprep.subr.mxu0 0.0
  %526 = vmatpush2.msra.mxu0 0.0
  %527 = vmatprep.subr.mxu0 0.0
  %528 = vmatpush2.msra.mxu0 0.0
  %529 = vmatprep.subr.mxu0 0.0
  %530 = vmatpush2.msra.mxu0 0.0
  %531 = vmatprep.subr.mxu0 0.0
  %532 = vmatpush2.msra.mxu0 0.0
  %533 = vmatprep.subr.mxu0 0.0
  %534 = vmatpush2.msra.mxu0 0.0
  %535 = vmatprep.subr.mxu0 0.0
  %536 = vmatpush2.msra.mxu0 0.0
  %537 = vmatprep.subr.mxu0 0.0
  %538 = vmatpush2.msra.mxu0 0.0
  %539 = vmatprep.subr.mxu0 0.0
  %540 = vmatpush2.msra.mxu0 0.0
  %541 = vmatprep.subr.mxu0 0.0
  %542 = vmatpush2.msra.mxu0 0.0
  %543 = vmatprep.subr.mxu0 0.0
  %544 = vmatpush2.msra.mxu0 0.0
  %545 = vmatprep.subr.mxu0 0.0
  %546 = vmatpush2.msra.mxu0 0.0
  %547 = vmatprep.subr.mxu0 0.0
  %548 = vmatpush2.msra.mxu0 0.0
  %549 = vmatprep.subr.mxu0 0.0
  %550 = vmatpush2.msra.mxu0 0.0
  %551 = vmatprep.subr.mxu0 0.0
  %552 = vmatpush2.msra.mxu0 0.0
  %553 = vmatprep.subr.mxu0 0.0
  %554 = vmatpush2.msra.mxu0 0.0
  %555 = vmatprep.mubr.f32.mxu0 0.0
  %556 = vmatmul.mubr.f32.gmra.mxu0 %v489
  %v557 = vpop.f32.mrf.mxu0
  %v558 = vadd.f32 0.0, %v557
  %v559 = vpop.f32.mrf.mxu0
  %v560 = vadd.f32 0.0, %v559
  %561 = vdwg.mxu0
  %v562 = vadd.f32 %v470, %v558
  %v563 = vadd.f32 %v471, %v560
  %v564 = vxor.u32 %v562, 2147483648
  %v565 = vmul.f32 %v564, 1.442695
  %v566 = vpow.pop %v565
  %v567 = vadd.f32 %v566, 1.0
  %v568 = vrcp.pop %v567
  %v569 = vmul.f32 1.0, %v568
  %v570 = vtanh.pop %v563
  %v571 = vxor.u32 %v563, 2147483648
  %v572 = vmul.f32 %v571, 1.442695
  %v573 = vpow.pop %v572
  %v574 = vadd.f32 %v573, 1.0
  %v575 = vrcp.pop %v574
  %v576 = vmul.f32 1.0, %v575
  %v577 = vmul.f32 %v569, 0.0
  %v578 = vmul.f32 %v569, %v570
  %580 = vrot.lane.b32.xlu0 %v578, 64
  %v581 = vpop.permute.xlu0 %580
  %v583 = vadd.f32 %v577, %v581
  %v584 = vtanh.pop %v583
  %v585 = vmul.f32 %v576, %v584
  %s586 = scalar_lea.vmem [#allocation2], 4
  %v587 = vld [vmem:[%s586] sm:$0xf]
  %588 = vmatprep.subr.mxu0 0.0
  %589 = vmatpush1.msra.mxu0 0.0
  %590 = vmatprep.subr.mxu0 0.0
  %591 = vmatpush1.msra.mxu0 0.0
  %592 = vmatprep.subr.mxu0 0.0
  %593 = vmatpush1.msra.mxu0 0.0
  %594 = vmatprep.subr.mxu0 0.0
  %595 = vmatpush1.msra.mxu0 0.0
  %596 = vmatprep.subr.mxu0 0.0
  %597 = vmatpush1.msra.mxu0 0.0
  %598 = vmatprep.subr.mxu0 0.0
  %599 = vmatpush1.msra.mxu0 0.0
  %600 = vmatprep.subr.mxu0 0.0
  %601 = vmatpush1.msra.mxu0 0.0
  %602 = vmatprep.subr.mxu0 0.0
  %603 = vmatpush1.msra.mxu0 0.0
  %604 = vmatprep.subr.mxu0 %v262
  %605 = vmatpush1.msra.mxu0 %v261
  %606 = vmatprep.subr.mxu0 %v260
  %607 = vmatpush1.msra.mxu0 %v259
  %608 = vmatprep.subr.mxu0 %v258
  %609 = vmatpush1.msra.mxu0 %v257
  %610 = vmatprep.subr.mxu0 %v256
  %611 = vmatpush1.msra.mxu0 %v255
  %612 = vmatprep.subr.mxu0 %v254
  %613 = vmatpush1.msra.mxu0 %v253
  %614 = vmatprep.subr.mxu0 %v252
  %615 = vmatpush1.msra.mxu0 %v251
  %616 = vmatprep.subr.mxu0 %v250
  %617 = vmatpush1.msra.mxu0 %v249
  %618 = vmatprep.subr.mxu0 %v248
  %619 = vmatpush1.msra.mxu0 %v247
  %620 = vmatprep.subr.mxu0 0.0
  %621 = vmatpush2.msra.mxu0 0.0
  %622 = vmatprep.subr.mxu0 0.0
  %623 = vmatpush2.msra.mxu0 0.0
  %624 = vmatprep.subr.mxu0 0.0
  %625 = vmatpush2.msra.mxu0 0.0
  %626 = vmatprep.subr.mxu0 0.0
  %627 = vmatpush2.msra.mxu0 0.0
  %628 = vmatprep.subr.mxu0 0.0
  %629 = vmatpush2.msra.mxu0 0.0
  %630 = vmatprep.subr.mxu0 0.0
  %631 = vmatpush2.msra.mxu0 0.0
  %632 = vmatprep.subr.mxu0 0.0
  %633 = vmatpush2.msra.mxu0 0.0
  %634 = vmatprep.subr.mxu0 0.0
  %635 = vmatpush2.msra.mxu0 0.0
  %636 = vmatprep.subr.mxu0 0.0
  %637 = vmatpush2.msra.mxu0 0.0
  %638 = vmatprep.subr.mxu0 0.0
  %639 = vmatpush2.msra.mxu0 0.0
  %640 = vmatprep.subr.mxu0 0.0
  %641 = vmatpush2.msra.mxu0 0.0
  %642 = vmatprep.subr.mxu0 0.0
  %643 = vmatpush2.msra.mxu0 0.0
  %644 = vmatprep.subr.mxu0 0.0
  %645 = vmatpush2.msra.mxu0 0.0
  %646 = vmatprep.subr.mxu0 0.0
  %647 = vmatpush2.msra.mxu0 0.0
  %648 = vmatprep.subr.mxu0 0.0
  %649 = vmatpush2.msra.mxu0 0.0
  %650 = vmatprep.subr.mxu0 0.0
  %651 = vmatpush2.msra.mxu0 0.0
  %652 = vmatprep.mubr.f32.mxu0 0.0
  %653 = vmatmul.mubr.f32.gmra.mxu0 %v489
  %v654 = vpop.f32.mrf.mxu0
  %v655 = vadd.f32 0.0, %v654
  %v656 = vpop.f32.mrf.mxu0
  %v657 = vadd.f32 0.0, %v656
  %658 = vdwg.mxu0
  %v661 = vcombine.low %v655, %v657
  %v663 = vunpack.c.l.s4 1983009808
  %v664 = vunpack.c.0.s8 %v663
  %v665 = vlaneseq
  %v666 = vshrl.u32 %v665, 7
  %v667 = vsub.s32 %v664, %v666
  %v668 = vrot.slane %v661, %v667
  %v670 = vadd.f32 %v587, %v668
  %v671 = vxor.u32 %v670, 2147483648
  %v672 = vmul.f32 %v671, 1.442695
  %v673 = vpow.pop %v672
  %v674 = vadd.f32 %v673, 1.0
  %v675 = vrcp.pop %v674
  %v676 = vmul.f32 1.0, %v675
  %v678 = vrot.slane %v670, 2
  %v680 = vtanh.pop %v678
  %681 = vrot.lane.b32.xlu0 %v670, 64
  %v682 = vpop.permute.xlu0 %681
  %v683 = vrot.slane %v682, 2
  %v685 = vxor.u32 %v683, 2147483648
  %v686 = vmul.f32 %v685, 1.442695
  %v687 = vpow.pop %v686
  %v688 = vadd.f32 %v687, 1.0
  %v689 = vrcp.pop %v688
  %v690 = vmul.f32 1.0, %v689
  %v691 = vmul.f32 %v676, %v376
  %v692 = vmul.f32 %v676, %v680
  %694 = vrot.lane.b32.xlu0 %v692, 64
  %v695 = vpop.permute.xlu0 %694
  %v697 = vadd.f32 %v691, %v695
  %v698 = vtanh.pop %v697
  %700 = vrot.lane.b32.xlu0 %v698, 64
  %v701 = vpop.permute.xlu0 %700
  %v703 = vmul.f32 %v690, %v701
  %705 = vrot.lane.b32.xlu0 %v585, 64
  %v706 = vpop.permute.xlu0 %705
  %v707 = vsel %vm263, %v706, 0
  %709 = vmatprep.subr.mxu0 0.0
  %710 = vmatpush1.msra.mxu0 0.0
  %711 = vmatprep.subr.mxu0 0.0
  %712 = vmatpush1.msra.mxu0 0.0
  %713 = vmatprep.subr.mxu0 0.0
  %714 = vmatpush1.msra.mxu0 0.0
  %715 = vmatprep.subr.mxu0 0.0
  %716 = vmatpush1.msra.mxu0 0.0
  %717 = vmatprep.subr.mxu0 0.0
  %718 = vmatpush1.msra.mxu0 0.0
  %719 = vmatprep.subr.mxu0 0.0
  %720 = vmatpush1.msra.mxu0 0.0
  %721 = vmatprep.subr.mxu0 0.0
  %722 = vmatpush1.msra.mxu0 0.0
  %723 = vmatprep.subr.mxu0 0.0
  %724 = vmatpush1.msra.mxu0 0.0
  %725 = vmatprep.subr.mxu0 %v398
  %726 = vmatpush1.msra.mxu0 %v397
  %727 = vmatprep.subr.mxu0 %v396
  %728 = vmatpush1.msra.mxu0 %v395
  %729 = vmatprep.subr.mxu0 %v394
  %730 = vmatpush1.msra.mxu0 %v393
  %731 = vmatprep.subr.mxu0 %v392
  %732 = vmatpush1.msra.mxu0 %v391
  %733 = vmatprep.subr.mxu0 %v390
  %734 = vmatpush1.msra.mxu0 %v389
  %735 = vmatprep.subr.mxu0 %v388
  %736 = vmatpush1.msra.mxu0 %v387
  %737 = vmatprep.subr.mxu0 %v386
  %738 = vmatpush1.msra.mxu0 %v385
  %739 = vmatprep.subr.mxu0 %v384
  %740 = vmatpush1.msra.mxu0 %v383
  %741 = vmatprep.subr.mxu0 0.0
  %742 = vmatpush2.msra.mxu0 0.0
  %743 = vmatprep.subr.mxu0 0.0
  %744 = vmatpush2.msra.mxu0 0.0
  %745 = vmatprep.subr.mxu0 0.0
  %746 = vmatpush2.msra.mxu0 0.0
  %747 = vmatprep.subr.mxu0 0.0
  %748 = vmatpush2.msra.mxu0 0.0
  %749 = vmatprep.subr.mxu0 0.0
  %750 = vmatpush2.msra.mxu0 0.0
  %751 = vmatprep.subr.mxu0 0.0
  %752 = vmatpush2.msra.mxu0 0.0
  %753 = vmatprep.subr.mxu0 0.0
  %754 = vmatpush2.msra.mxu0 0.0
  %755 = vmatprep.subr.mxu0 0.0
  %756 = vmatpush2.msra.mxu0 0.0
  %757 = vmatprep.subr.mxu0 0.0
  %758 = vmatpush2.msra.mxu0 0.0
  %759 = vmatprep.subr.mxu0 0.0
  %760 = vmatpush2.msra.mxu0 0.0
  %761 = vmatprep.subr.mxu0 0.0
  %762 = vmatpush2.msra.mxu0 0.0
  %763 = vmatprep.subr.mxu0 0.0
  %764 = vmatpush2.msra.mxu0 0.0
  %765 = vmatprep.subr.mxu0 0.0
  %766 = vmatpush2.msra.mxu0 0.0
  %767 = vmatprep.subr.mxu0 0.0
  %768 = vmatpush2.msra.mxu0 0.0
  %769 = vmatprep.subr.mxu0 0.0
  %770 = vmatpush2.msra.mxu0 0.0
  %771 = vmatprep.subr.mxu0 0.0
  %772 = vmatpush2.msra.mxu0 0.0
  %773 = vmatprep.mubr.f32.mxu0 0.0
  %774 = vmatmul.mubr.f32.gmra.mxu0 %v707
  %v775 = vpop.f32.mrf.mxu0
  %v776 = vadd.f32 0.0, %v775
  %v777 = vpop.f32.mrf.mxu0
  %v778 = vadd.f32 0.0, %v777
  %779 = vdwg.mxu0
  %v780 = vadd.f32 %v239, %v776
  %v781 = vadd.f32 %v243, %v778
  %v783 = vsel %vm263, %v703, 0
  %785 = vmatprep.subr.mxu0 0.0
  %786 = vmatpush1.msra.mxu0 0.0
  %787 = vmatprep.subr.mxu0 0.0
  %788 = vmatpush1.msra.mxu0 0.0
  %789 = vmatprep.subr.mxu0 0.0
  %790 = vmatpush1.msra.mxu0 0.0
  %791 = vmatprep.subr.mxu0 0.0
  %792 = vmatpush1.msra.mxu0 0.0
  %793 = vmatprep.subr.mxu0 0.0
  %794 = vmatpush1.msra.mxu0 0.0
  %795 = vmatprep.subr.mxu0 0.0
  %796 = vmatpush1.msra.mxu0 0.0
  %797 = vmatprep.subr.mxu0 0.0
  %798 = vmatpush1.msra.mxu0 0.0
  %799 = vmatprep.subr.mxu0 0.0
  %800 = vmatpush1.msra.mxu0 0.0
  %801 = vmatprep.subr.mxu0 %v487
  %802 = vmatpush1.msra.mxu0 %v486
  %803 = vmatprep.subr.mxu0 %v485
  %804 = vmatpush1.msra.mxu0 %v484
  %805 = vmatprep.subr.mxu0 %v483
  %806 = vmatpush1.msra.mxu0 %v482
  %807 = vmatprep.subr.mxu0 %v481
  %808 = vmatpush1.msra.mxu0 %v480
  %809 = vmatprep.subr.mxu0 %v479
  %810 = vmatpush1.msra.mxu0 %v478
  %811 = vmatprep.subr.mxu0 %v477
  %812 = vmatpush1.msra.mxu0 %v476
  %813 = vmatprep.subr.mxu0 %v475
  %814 = vmatpush1.msra.mxu0 %v474
  %815 = vmatprep.subr.mxu0 %v473
  %816 = vmatpush1.msra.mxu0 %v472
  %817 = vmatprep.subr.mxu0 0.0
  %818 = vmatpush2.msra.mxu0 0.0
  %819 = vmatprep.subr.mxu0 0.0
  %820 = vmatpush2.msra.mxu0 0.0
  %821 = vmatprep.subr.mxu0 0.0
  %822 = vmatpush2.msra.mxu0 0.0
  %823 = vmatprep.subr.mxu0 0.0
  %824 = vmatpush2.msra.mxu0 0.0
  %825 = vmatprep.subr.mxu0 0.0
  %826 = vmatpush2.msra.mxu0 0.0
  %827 = vmatprep.subr.mxu0 0.0
  %828 = vmatpush2.msra.mxu0 0.0
  %829 = vmatprep.subr.mxu0 0.0
  %830 = vmatpush2.msra.mxu0 0.0
  %831 = vmatprep.subr.mxu0 0.0
  %832 = vmatpush2.msra.mxu0 0.0
  %833 = vmatprep.subr.mxu0 0.0
  %834 = vmatpush2.msra.mxu0 0.0
  %835 = vmatprep.subr.mxu0 0.0
  %836 = vmatpush2.msra.mxu0 0.0
  %837 = vmatprep.subr.mxu0 0.0
  %838 = vmatpush2.msra.mxu0 0.0
  %839 = vmatprep.subr.mxu0 0.0
  %840 = vmatpush2.msra.mxu0 0.0
  %841 = vmatprep.subr.mxu0 0.0
  %842 = vmatpush2.msra.mxu0 0.0
  %843 = vmatprep.subr.mxu0 0.0
  %844 = vmatpush2.msra.mxu0 0.0
  %845 = vmatprep.subr.mxu0 0.0
  %846 = vmatpush2.msra.mxu0 0.0
  %847 = vmatprep.subr.mxu0 0.0
  %848 = vmatpush2.msra.mxu0 0.0
  %849 = vmatprep.mubr.f32.mxu0 0.0
  %850 = vmatmul.mubr.f32.gmra.mxu0 %v783
  %v851 = vpop.f32.mrf.mxu0
  %v852 = vadd.f32 0.0, %v851
  %v853 = vpop.f32.mrf.mxu0
  %v854 = vadd.f32 0.0, %v853
  %855 = vdwg.mxu0
  %v856 = vadd.f32 %v780, %v852
  %v857 = vadd.f32 %v781, %v854
  %v858 = vxor.u32 %v856, 2147483648
  %v859 = vmul.f32 %v858, 1.442695
  %v860 = vpow.pop %v859
  %v861 = vadd.f32 %v860, 1.0
  %v862 = vrcp.pop %v861
  %v863 = vmul.f32 1.0, %v862
  %v864 = vtanh.pop %v857
  %v865 = vxor.u32 %v857, 2147483648
  %v866 = vmul.f32 %v865, 1.442695
  %v867 = vpow.pop %v866
  %v868 = vadd.f32 %v867, 1.0
  %v869 = vrcp.pop %v868
  %v870 = vmul.f32 1.0, %v869
  %v871 = vmul.f32 %v863, %v583
  %v872 = vmul.f32 %v863, %v864
  %874 = vrot.lane.b32.xlu0 %v872, 64
  %v875 = vpop.permute.xlu0 %874
  %v877 = vadd.f32 %v871, %v875
  %v878 = vtanh.pop %v877
  %v879 = vmul.f32 %v870, %v878
  %s880 = scalar_lea.vmem [#allocation2], 8
  %v881 = vld [vmem:[%s880] sm:$0xf]
  %882 = vmatprep.subr.mxu0 0.0
  %883 = vmatpush1.msra.mxu0 0.0
  %884 = vmatprep.subr.mxu0 0.0
  %885 = vmatpush1.msra.mxu0 0.0
  %886 = vmatprep.subr.mxu0 0.0
  %887 = vmatpush1.msra.mxu0 0.0
  %888 = vmatprep.subr.mxu0 0.0
  %889 = vmatpush1.msra.mxu0 0.0
  %890 = vmatprep.subr.mxu0 0.0
  %891 = vmatpush1.msra.mxu0 0.0
  %892 = vmatprep.subr.mxu0 0.0
  %893 = vmatpush1.msra.mxu0 0.0
  %894 = vmatprep.subr.mxu0 0.0
  %895 = vmatpush1.msra.mxu0 0.0
  %896 = vmatprep.subr.mxu0 0.0
  %897 = vmatpush1.msra.mxu0 0.0
  %898 = vmatprep.subr.mxu0 %v262
  %899 = vmatpush1.msra.mxu0 %v261
  %900 = vmatprep.subr.mxu0 %v260
  %901 = vmatpush1.msra.mxu0 %v259
  %902 = vmatprep.subr.mxu0 %v258
  %903 = vmatpush1.msra.mxu0 %v257
  %904 = vmatprep.subr.mxu0 %v256
  %905 = vmatpush1.msra.mxu0 %v255
  %906 = vmatprep.subr.mxu0 %v254
  %907 = vmatpush1.msra.mxu0 %v253
  %908 = vmatprep.subr.mxu0 %v252
  %909 = vmatpush1.msra.mxu0 %v251
  %910 = vmatprep.subr.mxu0 %v250
  %911 = vmatpush1.msra.mxu0 %v249
  %912 = vmatprep.subr.mxu0 %v248
  %913 = vmatpush1.msra.mxu0 %v247
  %914 = vmatprep.subr.mxu0 0.0
  %915 = vmatpush2.msra.mxu0 0.0
  %916 = vmatprep.subr.mxu0 0.0
  %917 = vmatpush2.msra.mxu0 0.0
  %918 = vmatprep.subr.mxu0 0.0
  %919 = vmatpush2.msra.mxu0 0.0
  %920 = vmatprep.subr.mxu0 0.0
  %921 = vmatpush2.msra.mxu0 0.0
  %922 = vmatprep.subr.mxu0 0.0
  %923 = vmatpush2.msra.mxu0 0.0
  %924 = vmatprep.subr.mxu0 0.0
  %925 = vmatpush2.msra.mxu0 0.0
  %926 = vmatprep.subr.mxu0 0.0
  %927 = vmatpush2.msra.mxu0 0.0
  %928 = vmatprep.subr.mxu0 0.0
  %929 = vmatpush2.msra.mxu0 0.0
  %930 = vmatprep.subr.mxu0 0.0
  %931 = vmatpush2.msra.mxu0 0.0
  %932 = vmatprep.subr.mxu0 0.0
  %933 = vmatpush2.msra.mxu0 0.0
  %934 = vmatprep.subr.mxu0 0.0
  %935 = vmatpush2.msra.mxu0 0.0
  %936 = vmatprep.subr.mxu0 0.0
  %937 = vmatpush2.msra.mxu0 0.0
  %938 = vmatprep.subr.mxu0 0.0
  %939 = vmatpush2.msra.mxu0 0.0
  %940 = vmatprep.subr.mxu0 0.0
  %941 = vmatpush2.msra.mxu0 0.0
  %942 = vmatprep.subr.mxu0 0.0
  %943 = vmatpush2.msra.mxu0 0.0
  %944 = vmatprep.subr.mxu0 0.0
  %945 = vmatpush2.msra.mxu0 0.0
  %946 = vmatprep.mubr.f32.mxu0 0.0
  %947 = vmatmul.mubr.f32.gmra.mxu0 %v783
  %v948 = vpop.f32.mrf.mxu0
  %v949 = vadd.f32 0.0, %v948
  %v950 = vpop.f32.mrf.mxu0
  %v951 = vadd.f32 0.0, %v950
  %952 = vdwg.mxu0
  %v955 = vcombine.low %v949, %v951
  %v957 = vunpack.c.l.s4 1983009808
  %v958 = vunpack.c.0.s8 %v957
  %v959 = vlaneseq
  %v960 = vshrl.u32 %v959, 7
  %v961 = vsub.s32 %v958, %v960
  %v962 = vrot.slane %v955, %v961
  %v964 = vadd.f32 %v881, %v962
  %v965 = vxor.u32 %v964, 2147483648
  %v966 = vmul.f32 %v965, 1.442695
  %v967 = vpow.pop %v966
  %v968 = vadd.f32 %v967, 1.0
  %v969 = vrcp.pop %v968
  %v970 = vmul.f32 1.0, %v969
  %v972 = vrot.slane %v964, 2
  %v974 = vtanh.pop %v972
  %975 = vrot.lane.b32.xlu0 %v964, 64
  %v976 = vpop.permute.xlu0 %975
  %v977 = vrot.slane %v976, 2
  %v979 = vxor.u32 %v977, 2147483648
  %v980 = vmul.f32 %v979, 1.442695
  %v981 = vpow.pop %v980
  %v982 = vadd.f32 %v981, 1.0
  %v983 = vrcp.pop %v982
  %v984 = vmul.f32 1.0, %v983
  %v985 = vmul.f32 %v970, %v697
  %v986 = vmul.f32 %v970, %v974
  %988 = vrot.lane.b32.xlu0 %v986, 64
  %v989 = vpop.permute.xlu0 %988
  %v991 = vadd.f32 %v985, %v989
  %v992 = vtanh.pop %v991
  %994 = vrot.lane.b32.xlu0 %v992, 64
  %v995 = vpop.permute.xlu0 %994
  %v997 = vmul.f32 %v984, %v995
  %999 = vrot.lane.b32.xlu0 %v879, 64
  %v1000 = vpop.permute.xlu0 %999
  %v1001 = vsel %vm263, %v1000, 0
  %1003 = vmatprep.subr.mxu0 0.0
  %1004 = vmatpush1.msra.mxu0 0.0
  %1005 = vmatprep.subr.mxu0 0.0
  %1006 = vmatpush1.msra.mxu0 0.0
  %1007 = vmatprep.subr.mxu0 0.0
  %1008 = vmatpush1.msra.mxu0 0.0
  %1009 = vmatprep.subr.mxu0 0.0
  %1010 = vmatpush1.msra.mxu0 0.0
  %1011 = vmatprep.subr.mxu0 0.0
  %1012 = vmatpush1.msra.mxu0 0.0
  %1013 = vmatprep.subr.mxu0 0.0
  %1014 = vmatpush1.msra.mxu0 0.0
  %1015 = vmatprep.subr.mxu0 0.0
  %1016 = vmatpush1.msra.mxu0 0.0
  %1017 = vmatprep.subr.mxu0 0.0
  %1018 = vmatpush1.msra.mxu0 0.0
  %1019 = vmatprep.subr.mxu0 %v398
  %1020 = vmatpush1.msra.mxu0 %v397
  %1021 = vmatprep.subr.mxu0 %v396
  %1022 = vmatpush1.msra.mxu0 %v395
  %1023 = vmatprep.subr.mxu0 %v394
  %1024 = vmatpush1.msra.mxu0 %v393
  %1025 = vmatprep.subr.mxu0 %v392
  %1026 = vmatpush1.msra.mxu0 %v391
  %1027 = vmatprep.subr.mxu0 %v390
  %1028 = vmatpush1.msra.mxu0 %v389
  %1029 = vmatprep.subr.mxu0 %v388
  %1030 = vmatpush1.msra.mxu0 %v387
  %1031 = vmatprep.subr.mxu0 %v386
  %1032 = vmatpush1.msra.mxu0 %v385
  %1033 = vmatprep.subr.mxu0 %v384
  %1034 = vmatpush1.msra.mxu0 %v383
  %1035 = vmatprep.subr.mxu0 0.0
  %1036 = vmatpush2.msra.mxu0 0.0
  %1037 = vmatprep.subr.mxu0 0.0
  %1038 = vmatpush2.msra.mxu0 0.0
  %1039 = vmatprep.subr.mxu0 0.0
  %1040 = vmatpush2.msra.mxu0 0.0
  %1041 = vmatprep.subr.mxu0 0.0
  %1042 = vmatpush2.msra.mxu0 0.0
  %1043 = vmatprep.subr.mxu0 0.0
  %1044 = vmatpush2.msra.mxu0 0.0
  %1045 = vmatprep.subr.mxu0 0.0
  %1046 = vmatpush2.msra.mxu0 0.0
  %1047 = vmatprep.subr.mxu0 0.0
  %1048 = vmatpush2.msra.mxu0 0.0
  %1049 = vmatprep.subr.mxu0 0.0
  %1050 = vmatpush2.msra.mxu0 0.0
  %1051 = vmatprep.subr.mxu0 0.0
  %1052 = vmatpush2.msra.mxu0 0.0
  %1053 = vmatprep.subr.mxu0 0.0
  %1054 = vmatpush2.msra.mxu0 0.0
  %1055 = vmatprep.subr.mxu0 0.0
  %1056 = vmatpush2.msra.mxu0 0.0
  %1057 = vmatprep.subr.mxu0 0.0
  %1058 = vmatpush2.msra.mxu0 0.0
  %1059 = vmatprep.subr.mxu0 0.0
  %1060 = vmatpush2.msra.mxu0 0.0
  %1061 = vmatprep.subr.mxu0 0.0
  %1062 = vmatpush2.msra.mxu0 0.0
  %1063 = vmatprep.subr.mxu0 0.0
  %1064 = vmatpush2.msra.mxu0 0.0
  %1065 = vmatprep.subr.mxu0 0.0
  %1066 = vmatpush2.msra.mxu0 0.0
  %1067 = vmatprep.mubr.f32.mxu0 0.0
  %1068 = vmatmul.mubr.f32.gmra.mxu0 %v1001
  %v1069 = vpop.f32.mrf.mxu0
  %v1070 = vadd.f32 0.0, %v1069
  %v1071 = vpop.f32.mrf.mxu0
  %v1072 = vadd.f32 0.0, %v1071
  %1073 = vdwg.mxu0
  %v1074 = vadd.f32 %v239, %v1070
  %v1075 = vadd.f32 %v243, %v1072
  %v1077 = vsel %vm263, %v997, 0
  %1079 = vmatprep.subr.mxu0 0.0
  %1080 = vmatpush1.msra.mxu0 0.0
  %1081 = vmatprep.subr.mxu0 0.0
  %1082 = vmatpush1.msra.mxu0 0.0
  %1083 = vmatprep.subr.mxu0 0.0
  %1084 = vmatpush1.msra.mxu0 0.0
  %1085 = vmatprep.subr.mxu0 0.0
  %1086 = vmatpush1.msra.mxu0 0.0
  %1087 = vmatprep.subr.mxu0 0.0
  %1088 = vmatpush1.msra.mxu0 0.0
  %1089 = vmatprep.subr.mxu0 0.0
  %1090 = vmatpush1.msra.mxu0 0.0
  %1091 = vmatprep.subr.mxu0 0.0
  %1092 = vmatpush1.msra.mxu0 0.0
  %1093 = vmatprep.subr.mxu0 0.0
  %1094 = vmatpush1.msra.mxu0 0.0
  %1095 = vmatprep.subr.mxu0 %v487
  %1096 = vmatpush1.msra.mxu0 %v486
  %1097 = vmatprep.subr.mxu0 %v485
  %1098 = vmatpush1.msra.mxu0 %v484
  %1099 = vmatprep.subr.mxu0 %v483
  %1100 = vmatpush1.msra.mxu0 %v482
  %1101 = vmatprep.subr.mxu0 %v481
  %1102 = vmatpush1.msra.mxu0 %v480
  %1103 = vmatprep.subr.mxu0 %v479
  %1104 = vmatpush1.msra.mxu0 %v478
  %1105 = vmatprep.subr.mxu0 %v477
  %1106 = vmatpush1.msra.mxu0 %v476
  %1107 = vmatprep.subr.mxu0 %v475
  %1108 = vmatpush1.msra.mxu0 %v474
  %1109 = vmatprep.subr.mxu0 %v473
  %1110 = vmatpush1.msra.mxu0 %v472
  %1111 = vmatprep.subr.mxu0 0.0
  %1112 = vmatpush2.msra.mxu0 0.0
  %1113 = vmatprep.subr.mxu0 0.0
  %1114 = vmatpush2.msra.mxu0 0.0
  %1115 = vmatprep.subr.mxu0 0.0
  %1116 = vmatpush2.msra.mxu0 0.0
  %1117 = vmatprep.subr.mxu0 0.0
  %1118 = vmatpush2.msra.mxu0 0.0
  %1119 = vmatprep.subr.mxu0 0.0
  %1120 = vmatpush2.msra.mxu0 0.0
  %1121 = vmatprep.subr.mxu0 0.0
  %1122 = vmatpush2.msra.mxu0 0.0
  %1123 = vmatprep.subr.mxu0 0.0
  %1124 = vmatpush2.msra.mxu0 0.0
  %1125 = vmatprep.subr.mxu0 0.0
  %1126 = vmatpush2.msra.mxu0 0.0
  %1127 = vmatprep.subr.mxu0 0.0
  %1128 = vmatpush2.msra.mxu0 0.0
  %1129 = vmatprep.subr.mxu0 0.0
  %1130 = vmatpush2.msra.mxu0 0.0
  %1131 = vmatprep.subr.mxu0 0.0
  %1132 = vmatpush2.msra.mxu0 0.0
  %1133 = vmatprep.subr.mxu0 0.0
  %1134 = vmatpush2.msra.mxu0 0.0
  %1135 = vmatprep.subr.mxu0 0.0
  %1136 = vmatpush2.msra.mxu0 0.0
  %1137 = vmatprep.subr.mxu0 0.0
  %1138 = vmatpush2.msra.mxu0 0.0
  %1139 = vmatprep.subr.mxu0 0.0
  %1140 = vmatpush2.msra.mxu0 0.0
  %1141 = vmatprep.subr.mxu0 0.0
  %1142 = vmatpush2.msra.mxu0 0.0
  %1143 = vmatprep.mubr.f32.mxu0 0.0
  %1144 = vmatmul.mubr.f32.gmra.mxu0 %v1077
  %v1145 = vpop.f32.mrf.mxu0
  %v1146 = vadd.f32 0.0, %v1145
  %v1147 = vpop.f32.mrf.mxu0
  %v1148 = vadd.f32 0.0, %v1147
  %1149 = vdwg.mxu0
  %v1150 = vadd.f32 %v1074, %v1146
  %v1151 = vadd.f32 %v1075, %v1148
  %v1152 = vxor.u32 %v1150, 2147483648
  %v1153 = vmul.f32 %v1152, 1.442695
  %v1154 = vpow.pop %v1153
  %v1155 = vadd.f32 %v1154, 1.0
  %v1156 = vrcp.pop %v1155
  %v1157 = vmul.f32 1.0, %v1156
  %v1158 = vtanh.pop %v1151
  %v1159 = vxor.u32 %v1151, 2147483648
  %v1160 = vmul.f32 %v1159, 1.442695
  %v1161 = vpow.pop %v1160
  %v1162 = vadd.f32 %v1161, 1.0
  %v1163 = vrcp.pop %v1162
  %v1164 = vmul.f32 1.0, %v1163
  %v1165 = vmul.f32 %v1157, %v877
  %v1166 = vmul.f32 %v1157, %v1158
  %1168 = vrot.lane.b32.xlu0 %v1166, 64
  %v1169 = vpop.permute.xlu0 %1168
  %v1171 = vadd.f32 %v1165, %v1169
  %v1172 = vtanh.pop %v1171
  %v1173 = vmul.f32 %v1164, %v1172
  %s1174 = scalar_lea.vmem [#allocation2], 12
  %v1175 = vld [vmem:[%s1174] sm:$0xf]
  %1176 = vmatprep.subr.mxu0 0.0
  %1177 = vmatpush1.msra.mxu0 0.0
  %1178 = vmatprep.subr.mxu0 0.0
  %1179 = vmatpush1.msra.mxu0 0.0
  %1180 = vmatprep.subr.mxu0 0.0
  %1181 = vmatpush1.msra.mxu0 0.0
  %1182 = vmatprep.subr.mxu0 0.0
  %1183 = vmatpush1.msra.mxu0 0.0
  %1184 = vmatprep.subr.mxu0 0.0
  %1185 = vmatpush1.msra.mxu0 0.0
  %1186 = vmatprep.subr.mxu0 0.0
  %1187 = vmatpush1.msra.mxu0 0.0
  %1188 = vmatprep.subr.mxu0 0.0
  %1189 = vmatpush1.msra.mxu0 0.0
  %1190 = vmatprep.subr.mxu0 0.0
  %1191 = vmatpush1.msra.mxu0 0.0
  %1192 = vmatprep.subr.mxu0 %v262
  %1193 = vmatpush1.msra.mxu0 %v261
  %1194 = vmatprep.subr.mxu0 %v260
  %1195 = vmatpush1.msra.mxu0 %v259
  %1196 = vmatprep.subr.mxu0 %v258
  %1197 = vmatpush1.msra.mxu0 %v257
  %1198 = vmatprep.subr.mxu0 %v256
  %1199 = vmatpush1.msra.mxu0 %v255
  %1200 = vmatprep.subr.mxu0 %v254
  %1201 = vmatpush1.msra.mxu0 %v253
  %1202 = vmatprep.subr.mxu0 %v252
  %1203 = vmatpush1.msra.mxu0 %v251
  %1204 = vmatprep.subr.mxu0 %v250
  %1205 = vmatpush1.msra.mxu0 %v249
  %1206 = vmatprep.subr.mxu0 %v248
  %1207 = vmatpush1.msra.mxu0 %v247
  %1208 = vmatprep.subr.mxu0 0.0
  %1209 = vmatpush2.msra.mxu0 0.0
  %1210 = vmatprep.subr.mxu0 0.0
  %1211 = vmatpush2.msra.mxu0 0.0
  %1212 = vmatprep.subr.mxu0 0.0
  %1213 = vmatpush2.msra.mxu0 0.0
  %1214 = vmatprep.subr.mxu0 0.0
  %1215 = vmatpush2.msra.mxu0 0.0
  %1216 = vmatprep.subr.mxu0 0.0
  %1217 = vmatpush2.msra.mxu0 0.0
  %1218 = vmatprep.subr.mxu0 0.0
  %1219 = vmatpush2.msra.mxu0 0.0
  %1220 = vmatprep.subr.mxu0 0.0
  %1221 = vmatpush2.msra.mxu0 0.0
  %1222 = vmatprep.subr.mxu0 0.0
  %1223 = vmatpush2.msra.mxu0 0.0
  %1224 = vmatprep.subr.mxu0 0.0
  %1225 = vmatpush2.msra.mxu0 0.0
  %1226 = vmatprep.subr.mxu0 0.0
  %1227 = vmatpush2.msra.mxu0 0.0
  %1228 = vmatprep.subr.mxu0 0.0
  %1229 = vmatpush2.msra.mxu0 0.0
  %1230 = vmatprep.subr.mxu0 0.0
  %1231 = vmatpush2.msra.mxu0 0.0
  %1232 = vmatprep.subr.mxu0 0.0
  %1233 = vmatpush2.msra.mxu0 0.0
  %1234 = vmatprep.subr.mxu0 0.0
  %1235 = vmatpush2.msra.mxu0 0.0
  %1236 = vmatprep.subr.mxu0 0.0
  %1237 = vmatpush2.msra.mxu0 0.0
  %1238 = vmatprep.subr.mxu0 0.0
  %1239 = vmatpush2.msra.mxu0 0.0
  %1240 = vmatprep.mubr.f32.mxu0 0.0
  %1241 = vmatmul.mubr.f32.gmra.mxu0 %v1077
  %v1242 = vpop.f32.mrf.mxu0
  %v1243 = vadd.f32 0.0, %v1242
  %v1244 = vpop.f32.mrf.mxu0
  %v1245 = vadd.f32 0.0, %v1244
  %1246 = vdwg.mxu0
  %v1249 = vcombine.low %v1243, %v1245
  %v1251 = vunpack.c.l.s4 1983009808
  %v1252 = vunpack.c.0.s8 %v1251
  %v1253 = vlaneseq
  %v1254 = vshrl.u32 %v1253, 7
  %v1255 = vsub.s32 %v1252, %v1254
  %v1256 = vrot.slane %v1249, %v1255
  %v1258 = vadd.f32 %v1175, %v1256
  %v1259 = vxor.u32 %v1258, 2147483648
  %v1260 = vmul.f32 %v1259, 1.442695
  %v1261 = vpow.pop %v1260
  %v1262 = vadd.f32 %v1261, 1.0
  %v1263 = vrcp.pop %v1262
  %v1264 = vmul.f32 1.0, %v1263
  %v1266 = vrot.slane %v1258, 2
  %v1268 = vtanh.pop %v1266
  %1269 = vrot.lane.b32.xlu0 %v1258, 64
  %v1270 = vpop.permute.xlu0 %1269
  %v1271 = vrot.slane %v1270, 2
  %v1273 = vxor.u32 %v1271, 2147483648
  %v1274 = vmul.f32 %v1273, 1.442695
  %v1275 = vpow.pop %v1274
  %v1276 = vadd.f32 %v1275, 1.0
  %v1277 = vrcp.pop %v1276
  %v1278 = vmul.f32 1.0, %v1277
  %v1279 = vmul.f32 %v1264, %v991
  %v1280 = vmul.f32 %v1264, %v1268
  %1282 = vrot.lane.b32.xlu0 %v1280, 64
  %v1283 = vpop.permute.xlu0 %1282
  %v1285 = vadd.f32 %v1279, %v1283
  %v1286 = vtanh.pop %v1285
  %1288 = vrot.lane.b32.xlu0 %v1286, 64
  %v1289 = vpop.permute.xlu0 %1288
  %v1291 = vmul.f32 %v1278, %v1289
  %1293 = vrot.lane.b32.xlu0 %v1173, 64
  %v1294 = vpop.permute.xlu0 %1293
  %v1295 = vsel %vm263, %v1294, 0
  %1297 = vmatprep.subr.mxu0 0.0
  %1298 = vmatpush1.msra.mxu0 0.0
  %1299 = vmatprep.subr.mxu0 0.0
  %1300 = vmatpush1.msra.mxu0 0.0
  %1301 = vmatprep.subr.mxu0 0.0
  %1302 = vmatpush1.msra.mxu0 0.0
  %1303 = vmatprep.subr.mxu0 0.0
  %1304 = vmatpush1.msra.mxu0 0.0
  %1305 = vmatprep.subr.mxu0 0.0
  %1306 = vmatpush1.msra.mxu0 0.0
  %1307 = vmatprep.subr.mxu0 0.0
  %1308 = vmatpush1.msra.mxu0 0.0
  %1309 = vmatprep.subr.mxu0 0.0
  %1310 = vmatpush1.msra.mxu0 0.0
  %1311 = vmatprep.subr.mxu0 0.0
  %1312 = vmatpush1.msra.mxu0 0.0
  %1313 = vmatprep.subr.mxu0 %v398
  %1314 = vmatpush1.msra.mxu0 %v397
  %1315 = vmatprep.subr.mxu0 %v396
  %1316 = vmatpush1.msra.mxu0 %v395
  %1317 = vmatprep.subr.mxu0 %v394
  %1318 = vmatpush1.msra.mxu0 %v393
  %1319 = vmatprep.subr.mxu0 %v392
  %1320 = vmatpush1.msra.mxu0 %v391
  %1321 = vmatprep.subr.mxu0 %v390
  %1322 = vmatpush1.msra.mxu0 %v389
  %1323 = vmatprep.subr.mxu0 %v388
  %1324 = vmatpush1.msra.mxu0 %v387
  %1325 = vmatprep.subr.mxu0 %v386
  %1326 = vmatpush1.msra.mxu0 %v385
  %1327 = vmatprep.subr.mxu0 %v384
  %1328 = vmatpush1.msra.mxu0 %v383
  %1329 = vmatprep.subr.mxu0 0.0
  %1330 = vmatpush2.msra.mxu0 0.0
  %1331 = vmatprep.subr.mxu0 0.0
  %1332 = vmatpush2.msra.mxu0 0.0
  %1333 = vmatprep.subr.mxu0 0.0
  %1334 = vmatpush2.msra.mxu0 0.0
  %1335 = vmatprep.subr.mxu0 0.0
  %1336 = vmatpush2.msra.mxu0 0.0
  %1337 = vmatprep.subr.mxu0 0.0
  %1338 = vmatpush2.msra.mxu0 0.0
  %1339 = vmatprep.subr.mxu0 0.0
  %1340 = vmatpush2.msra.mxu0 0.0
  %1341 = vmatprep.subr.mxu0 0.0
  %1342 = vmatpush2.msra.mxu0 0.0
  %1343 = vmatprep.subr.mxu0 0.0
  %1344 = vmatpush2.msra.mxu0 0.0
  %1345 = vmatprep.subr.mxu0 0.0
  %1346 = vmatpush2.msra.mxu0 0.0
  %1347 = vmatprep.subr.mxu0 0.0
  %1348 = vmatpush2.msra.mxu0 0.0
  %1349 = vmatprep.subr.mxu0 0.0
  %1350 = vmatpush2.msra.mxu0 0.0
  %1351 = vmatprep.subr.mxu0 0.0
  %1352 = vmatpush2.msra.mxu0 0.0
  %1353 = vmatprep.subr.mxu0 0.0
  %1354 = vmatpush2.msra.mxu0 0.0
  %1355 = vmatprep.subr.mxu0 0.0
  %1356 = vmatpush2.msra.mxu0 0.0
  %1357 = vmatprep.subr.mxu0 0.0
  %1358 = vmatpush2.msra.mxu0 0.0
  %1359 = vmatprep.subr.mxu0 0.0
  %1360 = vmatpush2.msra.mxu0 0.0
  %1361 = vmatprep.mubr.f32.mxu0 0.0
  %1362 = vmatmul.mubr.f32.gmra.mxu0 %v1295
  %v1363 = vpop.f32.mrf.mxu0
  %v1364 = vadd.f32 0.0, %v1363
  %v1365 = vpop.f32.mrf.mxu0
  %v1366 = vadd.f32 0.0, %v1365
  %1367 = vdwg.mxu0
  %v1368 = vadd.f32 %v239, %v1364
  %v1369 = vadd.f32 %v243, %v1366
  %v1371 = vsel %vm263, %v1291, 0
  %1373 = vmatprep.subr.mxu0 0.0
  %1374 = vmatpush1.msra.mxu0 0.0
  %1375 = vmatprep.subr.mxu0 0.0
  %1376 = vmatpush1.msra.mxu0 0.0
  %1377 = vmatprep.subr.mxu0 0.0
  %1378 = vmatpush1.msra.mxu0 0.0
  %1379 = vmatprep.subr.mxu0 0.0
  %1380 = vmatpush1.msra.mxu0 0.0
  %1381 = vmatprep.subr.mxu0 0.0
  %1382 = vmatpush1.msra.mxu0 0.0
  %1383 = vmatprep.subr.mxu0 0.0
  %1384 = vmatpush1.msra.mxu0 0.0
  %1385 = vmatprep.subr.mxu0 0.0
  %1386 = vmatpush1.msra.mxu0 0.0
  %1387 = vmatprep.subr.mxu0 0.0
  %1388 = vmatpush1.msra.mxu0 0.0
  %1389 = vmatprep.subr.mxu0 %v487
  %1390 = vmatpush1.msra.mxu0 %v486
  %1391 = vmatprep.subr.mxu0 %v485
  %1392 = vmatpush1.msra.mxu0 %v484
  %1393 = vmatprep.subr.mxu0 %v483
  %1394 = vmatpush1.msra.mxu0 %v482
  %1395 = vmatprep.subr.mxu0 %v481
  %1396 = vmatpush1.msra.mxu0 %v480
  %1397 = vmatprep.subr.mxu0 %v479
  %1398 = vmatpush1.msra.mxu0 %v478
  %1399 = vmatprep.subr.mxu0 %v477
  %1400 = vmatpush1.msra.mxu0 %v476
  %1401 = vmatprep.subr.mxu0 %v475
  %1402 = vmatpush1.msra.mxu0 %v474
  %1403 = vmatprep.subr.mxu0 %v473
  %1404 = vmatpush1.msra.mxu0 %v472
  %1405 = vmatprep.subr.mxu0 0.0
  %1406 = vmatpush2.msra.mxu0 0.0
  %1407 = vmatprep.subr.mxu0 0.0
  %1408 = vmatpush2.msra.mxu0 0.0
  %1409 = vmatprep.subr.mxu0 0.0
  %1410 = vmatpush2.msra.mxu0 0.0
  %1411 = vmatprep.subr.mxu0 0.0
  %1412 = vmatpush2.msra.mxu0 0.0
  %1413 = vmatprep.subr.mxu0 0.0
  %1414 = vmatpush2.msra.mxu0 0.0
  %1415 = vmatprep.subr.mxu0 0.0
  %1416 = vmatpush2.msra.mxu0 0.0
  %1417 = vmatprep.subr.mxu0 0.0
  %1418 = vmatpush2.msra.mxu0 0.0
  %1419 = vmatprep.subr.mxu0 0.0
  %1420 = vmatpush2.msra.mxu0 0.0
  %1421 = vmatprep.subr.mxu0 0.0
  %1422 = vmatpush2.msra.mxu0 0.0
  %1423 = vmatprep.subr.mxu0 0.0
  %1424 = vmatpush2.msra.mxu0 0.0
  %1425 = vmatprep.subr.mxu0 0.0
  %1426 = vmatpush2.msra.mxu0 0.0
  %1427 = vmatprep.subr.mxu0 0.0
  %1428 = vmatpush2.msra.mxu0 0.0
  %1429 = vmatprep.subr.mxu0 0.0
  %1430 = vmatpush2.msra.mxu0 0.0
  %1431 = vmatprep.subr.mxu0 0.0
  %1432 = vmatpush2.msra.mxu0 0.0
  %1433 = vmatprep.subr.mxu0 0.0
  %1434 = vmatpush2.msra.mxu0 0.0
  %1435 = vmatprep.subr.mxu0 0.0
  %1436 = vmatpush2.msra.mxu0 0.0
  %1437 = vmatprep.mubr.f32.mxu0 0.0
  %1438 = vmatmul.mubr.f32.gmra.mxu0 %v1371
  %v1439 = vpop.f32.mrf.mxu0
  %v1440 = vadd.f32 0.0, %v1439
  %v1441 = vpop.f32.mrf.mxu0
  %v1442 = vadd.f32 0.0, %v1441
  %1443 = vdwg.mxu0
  %v1444 = vadd.f32 %v1368, %v1440
  %v1445 = vadd.f32 %v1369, %v1442
  %v1446 = vxor.u32 %v1444, 2147483648
  %v1447 = vmul.f32 %v1446, 1.442695
  %v1448 = vpow.pop %v1447
  %v1449 = vadd.f32 %v1448, 1.0
  %v1450 = vrcp.pop %v1449
  %v1451 = vmul.f32 1.0, %v1450
  %v1452 = vtanh.pop %v1445
  %v1453 = vxor.u32 %v1445, 2147483648
  %v1454 = vmul.f32 %v1453, 1.442695
  %v1455 = vpow.pop %v1454
  %v1456 = vadd.f32 %v1455, 1.0
  %v1457 = vrcp.pop %v1456
  %v1458 = vmul.f32 1.0, %v1457
  %v1459 = vmul.f32 %v1451, %v1171
  %v1460 = vmul.f32 %v1451, %v1452
  %1462 = vrot.lane.b32.xlu0 %v1460, 64
  %v1463 = vpop.permute.xlu0 %1462
  %v1465 = vadd.f32 %v1459, %v1463
  %v1466 = vtanh.pop %v1465
  %v1467 = vmul.f32 %v1458, %v1466
  %s1468 = scalar_lea.vmem [#allocation2], 16
  %v1469 = vld [vmem:[%s1468] sm:$0xf]
  %1470 = vmatprep.subr.mxu0 0.0
  %1471 = vmatpush1.msra.mxu0 0.0
  %1472 = vmatprep.subr.mxu0 0.0
  %1473 = vmatpush1.msra.mxu0 0.0
  %1474 = vmatprep.subr.mxu0 0.0
  %1475 = vmatpush1.msra.mxu0 0.0
  %1476 = vmatprep.subr.mxu0 0.0
  %1477 = vmatpush1.msra.mxu0 0.0
  %1478 = vmatprep.subr.mxu0 0.0
  %1479 = vmatpush1.msra.mxu0 0.0
  %1480 = vmatprep.subr.mxu0 0.0
  %1481 = vmatpush1.msra.mxu0 0.0
  %1482 = vmatprep.subr.mxu0 0.0
  %1483 = vmatpush1.msra.mxu0 0.0
  %1484 = vmatprep.subr.mxu0 0.0
  %1485 = vmatpush1.msra.mxu0 0.0
  %1486 = vmatprep.subr.mxu0 %v262
  %1487 = vmatpush1.msra.mxu0 %v261
  %1488 = vmatprep.subr.mxu0 %v260
  %1489 = vmatpush1.msra.mxu0 %v259
  %1490 = vmatprep.subr.mxu0 %v258
  %1491 = vmatpush1.msra.mxu0 %v257
  %1492 = vmatprep.subr.mxu0 %v256
  %1493 = vmatpush1.msra.mxu0 %v255
  %1494 = vmatprep.subr.mxu0 %v254
  %1495 = vmatpush1.msra.mxu0 %v253
  %1496 = vmatprep.subr.mxu0 %v252
  %1497 = vmatpush1.msra.mxu0 %v251
  %1498 = vmatprep.subr.mxu0 %v250
  %1499 = vmatpush1.msra.mxu0 %v249
  %1500 = vmatprep.subr.mxu0 %v248
  %1501 = vmatpush1.msra.mxu0 %v247
  %1502 = vmatprep.subr.mxu0 0.0
  %1503 = vmatpush2.msra.mxu0 0.0
  %1504 = vmatprep.subr.mxu0 0.0
  %1505 = vmatpush2.msra.mxu0 0.0
  %1506 = vmatprep.subr.mxu0 0.0
  %1507 = vmatpush2.msra.mxu0 0.0
  %1508 = vmatprep.subr.mxu0 0.0
  %1509 = vmatpush2.msra.mxu0 0.0
  %1510 = vmatprep.subr.mxu0 0.0
  %1511 = vmatpush2.msra.mxu0 0.0
  %1512 = vmatprep.subr.mxu0 0.0
  %1513 = vmatpush2.msra.mxu0 0.0
  %1514 = vmatprep.subr.mxu0 0.0
  %1515 = vmatpush2.msra.mxu0 0.0
  %1516 = vmatprep.subr.mxu0 0.0
  %1517 = vmatpush2.msra.mxu0 0.0
  %1518 = vmatprep.subr.mxu0 0.0
  %1519 = vmatpush2.msra.mxu0 0.0
  %1520 = vmatprep.subr.mxu0 0.0
  %1521 = vmatpush2.msra.mxu0 0.0
  %1522 = vmatprep.subr.mxu0 0.0
  %1523 = vmatpush2.msra.mxu0 0.0
  %1524 = vmatprep.subr.mxu0 0.0
  %1525 = vmatpush2.msra.mxu0 0.0
  %1526 = vmatprep.subr.mxu0 0.0
  %1527 = vmatpush2.msra.mxu0 0.0
  %1528 = vmatprep.subr.mxu0 0.0
  %1529 = vmatpush2.msra.mxu0 0.0
  %1530 = vmatprep.subr.mxu0 0.0
  %1531 = vmatpush2.msra.mxu0 0.0
  %1532 = vmatprep.subr.mxu0 0.0
  %1533 = vmatpush2.msra.mxu0 0.0
  %1534 = vmatprep.mubr.f32.mxu0 0.0
  %1535 = vmatmul.mubr.f32.gmra.mxu0 %v1371
  %v1536 = vpop.f32.mrf.mxu0
  %v1537 = vadd.f32 0.0, %v1536
  %v1538 = vpop.f32.mrf.mxu0
  %v1539 = vadd.f32 0.0, %v1538
  %1540 = vdwg.mxu0
  %v1543 = vcombine.low %v1537, %v1539
  %v1545 = vunpack.c.l.s4 1983009808
  %v1546 = vunpack.c.0.s8 %v1545
  %v1547 = vlaneseq
  %v1548 = vshrl.u32 %v1547, 7
  %v1549 = vsub.s32 %v1546, %v1548
  %v1550 = vrot.slane %v1543, %v1549
  %v1552 = vadd.f32 %v1469, %v1550
  %v1553 = vxor.u32 %v1552, 2147483648
  %v1554 = vmul.f32 %v1553, 1.442695
  %v1555 = vpow.pop %v1554
  %v1556 = vadd.f32 %v1555, 1.0
  %v1557 = vrcp.pop %v1556
  %v1558 = vmul.f32 1.0, %v1557
  %v1560 = vrot.slane %v1552, 2
  %v1562 = vtanh.pop %v1560
  %1563 = vrot.lane.b32.xlu0 %v1552, 64
  %v1564 = vpop.permute.xlu0 %1563
  %v1565 = vrot.slane %v1564, 2
  %v1567 = vxor.u32 %v1565, 2147483648
  %v1568 = vmul.f32 %v1567, 1.442695
  %v1569 = vpow.pop %v1568
  %v1570 = vadd.f32 %v1569, 1.0
  %v1571 = vrcp.pop %v1570
  %v1572 = vmul.f32 1.0, %v1571
  %v1573 = vmul.f32 %v1558, %v1285
  %v1574 = vmul.f32 %v1558, %v1562
  %1576 = vrot.lane.b32.xlu0 %v1574, 64
  %v1577 = vpop.permute.xlu0 %1576
  %v1579 = vadd.f32 %v1573, %v1577
  %v1580 = vtanh.pop %v1579
  %1582 = vrot.lane.b32.xlu0 %v1580, 64
  %v1583 = vpop.permute.xlu0 %1582
  %v1585 = vmul.f32 %v1572, %v1583
  %1587 = vrot.lane.b32.xlu0 %v1467, 64
  %v1588 = vpop.permute.xlu0 %1587
  %v1589 = vsel %vm263, %v1588, 0
  %1591 = vmatprep.subr.mxu0 0.0
  %1592 = vmatpush1.msra.mxu0 0.0
  %1593 = vmatprep.subr.mxu0 0.0
  %1594 = vmatpush1.msra.mxu0 0.0
  %1595 = vmatprep.subr.mxu0 0.0
  %1596 = vmatpush1.msra.mxu0 0.0
  %1597 = vmatprep.subr.mxu0 0.0
  %1598 = vmatpush1.msra.mxu0 0.0
  %1599 = vmatprep.subr.mxu0 0.0
  %1600 = vmatpush1.msra.mxu0 0.0
  %1601 = vmatprep.subr.mxu0 0.0
  %1602 = vmatpush1.msra.mxu0 0.0
  %1603 = vmatprep.subr.mxu0 0.0
  %1604 = vmatpush1.msra.mxu0 0.0
  %1605 = vmatprep.subr.mxu0 0.0
  %1606 = vmatpush1.msra.mxu0 0.0
  %1607 = vmatprep.subr.mxu0 %v398
  %1608 = vmatpush1.msra.mxu0 %v397
  %1609 = vmatprep.subr.mxu0 %v396
  %1610 = vmatpush1.msra.mxu0 %v395
  %1611 = vmatprep.subr.mxu0 %v394
  %1612 = vmatpush1.msra.mxu0 %v393
  %1613 = vmatprep.subr.mxu0 %v392
  %1614 = vmatpush1.msra.mxu0 %v391
  %1615 = vmatprep.subr.mxu0 %v390
  %1616 = vmatpush1.msra.mxu0 %v389
  %1617 = vmatprep.subr.mxu0 %v388
  %1618 = vmatpush1.msra.mxu0 %v387
  %1619 = vmatprep.subr.mxu0 %v386
  %1620 = vmatpush1.msra.mxu0 %v385
  %1621 = vmatprep.subr.mxu0 %v384
  %1622 = vmatpush1.msra.mxu0 %v383
  %1623 = vmatprep.subr.mxu0 0.0
  %1624 = vmatpush2.msra.mxu0 0.0
  %1625 = vmatprep.subr.mxu0 0.0
  %1626 = vmatpush2.msra.mxu0 0.0
  %1627 = vmatprep.subr.mxu0 0.0
  %1628 = vmatpush2.msra.mxu0 0.0
  %1629 = vmatprep.subr.mxu0 0.0
  %1630 = vmatpush2.msra.mxu0 0.0
  %1631 = vmatprep.subr.mxu0 0.0
  %1632 = vmatpush2.msra.mxu0 0.0
  %1633 = vmatprep.subr.mxu0 0.0
  %1634 = vmatpush2.msra.mxu0 0.0
  %1635 = vmatprep.subr.mxu0 0.0
  %1636 = vmatpush2.msra.mxu0 0.0
  %1637 = vmatprep.subr.mxu0 0.0
  %1638 = vmatpush2.msra.mxu0 0.0
  %1639 = vmatprep.subr.mxu0 0.0
  %1640 = vmatpush2.msra.mxu0 0.0
  %1641 = vmatprep.subr.mxu0 0.0
  %1642 = vmatpush2.msra.mxu0 0.0
  %1643 = vmatprep.subr.mxu0 0.0
  %1644 = vmatpush2.msra.mxu0 0.0
  %1645 = vmatprep.subr.mxu0 0.0
  %1646 = vmatpush2.msra.mxu0 0.0
  %1647 = vmatprep.subr.mxu0 0.0
  %1648 = vmatpush2.msra.mxu0 0.0
  %1649 = vmatprep.subr.mxu0 0.0
  %1650 = vmatpush2.msra.mxu0 0.0
  %1651 = vmatprep.subr.mxu0 0.0
  %1652 = vmatpush2.msra.mxu0 0.0
  %1653 = vmatprep.subr.mxu0 0.0
  %1654 = vmatpush2.msra.mxu0 0.0
  %1655 = vmatprep.mubr.f32.mxu0 0.0
  %1656 = vmatmul.mubr.f32.gmra.mxu0 %v1589
  %v1657 = vpop.f32.mrf.mxu0
  %v1658 = vadd.f32 0.0, %v1657
  %v1659 = vpop.f32.mrf.mxu0
  %v1660 = vadd.f32 0.0, %v1659
  %1661 = vdwg.mxu0
  %v1662 = vadd.f32 %v239, %v1658
  %v1663 = vadd.f32 %v243, %v1660
  %v1665 = vsel %vm263, %v1585, 0
  %1667 = vmatprep.subr.mxu0 0.0
  %1668 = vmatpush1.msra.mxu0 0.0
  %1669 = vmatprep.subr.mxu0 0.0
  %1670 = vmatpush1.msra.mxu0 0.0
  %1671 = vmatprep.subr.mxu0 0.0
  %1672 = vmatpush1.msra.mxu0 0.0
  %1673 = vmatprep.subr.mxu0 0.0
  %1674 = vmatpush1.msra.mxu0 0.0
  %1675 = vmatprep.subr.mxu0 0.0
  %1676 = vmatpush1.msra.mxu0 0.0
  %1677 = vmatprep.subr.mxu0 0.0
  %1678 = vmatpush1.msra.mxu0 0.0
  %1679 = vmatprep.subr.mxu0 0.0
  %1680 = vmatpush1.msra.mxu0 0.0
  %1681 = vmatprep.subr.mxu0 0.0
  %1682 = vmatpush1.msra.mxu0 0.0
  %1683 = vmatprep.subr.mxu0 %v487
  %1684 = vmatpush1.msra.mxu0 %v486
  %1685 = vmatprep.subr.mxu0 %v485
  %1686 = vmatpush1.msra.mxu0 %v484
  %1687 = vmatprep.subr.mxu0 %v483
  %1688 = vmatpush1.msra.mxu0 %v482
  %1689 = vmatprep.subr.mxu0 %v481
  %1690 = vmatpush1.msra.mxu0 %v480
  %1691 = vmatprep.subr.mxu0 %v479
  %1692 = vmatpush1.msra.mxu0 %v478
  %1693 = vmatprep.subr.mxu0 %v477
  %1694 = vmatpush1.msra.mxu0 %v476
  %1695 = vmatprep.subr.mxu0 %v475
  %1696 = vmatpush1.msra.mxu0 %v474
  %1697 = vmatprep.subr.mxu0 %v473
  %1698 = vmatpush1.msra.mxu0 %v472
  %1699 = vmatprep.subr.mxu0 0.0
  %1700 = vmatpush2.msra.mxu0 0.0
  %1701 = vmatprep.subr.mxu0 0.0
  %1702 = vmatpush2.msra.mxu0 0.0
  %1703 = vmatprep.subr.mxu0 0.0
  %1704 = vmatpush2.msra.mxu0 0.0
  %1705 = vmatprep.subr.mxu0 0.0
  %1706 = vmatpush2.msra.mxu0 0.0
  %1707 = vmatprep.subr.mxu0 0.0
  %1708 = vmatpush2.msra.mxu0 0.0
  %1709 = vmatprep.subr.mxu0 0.0
  %1710 = vmatpush2.msra.mxu0 0.0
  %1711 = vmatprep.subr.mxu0 0.0
  %1712 = vmatpush2.msra.mxu0 0.0
  %1713 = vmatprep.subr.mxu0 0.0
  %1714 = vmatpush2.msra.mxu0 0.0
  %1715 = vmatprep.subr.mxu0 0.0
  %1716 = vmatpush2.msra.mxu0 0.0
  %1717 = vmatprep.subr.mxu0 0.0
  %1718 = vmatpush2.msra.mxu0 0.0
  %1719 = vmatprep.subr.mxu0 0.0
  %1720 = vmatpush2.msra.mxu0 0.0
  %1721 = vmatprep.subr.mxu0 0.0
  %1722 = vmatpush2.msra.mxu0 0.0
  %1723 = vmatprep.subr.mxu0 0.0
  %1724 = vmatpush2.msra.mxu0 0.0
  %1725 = vmatprep.subr.mxu0 0.0
  %1726 = vmatpush2.msra.mxu0 0.0
  %1727 = vmatprep.subr.mxu0 0.0
  %1728 = vmatpush2.msra.mxu0 0.0
  %1729 = vmatprep.subr.mxu0 0.0
  %1730 = vmatpush2.msra.mxu0 0.0
  %1731 = vmatprep.mubr.f32.mxu0 0.0
  %1732 = vmatmul.mubr.f32.gmra.mxu0 %v1665
  %v1733 = vpop.f32.mrf.mxu0
  %v1734 = vadd.f32 0.0, %v1733
  %v1735 = vpop.f32.mrf.mxu0
  %v1736 = vadd.f32 0.0, %v1735
  %1737 = vdwg.mxu0
  %v1738 = vadd.f32 %v1662, %v1734
  %v1739 = vadd.f32 %v1663, %v1736
  %v1740 = vxor.u32 %v1738, 2147483648
  %v1741 = vmul.f32 %v1740, 1.442695
  %v1742 = vpow.pop %v1741
  %v1743 = vadd.f32 %v1742, 1.0
  %v1744 = vrcp.pop %v1743
  %v1745 = vmul.f32 1.0, %v1744
  %v1746 = vtanh.pop %v1739
  %v1747 = vxor.u32 %v1739, 2147483648
  %v1748 = vmul.f32 %v1747, 1.442695
  %v1749 = vpow.pop %v1748
  %v1750 = vadd.f32 %v1749, 1.0
  %v1751 = vrcp.pop %v1750
  %v1752 = vmul.f32 1.0, %v1751
  %v1753 = vmul.f32 %v1745, %v1465
  %v1754 = vmul.f32 %v1745, %v1746
  %1756 = vrot.lane.b32.xlu0 %v1754, 64
  %v1757 = vpop.permute.xlu0 %1756
  %v1759 = vadd.f32 %v1753, %v1757
  %v1760 = vtanh.pop %v1759
  %v1761 = vmul.f32 %v1752, %v1760
  %s1762 = scalar_lea.vmem [#allocation2], 20
  %v1763 = vld [vmem:[%s1762] sm:$0xf]
  %1764 = vmatprep.subr.mxu0 0.0
  %1765 = vmatpush1.msra.mxu0 0.0
  %1766 = vmatprep.subr.mxu0 0.0
  %1767 = vmatpush1.msra.mxu0 0.0
  %1768 = vmatprep.subr.mxu0 0.0
  %1769 = vmatpush1.msra.mxu0 0.0
  %1770 = vmatprep.subr.mxu0 0.0
  %1771 = vmatpush1.msra.mxu0 0.0
  %1772 = vmatprep.subr.mxu0 0.0
  %1773 = vmatpush1.msra.mxu0 0.0
  %1774 = vmatprep.subr.mxu0 0.0
  %1775 = vmatpush1.msra.mxu0 0.0
  %1776 = vmatprep.subr.mxu0 0.0
  %1777 = vmatpush1.msra.mxu0 0.0
  %1778 = vmatprep.subr.mxu0 0.0
  %1779 = vmatpush1.msra.mxu0 0.0
  %1780 = vmatprep.subr.mxu0 %v262
  %1781 = vmatpush1.msra.mxu0 %v261
  %1782 = vmatprep.subr.mxu0 %v260
  %1783 = vmatpush1.msra.mxu0 %v259
  %1784 = vmatprep.subr.mxu0 %v258
  %1785 = vmatpush1.msra.mxu0 %v257
  %1786 = vmatprep.subr.mxu0 %v256
  %1787 = vmatpush1.msra.mxu0 %v255
  %1788 = vmatprep.subr.mxu0 %v254
  %1789 = vmatpush1.msra.mxu0 %v253
  %1790 = vmatprep.subr.mxu0 %v252
  %1791 = vmatpush1.msra.mxu0 %v251
  %1792 = vmatprep.subr.mxu0 %v250
  %1793 = vmatpush1.msra.mxu0 %v249
  %1794 = vmatprep.subr.mxu0 %v248
  %1795 = vmatpush1.msra.mxu0 %v247
  %1796 = vmatprep.subr.mxu0 0.0
  %1797 = vmatpush2.msra.mxu0 0.0
  %1798 = vmatprep.subr.mxu0 0.0
  %1799 = vmatpush2.msra.mxu0 0.0
  %1800 = vmatprep.subr.mxu0 0.0
  %1801 = vmatpush2.msra.mxu0 0.0
  %1802 = vmatprep.subr.mxu0 0.0
  %1803 = vmatpush2.msra.mxu0 0.0
  %1804 = vmatprep.subr.mxu0 0.0
  %1805 = vmatpush2.msra.mxu0 0.0
  %1806 = vmatprep.subr.mxu0 0.0
  %1807 = vmatpush2.msra.mxu0 0.0
  %1808 = vmatprep.subr.mxu0 0.0
  %1809 = vmatpush2.msra.mxu0 0.0
  %1810 = vmatprep.subr.mxu0 0.0
  %1811 = vmatpush2.msra.mxu0 0.0
  %1812 = vmatprep.subr.mxu0 0.0
  %1813 = vmatpush2.msra.mxu0 0.0
  %1814 = vmatprep.subr.mxu0 0.0
  %1815 = vmatpush2.msra.mxu0 0.0
  %1816 = vmatprep.subr.mxu0 0.0
  %1817 = vmatpush2.msra.mxu0 0.0
  %1818 = vmatprep.subr.mxu0 0.0
  %1819 = vmatpush2.msra.mxu0 0.0
  %1820 = vmatprep.subr.mxu0 0.0
  %1821 = vmatpush2.msra.mxu0 0.0
  %1822 = vmatprep.subr.mxu0 0.0
  %1823 = vmatpush2.msra.mxu0 0.0
  %1824 = vmatprep.subr.mxu0 0.0
  %1825 = vmatpush2.msra.mxu0 0.0
  %1826 = vmatprep.subr.mxu0 0.0
  %1827 = vmatpush2.msra.mxu0 0.0
  %1828 = vmatprep.mubr.f32.mxu0 0.0
  %1829 = vmatmul.mubr.f32.gmra.mxu0 %v1665
  %v1830 = vpop.f32.mrf.mxu0
  %v1831 = vadd.f32 0.0, %v1830
  %v1832 = vpop.f32.mrf.mxu0
  %v1833 = vadd.f32 0.0, %v1832
  %1834 = vdwg.mxu0
  %v1837 = vcombine.low %v1831, %v1833
  %v1839 = vunpack.c.l.s4 1983009808
  %v1840 = vunpack.c.0.s8 %v1839
  %v1841 = vlaneseq
  %v1842 = vshrl.u32 %v1841, 7
  %v1843 = vsub.s32 %v1840, %v1842
  %v1844 = vrot.slane %v1837, %v1843
  %v1846 = vadd.f32 %v1763, %v1844
  %v1847 = vxor.u32 %v1846, 2147483648
  %v1848 = vmul.f32 %v1847, 1.442695
  %v1849 = vpow.pop %v1848
  %v1850 = vadd.f32 %v1849, 1.0
  %v1851 = vrcp.pop %v1850
  %v1852 = vmul.f32 1.0, %v1851
  %v1854 = vrot.slane %v1846, 2
  %v1856 = vtanh.pop %v1854
  %1857 = vrot.lane.b32.xlu0 %v1846, 64
  %v1858 = vpop.permute.xlu0 %1857
  %v1859 = vrot.slane %v1858, 2
  %v1861 = vxor.u32 %v1859, 2147483648
  %v1862 = vmul.f32 %v1861, 1.442695
  %v1863 = vpow.pop %v1862
  %v1864 = vadd.f32 %v1863, 1.0
  %v1865 = vrcp.pop %v1864
  %v1866 = vmul.f32 1.0, %v1865
  %v1867 = vmul.f32 %v1852, %v1579
  %v1868 = vmul.f32 %v1852, %v1856
  %1870 = vrot.lane.b32.xlu0 %v1868, 64
  %v1871 = vpop.permute.xlu0 %1870
  %v1873 = vadd.f32 %v1867, %v1871
  %v1874 = vtanh.pop %v1873
  %1876 = vrot.lane.b32.xlu0 %v1874, 64
  %v1877 = vpop.permute.xlu0 %1876
  %v1879 = vmul.f32 %v1866, %v1877
  %1881 = vrot.lane.b32.xlu0 %v1761, 64
  %v1882 = vpop.permute.xlu0 %1881
  %v1883 = vsel %vm263, %v1882, 0
  %1885 = vmatprep.subr.mxu0 0.0
  %1886 = vmatpush1.msra.mxu0 0.0
  %1887 = vmatprep.subr.mxu0 0.0
  %1888 = vmatpush1.msra.mxu0 0.0
  %1889 = vmatprep.subr.mxu0 0.0
  %1890 = vmatpush1.msra.mxu0 0.0
  %1891 = vmatprep.subr.mxu0 0.0
  %1892 = vmatpush1.msra.mxu0 0.0
  %1893 = vmatprep.subr.mxu0 0.0
  %1894 = vmatpush1.msra.mxu0 0.0
  %1895 = vmatprep.subr.mxu0 0.0
  %1896 = vmatpush1.msra.mxu0 0.0
  %1897 = vmatprep.subr.mxu0 0.0
  %1898 = vmatpush1.msra.mxu0 0.0
  %1899 = vmatprep.subr.mxu0 0.0
  %1900 = vmatpush1.msra.mxu0 0.0
  %1901 = vmatprep.subr.mxu0 %v398
  %1902 = vmatpush1.msra.mxu0 %v397
  %1903 = vmatprep.subr.mxu0 %v396
  %1904 = vmatpush1.msra.mxu0 %v395
  %1905 = vmatprep.subr.mxu0 %v394
  %1906 = vmatpush1.msra.mxu0 %v393
  %1907 = vmatprep.subr.mxu0 %v392
  %1908 = vmatpush1.msra.mxu0 %v391
  %1909 = vmatprep.subr.mxu0 %v390
  %1910 = vmatpush1.msra.mxu0 %v389
  %1911 = vmatprep.subr.mxu0 %v388
  %1912 = vmatpush1.msra.mxu0 %v387
  %1913 = vmatprep.subr.mxu0 %v386
  %1914 = vmatpush1.msra.mxu0 %v385
  %1915 = vmatprep.subr.mxu0 %v384
  %1916 = vmatpush1.msra.mxu0 %v383
  %1917 = vmatprep.subr.mxu0 0.0
  %1918 = vmatpush2.msra.mxu0 0.0
  %1919 = vmatprep.subr.mxu0 0.0
  %1920 = vmatpush2.msra.mxu0 0.0
  %1921 = vmatprep.subr.mxu0 0.0
  %1922 = vmatpush2.msra.mxu0 0.0
  %1923 = vmatprep.subr.mxu0 0.0
  %1924 = vmatpush2.msra.mxu0 0.0
  %1925 = vmatprep.subr.mxu0 0.0
  %1926 = vmatpush2.msra.mxu0 0.0
  %1927 = vmatprep.subr.mxu0 0.0
  %1928 = vmatpush2.msra.mxu0 0.0
  %1929 = vmatprep.subr.mxu0 0.0
  %1930 = vmatpush2.msra.mxu0 0.0
  %1931 = vmatprep.subr.mxu0 0.0
  %1932 = vmatpush2.msra.mxu0 0.0
  %1933 = vmatprep.subr.mxu0 0.0
  %1934 = vmatpush2.msra.mxu0 0.0
  %1935 = vmatprep.subr.mxu0 0.0
  %1936 = vmatpush2.msra.mxu0 0.0
  %1937 = vmatprep.subr.mxu0 0.0
  %1938 = vmatpush2.msra.mxu0 0.0
  %1939 = vmatprep.subr.mxu0 0.0
  %1940 = vmatpush2.msra.mxu0 0.0
  %1941 = vmatprep.subr.mxu0 0.0
  %1942 = vmatpush2.msra.mxu0 0.0
  %1943 = vmatprep.subr.mxu0 0.0
  %1944 = vmatpush2.msra.mxu0 0.0
  %1945 = vmatprep.subr.mxu0 0.0
  %1946 = vmatpush2.msra.mxu0 0.0
  %1947 = vmatprep.subr.mxu0 0.0
  %1948 = vmatpush2.msra.mxu0 0.0
  %1949 = vmatprep.mubr.f32.mxu0 0.0
  %1950 = vmatmul.mubr.f32.gmra.mxu0 %v1883
  %v1951 = vpop.f32.mrf.mxu0
  %v1952 = vadd.f32 0.0, %v1951
  %v1953 = vpop.f32.mrf.mxu0
  %v1954 = vadd.f32 0.0, %v1953
  %1955 = vdwg.mxu0
  %v1956 = vadd.f32 %v239, %v1952
  %v1957 = vadd.f32 %v243, %v1954
  %v1959 = vsel %vm263, %v1879, 0
  %1961 = vmatprep.subr.mxu0 0.0
  %1962 = vmatpush1.msra.mxu0 0.0
  %1963 = vmatprep.subr.mxu0 0.0
  %1964 = vmatpush1.msra.mxu0 0.0
  %1965 = vmatprep.subr.mxu0 0.0
  %1966 = vmatpush1.msra.mxu0 0.0
  %1967 = vmatprep.subr.mxu0 0.0
  %1968 = vmatpush1.msra.mxu0 0.0
  %1969 = vmatprep.subr.mxu0 0.0
  %1970 = vmatpush1.msra.mxu0 0.0
  %1971 = vmatprep.subr.mxu0 0.0
  %1972 = vmatpush1.msra.mxu0 0.0
  %1973 = vmatprep.subr.mxu0 0.0
  %1974 = vmatpush1.msra.mxu0 0.0
  %1975 = vmatprep.subr.mxu0 0.0
  %1976 = vmatpush1.msra.mxu0 0.0
  %1977 = vmatprep.subr.mxu0 %v487
  %1978 = vmatpush1.msra.mxu0 %v486
  %1979 = vmatprep.subr.mxu0 %v485
  %1980 = vmatpush1.msra.mxu0 %v484
  %1981 = vmatprep.subr.mxu0 %v483
  %1982 = vmatpush1.msra.mxu0 %v482
  %1983 = vmatprep.subr.mxu0 %v481
  %1984 = vmatpush1.msra.mxu0 %v480
  %1985 = vmatprep.subr.mxu0 %v479
  %1986 = vmatpush1.msra.mxu0 %v478
  %1987 = vmatprep.subr.mxu0 %v477
  %1988 = vmatpush1.msra.mxu0 %v476
  %1989 = vmatprep.subr.mxu0 %v475
  %1990 = vmatpush1.msra.mxu0 %v474
  %1991 = vmatprep.subr.mxu0 %v473
  %1992 = vmatpush1.msra.mxu0 %v472
  %1993 = vmatprep.subr.mxu0 0.0
  %1994 = vmatpush2.msra.mxu0 0.0
  %1995 = vmatprep.subr.mxu0 0.0
  %1996 = vmatpush2.msra.mxu0 0.0
  %1997 = vmatprep.subr.mxu0 0.0
  %1998 = vmatpush2.msra.mxu0 0.0
  %1999 = vmatprep.subr.mxu0 0.0
  %2000 = vmatpush2.msra.mxu0 0.0
  %2001 = vmatprep.subr.mxu0 0.0
  %2002 = vmatpush2.msra.mxu0 0.0
  %2003 = vmatprep.subr.mxu0 0.0
  %2004 = vmatpush2.msra.mxu0 0.0
  %2005 = vmatprep.subr.mxu0 0.0
  %2006 = vmatpush2.msra.mxu0 0.0
  %2007 = vmatprep.subr.mxu0 0.0
  %2008 = vmatpush2.msra.mxu0 0.0
  %2009 = vmatprep.subr.mxu0 0.0
  %2010 = vmatpush2.msra.mxu0 0.0
  %2011 = vmatprep.subr.mxu0 0.0
  %2012 = vmatpush2.msra.mxu0 0.0
  %2013 = vmatprep.subr.mxu0 0.0
  %2014 = vmatpush2.msra.mxu0 0.0
  %2015 = vmatprep.subr.mxu0 0.0
  %2016 = vmatpush2.msra.mxu0 0.0
  %2017 = vmatprep.subr.mxu0 0.0
  %2018 = vmatpush2.msra.mxu0 0.0
  %2019 = vmatprep.subr.mxu0 0.0
  %2020 = vmatpush2.msra.mxu0 0.0
  %2021 = vmatprep.subr.mxu0 0.0
  %2022 = vmatpush2.msra.mxu0 0.0
  %2023 = vmatprep.subr.mxu0 0.0
  %2024 = vmatpush2.msra.mxu0 0.0
  %2025 = vmatprep.mubr.f32.mxu0 0.0
  %2026 = vmatmul.mubr.f32.gmra.mxu0 %v1959
  %v2027 = vpop.f32.mrf.mxu0
  %v2028 = vadd.f32 0.0, %v2027
  %v2029 = vpop.f32.mrf.mxu0
  %v2030 = vadd.f32 0.0, %v2029
  %2031 = vdwg.mxu0
  %v2032 = vadd.f32 %v1956, %v2028
  %v2033 = vadd.f32 %v1957, %v2030
  %v2034 = vxor.u32 %v2032, 2147483648
  %v2035 = vmul.f32 %v2034, 1.442695
  %v2036 = vpow.pop %v2035
  %v2037 = vadd.f32 %v2036, 1.0
  %v2038 = vrcp.pop %v2037
  %v2039 = vmul.f32 1.0, %v2038
  %v2040 = vtanh.pop %v2033
  %v2041 = vxor.u32 %v2033, 2147483648
  %v2042 = vmul.f32 %v2041, 1.442695
  %v2043 = vpow.pop %v2042
  %v2044 = vadd.f32 %v2043, 1.0
  %v2045 = vrcp.pop %v2044
  %v2046 = vmul.f32 1.0, %v2045
  %v2047 = vmul.f32 %v2039, %v1759
  %v2048 = vmul.f32 %v2039, %v2040
  %2050 = vrot.lane.b32.xlu0 %v2048, 64
  %v2051 = vpop.permute.xlu0 %2050
  %v2053 = vadd.f32 %v2047, %v2051
  %v2054 = vtanh.pop %v2053
  %v2055 = vmul.f32 %v2046, %v2054
  %s2056 = scalar_lea.vmem [#allocation2], 24
  %v2057 = vld [vmem:[%s2056] sm:$0xf]
  %2058 = vmatprep.subr.mxu0 0.0
  %2059 = vmatpush1.msra.mxu0 0.0
  %2060 = vmatprep.subr.mxu0 0.0
  %2061 = vmatpush1.msra.mxu0 0.0
  %2062 = vmatprep.subr.mxu0 0.0
  %2063 = vmatpush1.msra.mxu0 0.0
  %2064 = vmatprep.subr.mxu0 0.0
  %2065 = vmatpush1.msra.mxu0 0.0
  %2066 = vmatprep.subr.mxu0 0.0
  %2067 = vmatpush1.msra.mxu0 0.0
  %2068 = vmatprep.subr.mxu0 0.0
  %2069 = vmatpush1.msra.mxu0 0.0
  %2070 = vmatprep.subr.mxu0 0.0
  %2071 = vmatpush1.msra.mxu0 0.0
  %2072 = vmatprep.subr.mxu0 0.0
  %2073 = vmatpush1.msra.mxu0 0.0
  %2074 = vmatprep.subr.mxu0 %v262
  %2075 = vmatpush1.msra.mxu0 %v261
  %2076 = vmatprep.subr.mxu0 %v260
  %2077 = vmatpush1.msra.mxu0 %v259
  %2078 = vmatprep.subr.mxu0 %v258
  %2079 = vmatpush1.msra.mxu0 %v257
  %2080 = vmatprep.subr.mxu0 %v256
  %2081 = vmatpush1.msra.mxu0 %v255
  %2082 = vmatprep.subr.mxu0 %v254
  %2083 = vmatpush1.msra.mxu0 %v253
  %2084 = vmatprep.subr.mxu0 %v252
  %2085 = vmatpush1.msra.mxu0 %v251
  %2086 = vmatprep.subr.mxu0 %v250
  %2087 = vmatpush1.msra.mxu0 %v249
  %2088 = vmatprep.subr.mxu0 %v248
  %2089 = vmatpush1.msra.mxu0 %v247
  %2090 = vmatprep.subr.mxu0 0.0
  %2091 = vmatpush2.msra.mxu0 0.0
  %2092 = vmatprep.subr.mxu0 0.0
  %2093 = vmatpush2.msra.mxu0 0.0
  %2094 = vmatprep.subr.mxu0 0.0
  %2095 = vmatpush2.msra.mxu0 0.0
  %2096 = vmatprep.subr.mxu0 0.0
  %2097 = vmatpush2.msra.mxu0 0.0
  %2098 = vmatprep.subr.mxu0 0.0
  %2099 = vmatpush2.msra.mxu0 0.0
  %2100 = vmatprep.subr.mxu0 0.0
  %2101 = vmatpush2.msra.mxu0 0.0
  %2102 = vmatprep.subr.mxu0 0.0
  %2103 = vmatpush2.msra.mxu0 0.0
  %2104 = vmatprep.subr.mxu0 0.0
  %2105 = vmatpush2.msra.mxu0 0.0
  %2106 = vmatprep.subr.mxu0 0.0
  %2107 = vmatpush2.msra.mxu0 0.0
  %2108 = vmatprep.subr.mxu0 0.0
  %2109 = vmatpush2.msra.mxu0 0.0
  %2110 = vmatprep.subr.mxu0 0.0
  %2111 = vmatpush2.msra.mxu0 0.0
  %2112 = vmatprep.subr.mxu0 0.0
  %2113 = vmatpush2.msra.mxu0 0.0
  %2114 = vmatprep.subr.mxu0 0.0
  %2115 = vmatpush2.msra.mxu0 0.0
  %2116 = vmatprep.subr.mxu0 0.0
  %2117 = vmatpush2.msra.mxu0 0.0
  %2118 = vmatprep.subr.mxu0 0.0
  %2119 = vmatpush2.msra.mxu0 0.0
  %2120 = vmatprep.subr.mxu0 0.0
  %2121 = vmatpush2.msra.mxu0 0.0
  %2122 = vmatprep.mubr.f32.mxu0 0.0
  %2123 = vmatmul.mubr.f32.gmra.mxu0 %v1959
  %v2124 = vpop.f32.mrf.mxu0
  %v2125 = vadd.f32 0.0, %v2124
  %v2126 = vpop.f32.mrf.mxu0
  %v2127 = vadd.f32 0.0, %v2126
  %2128 = vdwg.mxu0
  %v2131 = vcombine.low %v2125, %v2127
  %v2133 = vunpack.c.l.s4 1983009808
  %v2134 = vunpack.c.0.s8 %v2133
  %v2135 = vlaneseq
  %v2136 = vshrl.u32 %v2135, 7
  %v2137 = vsub.s32 %v2134, %v2136
  %v2138 = vrot.slane %v2131, %v2137
  %v2140 = vadd.f32 %v2057, %v2138
  %v2141 = vxor.u32 %v2140, 2147483648
  %v2142 = vmul.f32 %v2141, 1.442695
  %v2143 = vpow.pop %v2142
  %v2144 = vadd.f32 %v2143, 1.0
  %v2145 = vrcp.pop %v2144
  %v2146 = vmul.f32 1.0, %v2145
  %v2148 = vrot.slane %v2140, 2
  %v2150 = vtanh.pop %v2148
  %2151 = vrot.lane.b32.xlu0 %v2140, 64
  %v2152 = vpop.permute.xlu0 %2151
  %v2153 = vrot.slane %v2152, 2
  %v2155 = vxor.u32 %v2153, 2147483648
  %v2156 = vmul.f32 %v2155, 1.442695
  %v2157 = vpow.pop %v2156
  %v2158 = vadd.f32 %v2157, 1.0
  %v2159 = vrcp.pop %v2158
  %v2160 = vmul.f32 1.0, %v2159
  %v2161 = vmul.f32 %v2146, %v1873
  %v2162 = vmul.f32 %v2146, %v2150
  %2164 = vrot.lane.b32.xlu0 %v2162, 64
  %v2165 = vpop.permute.xlu0 %2164
  %v2167 = vadd.f32 %v2161, %v2165
  %v2168 = vtanh.pop %v2167
  %2170 = vrot.lane.b32.xlu0 %v2168, 64
  %v2171 = vpop.permute.xlu0 %2170
  %v2173 = vmul.f32 %v2160, %v2171
  %2175 = vrot.lane.b32.xlu0 %v2055, 64
  %v2176 = vpop.permute.xlu0 %2175
  %v2177 = vsel %vm263, %v2176, 0
  %2179 = vmatprep.subr.mxu0 0.0
  %2180 = vmatpush1.msra.mxu0 0.0
  %2181 = vmatprep.subr.mxu0 0.0
  %2182 = vmatpush1.msra.mxu0 0.0
  %2183 = vmatprep.subr.mxu0 0.0
  %2184 = vmatpush1.msra.mxu0 0.0
  %2185 = vmatprep.subr.mxu0 0.0
  %2186 = vmatpush1.msra.mxu0 0.0
  %2187 = vmatprep.subr.mxu0 0.0
  %2188 = vmatpush1.msra.mxu0 0.0
  %2189 = vmatprep.subr.mxu0 0.0
  %2190 = vmatpush1.msra.mxu0 0.0
  %2191 = vmatprep.subr.mxu0 0.0
  %2192 = vmatpush1.msra.mxu0 0.0
  %2193 = vmatprep.subr.mxu0 0.0
  %2194 = vmatpush1.msra.mxu0 0.0
  %2195 = vmatprep.subr.mxu0 %v398
  %2196 = vmatpush1.msra.mxu0 %v397
  %2197 = vmatprep.subr.mxu0 %v396
  %2198 = vmatpush1.msra.mxu0 %v395
  %2199 = vmatprep.subr.mxu0 %v394
  %2200 = vmatpush1.msra.mxu0 %v393
  %2201 = vmatprep.subr.mxu0 %v392
  %2202 = vmatpush1.msra.mxu0 %v391
  %2203 = vmatprep.subr.mxu0 %v390
  %2204 = vmatpush1.msra.mxu0 %v389
  %2205 = vmatprep.subr.mxu0 %v388
  %2206 = vmatpush1.msra.mxu0 %v387
  %2207 = vmatprep.subr.mxu0 %v386
  %2208 = vmatpush1.msra.mxu0 %v385
  %2209 = vmatprep.subr.mxu0 %v384
  %2210 = vmatpush1.msra.mxu0 %v383
  %2211 = vmatprep.subr.mxu0 0.0
  %2212 = vmatpush2.msra.mxu0 0.0
  %2213 = vmatprep.subr.mxu0 0.0
  %2214 = vmatpush2.msra.mxu0 0.0
  %2215 = vmatprep.subr.mxu0 0.0
  %2216 = vmatpush2.msra.mxu0 0.0
  %2217 = vmatprep.subr.mxu0 0.0
  %2218 = vmatpush2.msra.mxu0 0.0
  %2219 = vmatprep.subr.mxu0 0.0
  %2220 = vmatpush2.msra.mxu0 0.0
  %2221 = vmatprep.subr.mxu0 0.0
  %2222 = vmatpush2.msra.mxu0 0.0
  %2223 = vmatprep.subr.mxu0 0.0
  %2224 = vmatpush2.msra.mxu0 0.0
  %2225 = vmatprep.subr.mxu0 0.0
  %2226 = vmatpush2.msra.mxu0 0.0
  %2227 = vmatprep.subr.mxu0 0.0
  %2228 = vmatpush2.msra.mxu0 0.0
  %2229 = vmatprep.subr.mxu0 0.0
  %2230 = vmatpush2.msra.mxu0 0.0
  %2231 = vmatprep.subr.mxu0 0.0
  %2232 = vmatpush2.msra.mxu0 0.0
  %2233 = vmatprep.subr.mxu0 0.0
  %2234 = vmatpush2.msra.mxu0 0.0
  %2235 = vmatprep.subr.mxu0 0.0
  %2236 = vmatpush2.msra.mxu0 0.0
  %2237 = vmatprep.subr.mxu0 0.0
  %2238 = vmatpush2.msra.mxu0 0.0
  %2239 = vmatprep.subr.mxu0 0.0
  %2240 = vmatpush2.msra.mxu0 0.0
  %2241 = vmatprep.subr.mxu0 0.0
  %2242 = vmatpush2.msra.mxu0 0.0
  %2243 = vmatprep.mubr.f32.mxu0 0.0
  %2244 = vmatmul.mubr.f32.gmra.mxu0 %v2177
  %v2245 = vpop.f32.mrf.mxu0
  %v2246 = vadd.f32 0.0, %v2245
  %v2247 = vpop.f32.mrf.mxu0
  %v2248 = vadd.f32 0.0, %v2247
  %2249 = vdwg.mxu0
  %v2250 = vadd.f32 %v239, %v2246
  %v2251 = vadd.f32 %v243, %v2248
  %v2253 = vsel %vm263, %v2173, 0
  %2255 = vmatprep.subr.mxu0 0.0
  %2256 = vmatpush1.msra.mxu0 0.0
  %2257 = vmatprep.subr.mxu0 0.0
  %2258 = vmatpush1.msra.mxu0 0.0
  %2259 = vmatprep.subr.mxu0 0.0
  %2260 = vmatpush1.msra.mxu0 0.0
  %2261 = vmatprep.subr.mxu0 0.0
  %2262 = vmatpush1.msra.mxu0 0.0
  %2263 = vmatprep.subr.mxu0 0.0
  %2264 = vmatpush1.msra.mxu0 0.0
  %2265 = vmatprep.subr.mxu0 0.0
  %2266 = vmatpush1.msra.mxu0 0.0
  %2267 = vmatprep.subr.mxu0 0.0
  %2268 = vmatpush1.msra.mxu0 0.0
  %2269 = vmatprep.subr.mxu0 0.0
  %2270 = vmatpush1.msra.mxu0 0.0
  %2271 = vmatprep.subr.mxu0 %v487
  %2272 = vmatpush1.msra.mxu0 %v486
  %2273 = vmatprep.subr.mxu0 %v485
  %2274 = vmatpush1.msra.mxu0 %v484
  %2275 = vmatprep.subr.mxu0 %v483
  %2276 = vmatpush1.msra.mxu0 %v482
  %2277 = vmatprep.subr.mxu0 %v481
  %2278 = vmatpush1.msra.mxu0 %v480
  %2279 = vmatprep.subr.mxu0 %v479
  %2280 = vmatpush1.msra.mxu0 %v478
  %2281 = vmatprep.subr.mxu0 %v477
  %2282 = vmatpush1.msra.mxu0 %v476
  %2283 = vmatprep.subr.mxu0 %v475
  %2284 = vmatpush1.msra.mxu0 %v474
  %2285 = vmatprep.subr.mxu0 %v473
  %2286 = vmatpush1.msra.mxu0 %v472
  %2287 = vmatprep.subr.mxu0 0.0
  %2288 = vmatpush2.msra.mxu0 0.0
  %2289 = vmatprep.subr.mxu0 0.0
  %2290 = vmatpush2.msra.mxu0 0.0
  %2291 = vmatprep.subr.mxu0 0.0
  %2292 = vmatpush2.msra.mxu0 0.0
  %2293 = vmatprep.subr.mxu0 0.0
  %2294 = vmatpush2.msra.mxu0 0.0
  %2295 = vmatprep.subr.mxu0 0.0
  %2296 = vmatpush2.msra.mxu0 0.0
  %2297 = vmatprep.subr.mxu0 0.0
  %2298 = vmatpush2.msra.mxu0 0.0
  %2299 = vmatprep.subr.mxu0 0.0
  %2300 = vmatpush2.msra.mxu0 0.0
  %2301 = vmatprep.subr.mxu0 0.0
  %2302 = vmatpush2.msra.mxu0 0.0
  %2303 = vmatprep.subr.mxu0 0.0
  %2304 = vmatpush2.msra.mxu0 0.0
  %2305 = vmatprep.subr.mxu0 0.0
  %2306 = vmatpush2.msra.mxu0 0.0
  %2307 = vmatprep.subr.mxu0 0.0
  %2308 = vmatpush2.msra.mxu0 0.0
  %2309 = vmatprep.subr.mxu0 0.0
  %2310 = vmatpush2.msra.mxu0 0.0
  %2311 = vmatprep.subr.mxu0 0.0
  %2312 = vmatpush2.msra.mxu0 0.0
  %2313 = vmatprep.subr.mxu0 0.0
  %2314 = vmatpush2.msra.mxu0 0.0
  %2315 = vmatprep.subr.mxu0 0.0
  %2316 = vmatpush2.msra.mxu0 0.0
  %2317 = vmatprep.subr.mxu0 0.0
  %2318 = vmatpush2.msra.mxu0 0.0
  %2319 = vmatprep.mubr.f32.mxu0 0.0
  %2320 = vmatmul.mubr.f32.gmra.mxu0 %v2253
  %v2321 = vpop.f32.mrf.mxu0
  %v2322 = vadd.f32 0.0, %v2321
  %v2323 = vpop.f32.mrf.mxu0
  %v2324 = vadd.f32 0.0, %v2323
  %2325 = vdwg.mxu0
  %v2326 = vadd.f32 %v2250, %v2322
  %v2327 = vadd.f32 %v2251, %v2324
  %v2328 = vxor.u32 %v2326, 2147483648
  %v2329 = vmul.f32 %v2328, 1.442695
  %v2330 = vpow.pop %v2329
  %v2331 = vadd.f32 %v2330, 1.0
  %v2332 = vrcp.pop %v2331
  %v2333 = vmul.f32 1.0, %v2332
  %v2334 = vtanh.pop %v2327
  %v2335 = vxor.u32 %v2327, 2147483648
  %v2336 = vmul.f32 %v2335, 1.442695
  %v2337 = vpow.pop %v2336
  %v2338 = vadd.f32 %v2337, 1.0
  %v2339 = vrcp.pop %v2338
  %v2340 = vmul.f32 1.0, %v2339
  %v2341 = vmul.f32 %v2333, %v2053
  %v2342 = vmul.f32 %v2333, %v2334
  %2344 = vrot.lane.b32.xlu0 %v2342, 64
  %v2345 = vpop.permute.xlu0 %2344
  %v2347 = vadd.f32 %v2341, %v2345
  %v2348 = vtanh.pop %v2347
  %v2349 = vmul.f32 %v2340, %v2348
  %s2350 = scalar_lea.vmem [#allocation2], 28
  %v2351 = vld [vmem:[%s2350] sm:$0xf]
  %2352 = vmatprep.subr.mxu0 0.0
  %2353 = vmatpush1.msra.mxu0 0.0
  %2354 = vmatprep.subr.mxu0 0.0
  %2355 = vmatpush1.msra.mxu0 0.0
  %2356 = vmatprep.subr.mxu0 0.0
  %2357 = vmatpush1.msra.mxu0 0.0
  %2358 = vmatprep.subr.mxu0 0.0
  %2359 = vmatpush1.msra.mxu0 0.0
  %2360 = vmatprep.subr.mxu0 0.0
  %2361 = vmatpush1.msra.mxu0 0.0
  %2362 = vmatprep.subr.mxu0 0.0
  %2363 = vmatpush1.msra.mxu0 0.0
  %2364 = vmatprep.subr.mxu0 0.0
  %2365 = vmatpush1.msra.mxu0 0.0
  %2366 = vmatprep.subr.mxu0 0.0
  %2367 = vmatpush1.msra.mxu0 0.0
  %2368 = vmatprep.subr.mxu0 %v262
  %2369 = vmatpush1.msra.mxu0 %v261
  %2370 = vmatprep.subr.mxu0 %v260
  %2371 = vmatpush1.msra.mxu0 %v259
  %2372 = vmatprep.subr.mxu0 %v258
  %2373 = vmatpush1.msra.mxu0 %v257
  %2374 = vmatprep.subr.mxu0 %v256
  %2375 = vmatpush1.msra.mxu0 %v255
  %2376 = vmatprep.subr.mxu0 %v254
  %2377 = vmatpush1.msra.mxu0 %v253
  %2378 = vmatprep.subr.mxu0 %v252
  %2379 = vmatpush1.msra.mxu0 %v251
  %2380 = vmatprep.subr.mxu0 %v250
  %2381 = vmatpush1.msra.mxu0 %v249
  %2382 = vmatprep.subr.mxu0 %v248
  %2383 = vmatpush1.msra.mxu0 %v247
  %2384 = vmatprep.subr.mxu0 0.0
  %2385 = vmatpush2.msra.mxu0 0.0
  %2386 = vmatprep.subr.mxu0 0.0
  %2387 = vmatpush2.msra.mxu0 0.0
  %2388 = vmatprep.subr.mxu0 0.0
  %2389 = vmatpush2.msra.mxu0 0.0
  %2390 = vmatprep.subr.mxu0 0.0
  %2391 = vmatpush2.msra.mxu0 0.0
  %2392 = vmatprep.subr.mxu0 0.0
  %2393 = vmatpush2.msra.mxu0 0.0
  %2394 = vmatprep.subr.mxu0 0.0
  %2395 = vmatpush2.msra.mxu0 0.0
  %2396 = vmatprep.subr.mxu0 0.0
  %2397 = vmatpush2.msra.mxu0 0.0
  %2398 = vmatprep.subr.mxu0 0.0
  %2399 = vmatpush2.msra.mxu0 0.0
  %2400 = vmatprep.subr.mxu0 0.0
  %2401 = vmatpush2.msra.mxu0 0.0
  %2402 = vmatprep.subr.mxu0 0.0
  %2403 = vmatpush2.msra.mxu0 0.0
  %2404 = vmatprep.subr.mxu0 0.0
  %2405 = vmatpush2.msra.mxu0 0.0
  %2406 = vmatprep.subr.mxu0 0.0
  %2407 = vmatpush2.msra.mxu0 0.0
  %2408 = vmatprep.subr.mxu0 0.0
  %2409 = vmatpush2.msra.mxu0 0.0
  %2410 = vmatprep.subr.mxu0 0.0
  %2411 = vmatpush2.msra.mxu0 0.0
  %2412 = vmatprep.subr.mxu0 0.0
  %2413 = vmatpush2.msra.mxu0 0.0
  %2414 = vmatprep.subr.mxu0 0.0
  %2415 = vmatpush2.msra.mxu0 0.0
  %2416 = vmatprep.mubr.f32.mxu0 0.0
  %2417 = vmatmul.mubr.f32.gmra.mxu0 %v2253
  %v2418 = vpop.f32.mrf.mxu0
  %v2419 = vadd.f32 0.0, %v2418
  %v2420 = vpop.f32.mrf.mxu0
  %v2421 = vadd.f32 0.0, %v2420
  %2422 = vdwg.mxu0
  %v2425 = vcombine.low %v2419, %v2421
  %v2427 = vunpack.c.l.s4 1983009808
  %v2428 = vunpack.c.0.s8 %v2427
  %v2429 = vlaneseq
  %v2430 = vshrl.u32 %v2429, 7
  %v2431 = vsub.s32 %v2428, %v2430
  %v2432 = vrot.slane %v2425, %v2431
  %v2434 = vadd.f32 %v2351, %v2432
  %v2435 = vxor.u32 %v2434, 2147483648
  %v2436 = vmul.f32 %v2435, 1.442695
  %v2437 = vpow.pop %v2436
  %v2438 = vadd.f32 %v2437, 1.0
  %v2439 = vrcp.pop %v2438
  %v2440 = vmul.f32 1.0, %v2439
  %v2442 = vrot.slane %v2434, 2
  %v2444 = vtanh.pop %v2442
  %2445 = vrot.lane.b32.xlu0 %v2434, 64
  %v2446 = vpop.permute.xlu0 %2445
  %v2447 = vrot.slane %v2446, 2
  %v2449 = vxor.u32 %v2447, 2147483648
  %v2450 = vmul.f32 %v2449, 1.442695
  %v2451 = vpow.pop %v2450
  %v2452 = vadd.f32 %v2451, 1.0
  %v2453 = vrcp.pop %v2452
  %v2454 = vmul.f32 1.0, %v2453
  %v2455 = vmul.f32 %v2440, %v2167
  %v2456 = vmul.f32 %v2440, %v2444
  %2458 = vrot.lane.b32.xlu0 %v2456, 64
  %v2459 = vpop.permute.xlu0 %2458
  %v2461 = vadd.f32 %v2455, %v2459
  %v2462 = vtanh.pop %v2461
  %2464 = vrot.lane.b32.xlu0 %v2462, 64
  %v2465 = vpop.permute.xlu0 %2464
  %v2467 = vmul.f32 %v2454, %v2465
  %2469 = vrot.lane.b32.xlu0 %v2349, 64
  %v2470 = vpop.permute.xlu0 %2469
  %v2471 = vsel %vm263, %v2470, 0
  %2473 = vmatprep.subr.mxu0 0.0
  %2474 = vmatpush1.msra.mxu0 0.0
  %2475 = vmatprep.subr.mxu0 0.0
  %2476 = vmatpush1.msra.mxu0 0.0
  %2477 = vmatprep.subr.mxu0 0.0
  %2478 = vmatpush1.msra.mxu0 0.0
  %2479 = vmatprep.subr.mxu0 0.0
  %2480 = vmatpush1.msra.mxu0 0.0
  %2481 = vmatprep.subr.mxu0 0.0
  %2482 = vmatpush1.msra.mxu0 0.0
  %2483 = vmatprep.subr.mxu0 0.0
  %2484 = vmatpush1.msra.mxu0 0.0
  %2485 = vmatprep.subr.mxu0 0.0
  %2486 = vmatpush1.msra.mxu0 0.0
  %2487 = vmatprep.subr.mxu0 0.0
  %2488 = vmatpush1.msra.mxu0 0.0
  %2489 = vmatprep.subr.mxu0 %v398
  %2490 = vmatpush1.msra.mxu0 %v397
  %2491 = vmatprep.subr.mxu0 %v396
  %2492 = vmatpush1.msra.mxu0 %v395
  %2493 = vmatprep.subr.mxu0 %v394
  %2494 = vmatpush1.msra.mxu0 %v393
  %2495 = vmatprep.subr.mxu0 %v392
  %2496 = vmatpush1.msra.mxu0 %v391
  %2497 = vmatprep.subr.mxu0 %v390
  %2498 = vmatpush1.msra.mxu0 %v389
  %2499 = vmatprep.subr.mxu0 %v388
  %2500 = vmatpush1.msra.mxu0 %v387
  %2501 = vmatprep.subr.mxu0 %v386
  %2502 = vmatpush1.msra.mxu0 %v385
  %2503 = vmatprep.subr.mxu0 %v384
  %2504 = vmatpush1.msra.mxu0 %v383
  %2505 = vmatprep.subr.mxu0 0.0
  %2506 = vmatpush2.msra.mxu0 0.0
  %2507 = vmatprep.subr.mxu0 0.0
  %2508 = vmatpush2.msra.mxu0 0.0
  %2509 = vmatprep.subr.mxu0 0.0
  %2510 = vmatpush2.msra.mxu0 0.0
  %2511 = vmatprep.subr.mxu0 0.0
  %2512 = vmatpush2.msra.mxu0 0.0
  %2513 = vmatprep.subr.mxu0 0.0
  %2514 = vmatpush2.msra.mxu0 0.0
  %2515 = vmatprep.subr.mxu0 0.0
  %2516 = vmatpush2.msra.mxu0 0.0
  %2517 = vmatprep.subr.mxu0 0.0
  %2518 = vmatpush2.msra.mxu0 0.0
  %2519 = vmatprep.subr.mxu0 0.0
  %2520 = vmatpush2.msra.mxu0 0.0
  %2521 = vmatprep.subr.mxu0 0.0
  %2522 = vmatpush2.msra.mxu0 0.0
  %2523 = vmatprep.subr.mxu0 0.0
  %2524 = vmatpush2.msra.mxu0 0.0
  %2525 = vmatprep.subr.mxu0 0.0
  %2526 = vmatpush2.msra.mxu0 0.0
  %2527 = vmatprep.subr.mxu0 0.0
  %2528 = vmatpush2.msra.mxu0 0.0
  %2529 = vmatprep.subr.mxu0 0.0
  %2530 = vmatpush2.msra.mxu0 0.0
  %2531 = vmatprep.subr.mxu0 0.0
  %2532 = vmatpush2.msra.mxu0 0.0
  %2533 = vmatprep.subr.mxu0 0.0
  %2534 = vmatpush2.msra.mxu0 0.0
  %2535 = vmatprep.subr.mxu0 0.0
  %2536 = vmatpush2.msra.mxu0 0.0
  %2537 = vmatprep.mubr.f32.mxu0 0.0
  %2538 = vmatmul.mubr.f32.gmra.mxu0 %v2471
  %v2539 = vpop.f32.mrf.mxu0
  %v2540 = vadd.f32 0.0, %v2539
  %v2541 = vpop.f32.mrf.mxu0
  %v2542 = vadd.f32 0.0, %v2541
  %2543 = vdwg.mxu0
  %v2544 = vadd.f32 %v239, %v2540
  %v2545 = vadd.f32 %v243, %v2542
  %v2547 = vsel %vm263, %v2467, 0
  %2549 = vmatprep.subr.mxu0 0.0
  %2550 = vmatpush1.msra.mxu0 0.0
  %2551 = vmatprep.subr.mxu0 0.0
  %2552 = vmatpush1.msra.mxu0 0.0
  %2553 = vmatprep.subr.mxu0 0.0
  %2554 = vmatpush1.msra.mxu0 0.0
  %2555 = vmatprep.subr.mxu0 0.0
  %2556 = vmatpush1.msra.mxu0 0.0
  %2557 = vmatprep.subr.mxu0 0.0
  %2558 = vmatpush1.msra.mxu0 0.0
  %2559 = vmatprep.subr.mxu0 0.0
  %2560 = vmatpush1.msra.mxu0 0.0
  %2561 = vmatprep.subr.mxu0 0.0
  %2562 = vmatpush1.msra.mxu0 0.0
  %2563 = vmatprep.subr.mxu0 0.0
  %2564 = vmatpush1.msra.mxu0 0.0
  %2565 = vmatprep.subr.mxu0 %v487
  %2566 = vmatpush1.msra.mxu0 %v486
  %2567 = vmatprep.subr.mxu0 %v485
  %2568 = vmatpush1.msra.mxu0 %v484
  %2569 = vmatprep.subr.mxu0 %v483
  %2570 = vmatpush1.msra.mxu0 %v482
  %2571 = vmatprep.subr.mxu0 %v481
  %2572 = vmatpush1.msra.mxu0 %v480
  %2573 = vmatprep.subr.mxu0 %v479
  %2574 = vmatpush1.msra.mxu0 %v478
  %2575 = vmatprep.subr.mxu0 %v477
  %2576 = vmatpush1.msra.mxu0 %v476
  %2577 = vmatprep.subr.mxu0 %v475
  %2578 = vmatpush1.msra.mxu0 %v474
  %2579 = vmatprep.subr.mxu0 %v473
  %2580 = vmatpush1.msra.mxu0 %v472
  %2581 = vmatprep.subr.mxu0 0.0
  %2582 = vmatpush2.msra.mxu0 0.0
  %2583 = vmatprep.subr.mxu0 0.0
  %2584 = vmatpush2.msra.mxu0 0.0
  %2585 = vmatprep.subr.mxu0 0.0
  %2586 = vmatpush2.msra.mxu0 0.0
  %2587 = vmatprep.subr.mxu0 0.0
  %2588 = vmatpush2.msra.mxu0 0.0
  %2589 = vmatprep.subr.mxu0 0.0
  %2590 = vmatpush2.msra.mxu0 0.0
  %2591 = vmatprep.subr.mxu0 0.0
  %2592 = vmatpush2.msra.mxu0 0.0
  %2593 = vmatprep.subr.mxu0 0.0
  %2594 = vmatpush2.msra.mxu0 0.0
  %2595 = vmatprep.subr.mxu0 0.0
  %2596 = vmatpush2.msra.mxu0 0.0
  %2597 = vmatprep.subr.mxu0 0.0
  %2598 = vmatpush2.msra.mxu0 0.0
  %2599 = vmatprep.subr.mxu0 0.0
  %2600 = vmatpush2.msra.mxu0 0.0
  %2601 = vmatprep.subr.mxu0 0.0
  %2602 = vmatpush2.msra.mxu0 0.0
  %2603 = vmatprep.subr.mxu0 0.0
  %2604 = vmatpush2.msra.mxu0 0.0
  %2605 = vmatprep.subr.mxu0 0.0
  %2606 = vmatpush2.msra.mxu0 0.0
  %2607 = vmatprep.subr.mxu0 0.0
  %2608 = vmatpush2.msra.mxu0 0.0
  %2609 = vmatprep.subr.mxu0 0.0
  %2610 = vmatpush2.msra.mxu0 0.0
  %2611 = vmatprep.subr.mxu0 0.0
  %2612 = vmatpush2.msra.mxu0 0.0
  %2613 = vmatprep.mubr.f32.mxu0 0.0
  %2614 = vmatmul.mubr.f32.gmra.mxu0 %v2547
  %v2615 = vpop.f32.mrf.mxu0
  %v2616 = vadd.f32 0.0, %v2615
  %v2617 = vpop.f32.mrf.mxu0
  %v2618 = vadd.f32 0.0, %v2617
  %2619 = vdwg.mxu0
  %v2620 = vadd.f32 %v2544, %v2616
  %v2621 = vadd.f32 %v2545, %v2618
  %v2622 = vxor.u32 %v2620, 2147483648
  %v2623 = vmul.f32 %v2622, 1.442695
  %v2624 = vpow.pop %v2623
  %v2625 = vadd.f32 %v2624, 1.0
  %v2626 = vrcp.pop %v2625
  %v2627 = vmul.f32 1.0, %v2626
  %v2628 = vtanh.pop %v2621
  %v2629 = vxor.u32 %v2621, 2147483648
  %v2630 = vmul.f32 %v2629, 1.442695
  %v2631 = vpow.pop %v2630
  %v2632 = vadd.f32 %v2631, 1.0
  %v2633 = vrcp.pop %v2632
  %v2634 = vmul.f32 1.0, %v2633
  %v2635 = vmul.f32 %v2627, %v2347
  %v2636 = vmul.f32 %v2627, %v2628
  %2638 = vrot.lane.b32.xlu0 %v2636, 64
  %v2639 = vpop.permute.xlu0 %2638
  %v2641 = vadd.f32 %v2635, %v2639
  %v2642 = vtanh.pop %v2641
  %v2643 = vmul.f32 %v2634, %v2642
  %v2644 = vld [vmem:[%s7] sm:$0xff]
  %v2645 = vld [vmem:[%s7 + $0x8] sm:$0xff]
  %v2646 = vld [vmem:[%s7 + $0x10] sm:$0xff]
  %v2647 = vld [vmem:[%s7 + $0x18] sm:$0xff]
  %v2648 = vld [vmem:[%s7 + $0x20] sm:$0xff]
  %v2649 = vld [vmem:[%s7 + $0x28] sm:$0xff]
  %v2650 = vld [vmem:[%s7 + $0x30] sm:$0xff]
  %v2651 = vld [vmem:[%s7 + $0x38] sm:$0xff]
  %v2652 = vld [vmem:[#allocation3] sm:$0x1]
  %v2654 = vlaneseq
  %v2655 = vshrl.u32 %v2654, 7
  %v2656 = vsub.s32 0, %v2655
  %v2657 = vrot.slane %v2652, %v2656
  %2660 = vrot.lane.b32.xlu0 %v2643, 64
  %v2661 = vpop.permute.xlu0 %2660
  %v2662 = vsel %vm263, %v2661, 0
  %2664 = vmatprep.subr.mxu0 0.0
  %2665 = vmatpush1.msra.mxu0 0.0
  %2666 = vmatprep.subr.mxu0 0.0
  %2667 = vmatpush1.msra.mxu0 0.0
  %2668 = vmatprep.subr.mxu0 0.0
  %2669 = vmatpush1.msra.mxu0 0.0
  %2670 = vmatprep.subr.mxu0 0.0
  %2671 = vmatpush1.msra.mxu0 0.0
  %2672 = vmatprep.subr.mxu0 0.0
  %2673 = vmatpush1.msra.mxu0 0.0
  %2674 = vmatprep.subr.mxu0 0.0
  %2675 = vmatpush1.msra.mxu0 0.0
  %2676 = vmatprep.subr.mxu0 0.0
  %2677 = vmatpush1.msra.mxu0 0.0
  %2678 = vmatprep.subr.mxu0 0.0
  %2679 = vmatpush1.msra.mxu0 0.0
  %2680 = vmatprep.subr.mxu0 0.0
  %2681 = vmatpush1.msra.mxu0 %v2651
  %2682 = vmatprep.subr.mxu0 0.0
  %2683 = vmatpush1.msra.mxu0 %v2650
  %2684 = vmatprep.subr.mxu0 0.0
  %2685 = vmatpush1.msra.mxu0 %v2649
  %2686 = vmatprep.subr.mxu0 0.0
  %2687 = vmatpush1.msra.mxu0 %v2648
  %2688 = vmatprep.subr.mxu0 0.0
  %2689 = vmatpush1.msra.mxu0 %v2647
  %2690 = vmatprep.subr.mxu0 0.0
  %2691 = vmatpush1.msra.mxu0 %v2646
  %2692 = vmatprep.subr.mxu0 0.0
  %2693 = vmatpush1.msra.mxu0 %v2645
  %2694 = vmatprep.subr.mxu0 0.0
  %2695 = vmatpush1.msra.mxu0 %v2644
  %2696 = vmatprep.subr.mxu0 0.0
  %2697 = vmatpush2.msra.mxu0 0.0
  %2698 = vmatprep.subr.mxu0 0.0
  %2699 = vmatpush2.msra.mxu0 0.0
  %2700 = vmatprep.subr.mxu0 0.0
  %2701 = vmatpush2.msra.mxu0 0.0
  %2702 = vmatprep.subr.mxu0 0.0
  %2703 = vmatpush2.msra.mxu0 0.0
  %2704 = vmatprep.subr.mxu0 0.0
  %2705 = vmatpush2.msra.mxu0 0.0
  %2706 = vmatprep.subr.mxu0 0.0
  %2707 = vmatpush2.msra.mxu0 0.0
  %2708 = vmatprep.subr.mxu0 0.0
  %2709 = vmatpush2.msra.mxu0 0.0
  %2710 = vmatprep.subr.mxu0 0.0
  %2711 = vmatpush2.msra.mxu0 0.0
  %2712 = vmatprep.subr.mxu0 0.0
  %2713 = vmatpush2.msra.mxu0 0.0
  %2714 = vmatprep.subr.mxu0 0.0
  %2715 = vmatpush2.msra.mxu0 0.0
  %2716 = vmatprep.subr.mxu0 0.0
  %2717 = vmatpush2.msra.mxu0 0.0
  %2718 = vmatprep.subr.mxu0 0.0
  %2719 = vmatpush2.msra.mxu0 0.0
  %2720 = vmatprep.subr.mxu0 0.0
  %2721 = vmatpush2.msra.mxu0 0.0
  %2722 = vmatprep.subr.mxu0 0.0
  %2723 = vmatpush2.msra.mxu0 0.0
  %2724 = vmatprep.subr.mxu0 0.0
  %2725 = vmatpush2.msra.mxu0 0.0
  %2726 = vmatprep.subr.mxu0 0.0
  %2727 = vmatpush2.msra.mxu0 0.0
  %2728 = vmatprep.mubr.f32.mxu0 0.0
  %2729 = vmatmul.mubr.f32.gmra.mxu0 %v2662
  %v2730 = vpop.f32.mrf.mxu0
  %v2731 = vadd.f32 %v2657, %v2730
  %v2732 = vpop.f32.mrf.mxu0
  %2733 = vdwg.mxu0
  %vm2734 = vcmask 1024
  %2735 = vst.msk [vmem:[%s9] sm:$0x3] %vm2734, %v2731
  // Predicated region
  $region38: #{lstm_forward.1} parent=0 // pred_check
    _
  $region39: #{lstm_forward.1} parent=0 // pred_check_branch
    %2737 = sbr.rel (0) target = $region41
  $region40: #{lstm_forward.1} parent=0 // pred_region
    _
  $region41: #{lstm_forward.1} parent=0 // pred_fallthru
    _
  // Predicated region
  $region42: #{lstm_forward.1} parent=0 // pred_check
    _
  $region43: #{lstm_forward.1} parent=0 // pred_check_branch
    %2739 = sbr.rel (0) target = $region45
  $region44: #{lstm_forward.1} parent=0 // pred_region
    _
  $region45: #{lstm_forward.1} parent=0 // pred_fallthru
    _

</llo_original>
